<compile_context>
chip_gen: v7x
topology: tpu7x:2x2x1
jax: 0.10.0
libtpu: 0.0.40
codegen_flags: <defaults>
</compile_context>

<pallas_src>
import functools

import jax
import jax.numpy as jnp
from jax import lax
from jax.experimental import pallas as pl
from jax.experimental.pallas import tpu as pltpu


_LANE = 128      # lane width; padded per-gate hidden width Hp
_SUBLANE = 8     # sublane width; batch tile Bt


def _round_up(x, m):
    return (x + m - 1) // m * m


# ----------------------------- Pallas kernel -------------------------------

def _lstm_classifier_kernel(x_ref,        # (T*Bt, Dp)   f32, rows are t-major, b-minor
                            wih1_ref,     # (Dp, 4*Hp)   bf16
                            whh1_ref,     # (Hp, 4*Hp)   bf16
                            b1_ref,       # (1, 4*Hp)    f32  (bias_ih + bias_hh, layer 0)
                            wih2_ref,     # (Hp, 4*Hp)   bf16
                            whh2_ref,     # (Hp, 4*Hp)   bf16
                            b2_ref,       # (1, 4*Hp)    f32  (bias_ih + bias_hh, layer 1)
                            wfc_ref,      # (Hp, Cp)     bf16
                            bfc_ref,      # (1, Cp)      f32
                            out_ref,      # (Bt, Cp)     f32 logits (lane-dense block)
                            gates1_ref,   # scratch (T*Bt, 4*Hp) f32
                            h1_seq_ref,   # scratch (T*Bt, Hp)   f32
                            gates2_ref,   # scratch (T*Bt, 4*Hp) f32
                            *, seq_len, batch_tile):
    T = seq_len
    Bt = batch_tile
    Hp = whh1_ref.shape[0]

    def cell(gates, c):
        # PyTorch gate order [i, f, g, o]; each gate block is a full 128-lane slot,
        # so every slice below is an unmasked full-vreg operand.
        i_g = jax.nn.sigmoid(gates[:, 0 * Hp:1 * Hp])
        f_g = jax.nn.sigmoid(gates[:, 1 * Hp:2 * Hp])
        g_g = jnp.tanh(gates[:, 2 * Hp:3 * Hp])
        o_g = jax.nn.sigmoid(gates[:, 3 * Hp:4 * Hp])
        c_new = f_g * c + i_g * g_g
        h_new = o_g * jnp.tanh(c_new)
        return h_new, c_new

    # ---- Layer 0 input projection for ALL timesteps: one big MXU matmul -----
    # (bias folded in here so there is no broadcast inside the recurrence)
    x2d = x_ref[...].astype(jnp.bfloat16)                       # (T*Bt, Dp)
    gates1_ref[...] = (jnp.dot(x2d, wih1_ref[...],
                               preferred_element_type=jnp.float32)
                       + b1_ref[...])

    zeros = jnp.zeros((Bt, Hp), jnp.float32)

    # ---- Layer 0 recurrence: only h @ W_hh per step, fully unrolled ---------
    def step0(t, carry):
        h, c = carry
        base = pl.multiple_of(t * Bt, Bt)
        g = (gates1_ref[pl.ds(base, Bt), :]
             + jnp.dot(h.astype(jnp.bfloat16), whh1_ref[...],
                       preferred_element_type=jnp.float32))
        h, c = cell(g, c)
        h1_seq_ref[pl.ds(base, Bt), :] = h
        return h, c

    lax.fori_loop(0, T, step0, (zeros, zeros), unroll=True)

    # ---- Layer 1 input projection over the whole h1 sequence: one matmul ----
    gates2_ref[...] = (jnp.dot(h1_seq_ref[...].astype(jnp.bfloat16), wih2_ref[...],
                               preferred_element_type=jnp.float32)
                       + b2_ref[...])

    # ---- Layer 1 recurrence --------------------------------------------------
    def step1(t, carry):
        h, c = carry
        base = pl.multiple_of(t * Bt, Bt)
        g = (gates2_ref[pl.ds(base, Bt), :]
             + jnp.dot(h.astype(jnp.bfloat16), whh2_ref[...],
                       preferred_element_type=jnp.float32))
        return cell(g, c)

    h2, _ = lax.fori_loop(0, T, step1, (zeros, zeros), unroll=True)

    # ---- Classifier head: logits = fc(hn[-1]) (no sigmoid, as in PyTorch) ----
    out_ref[...] = (jnp.dot(h2.astype(jnp.bfloat16), wfc_ref[...],
                            preferred_element_type=jnp.float32)
                    + bfc_ref[...]).astype(out_ref.dtype)


# ------------------------------- Wrapper ------------------------------------

def drunkness_classifier_forward(x, params):
    """x: (B, T, D) float32 (batch_first like PyTorch). Returns logits (B, C)."""
    B, T, D = x.shape
    H = params["weight_hh_l0"].shape[1]          # weight_hh_l0: (4H, H)
    C = params["fc_weight"].shape[0]             # fc.weight:    (C, H)

    Bt = _SUBLANE
    Bp = _round_up(max(B, Bt), Bt)
    Dp = _round_up(D, _LANE)
    Hp = _round_up(H, _LANE)
    Cp = _round_up(C, _LANE)
    n_btiles = Bp // Bt

    # Time-major, zero-padded input; per batch-tile a contiguous (T*Bt, Dp) slab
    # with row index = t*Bt + local_batch.  Zero padding keeps padded lanes/rows
    # inert through the whole recurrence.
    x_tm = jnp.transpose(x, (1, 0, 2)).astype(jnp.float32)           # (T, B, D)
    x_tm = jnp.pad(x_tm, ((0, 0), (0, Bp - B), (0, Dp - D)))         # (T, Bp, Dp)
    x_tiles = (x_tm.reshape(T, n_btiles, Bt, Dp)
                   .transpose(1, 0, 2, 3)
                   .reshape(n_btiles, T * Bt, Dp))                    # (nB, T*Bt, Dp)

    def pack_lstm(w_ih, w_hh, b_ih, b_hh, in_dim, in_pad):
        # PyTorch (4H, in) -> (in_pad, 4*Hp): gate blocks [i,f,g,o] each padded
        # to a full 128-lane slot; weights in bf16 (MXU operands), bias in f32.
        wih = w_ih.T.reshape(in_dim, 4, H)
        wih = jnp.pad(wih, ((0, in_pad - in_dim), (0, 0), (0, Hp - H)))
        wih = wih.reshape(in_pad, 4 * Hp).astype(jnp.bfloat16)
        whh = w_hh.T.reshape(H, 4, H)
        whh = jnp.pad(whh, ((0, Hp - H), (0, 0), (0, Hp - H)))
        whh = whh.reshape(Hp, 4 * Hp).astype(jnp.bfloat16)
        b = (b_ih + b_hh).reshape(4, H)
        b = jnp.pad(b, ((0, 0), (0, Hp - H))).reshape(1, 4 * Hp).astype(jnp.float32)
        return wih, whh, b

    wih1, whh1, b1 = pack_lstm(params["weight_ih_l0"], params["weight_hh_l0"],
                               params["bias_ih_l0"], params["bias_hh_l0"], D, Dp)
    wih2, whh2, b2 = pack_lstm(params["weight_ih_l1"], params["weight_hh_l1"],
                               params["bias_ih_l1"], params["bias_hh_l1"], H, Hp)

    wfc = jnp.pad(params["fc_weight"].T,
                  ((0, Hp - H), (0, Cp - C))).astype(jnp.bfloat16)    # (Hp, Cp)
    bfc = jnp.pad(params["fc_bias"], (0, Cp - C)).reshape(1, Cp).astype(jnp.float32)

    def full_spec(shape):
        ndim = len(shape)
        return pl.BlockSpec(shape, lambda i, _n=ndim: (0,) * _n)

    grid_spec = pltpu.PrefetchScalarGridSpec(
        num_scalar_prefetch=0,
        grid=(n_btiles,),                                  # batch tiles (parallel)
        in_specs=[
            pl.BlockSpec((None, T * Bt, Dp), lambda i: (i, 0, 0)),   # x per batch tile
            full_spec((Dp, 4 * Hp)),                                  # wih1
            full_spec((Hp, 4 * Hp)),                                  # whh1
            full_spec((1, 4 * Hp)),                                   # b1
            full_spec((Hp, 4 * Hp)),                                  # wih2
            full_spec((Hp, 4 * Hp)),                                  # whh2
            full_spec((1, 4 * Hp)),                                   # b2
            full_spec((Hp, Cp)),                                      # wfc
            full_spec((1, Cp)),                                       # bfc
        ],
        out_specs=pl.BlockSpec((Bt, Cp), lambda i: (i, 0)),           # lane-dense block
        scratch_shapes=[
            pltpu.VMEM((T * Bt, 4 * Hp), jnp.float32),    # layer-0 precomputed gates
            pltpu.VMEM((T * Bt, Hp), jnp.float32),        # layer-0 hidden sequence
            pltpu.VMEM((T * Bt, 4 * Hp), jnp.float32),    # layer-1 precomputed gates
        ],
    )

    kernel = functools.partial(_lstm_classifier_kernel, seq_len=T, batch_tile=Bt)

    out_padded = pl.pallas_call(
        kernel,
        out_shape=jax.ShapeDtypeStruct((Bp, Cp), jnp.float32),
        grid_spec=grid_spec,
        compiler_params=pltpu.CompilerParams(
            dimension_semantics=("parallel",),            # shard batch tiles across TCs (v7x)
        ),
        # TODO(synk): for production T/B, stream x over a time-chunk grid axis
        # (or emit_pipeline) instead of keeping the full sequence VMEM-resident.
    )(x_tiles, wih1, whh1, b1, wih2, whh2, b2, wfc, bfc)

    return out_padded[:B, :C]


# ------------------------- Deterministic parameters --------------------------

def init_params(key, input_size, hidden_size, num_classes):
    """PyTorch-style shapes; uniform(-1/sqrt(H), 1/sqrt(H)) init, deterministic."""
    H = hidden_size
    k = 1.0 / jnp.sqrt(jnp.float32(H))
    keys = jax.random.split(key, 10)

    def u(kk, shape):
        return jax.random.uniform(kk, shape, jnp.float32, -k, k)

    return {
        "weight_ih_l0": u(keys[0], (4 * H, input_size)),
        "weight_hh_l0": u(keys[1], (4 * H, H)),
        "bias_ih_l0":   u(keys[2], (4 * H,)),
        "bias_hh_l0":   u(keys[3], (4 * H,)),
        "weight_ih_l1": u(keys[4], (4 * H, H)),
        "weight_hh_l1": u(keys[5], (4 * H, H)),
        "bias_ih_l1":   u(keys[6], (4 * H,)),
        "bias_hh_l1":   u(keys[7], (4 * H,)),
        "fc_weight":    u(keys[8], (num_classes, H)),
        "fc_bias":      u(keys[9], (num_classes,)),
    }


# ----------------------------- Pure-JAX reference ----------------------------

def _reference_forward(x, params, mxu_dtype=jnp.float32):
    """Reference LSTM+FC. `mxu_dtype=bfloat16` mirrors the kernel's MXU-operand
    casts (f32 accumulation / elementwise) for a tight numerical comparison."""
    H = params["weight_hh_l0"].shape[1]

    def dot(a, b):
        return jnp.dot(a.astype(mxu_dtype), b.astype(mxu_dtype),
                       preferred_element_type=jnp.float32)

    def cell(x_t, h, c, wih, whh, bih, bhh):
        gates = dot(x_t, wih.T) + dot(h, whh.T) + bih + bhh
        i_g = jax.nn.sigmoid(gates[:, 0 * H:1 * H])
        f_g = jax.nn.sigmoid(gates[:, 1 * H:2 * H])
        g_g = jnp.tanh(gates[:, 2 * H:3 * H])
        o_g = jax.nn.sigmoid(gates[:, 3 * H:4 * H])
        c_new = f_g * c + i_g * g_g
        return o_g * jnp.tanh(c_new), c_new

    B, T, _ = x.shape
    h1 = c1 = h2 = c2 = jnp.zeros((B, H), jnp.float32)
    for t in range(T):
        h1, c1 = cell(x[:, t, :], h1, c1, params["weight_ih_l0"],
                      params["weight_hh_l0"], params["bias_ih_l0"], params["bias_hh_l0"])
        h2, c2 = cell(h1, h2, c2, params["weight_ih_l1"],
                      params["weight_hh_l1"], params["bias_ih_l1"], params["bias_hh_l1"])
    return dot(h2, params["fc_weight"].T) + params["fc_bias"]


# ---------------------------------- Main -------------------------------------

if __name__ == "__main__":
    B, T, D = 2, 8, 16       # batch, sequence length, input_size
    H, C = 32, 6             # hidden_size, num_classes

    root = jax.random.PRNGKey(0)
    k_x, k_p = jax.random.split(root)

    x = jax.random.normal(k_x, (B, T, D), jnp.float32)
    params = init_params(k_p, input_size=D, hidden_size=H, num_classes=C)

    logits = drunkness_classifier_forward(x, params)
    logits = jax.block_until_ready(logits)
    assert logits.shape == (B, C)

    # Tight check vs a reference that mirrors the kernel's bf16-MXU numerics.
    ref_bf16 = _reference_forward(x, params, mxu_dtype=jnp.bfloat16)
    assert jnp.allclose(logits, ref_bf16, atol=2e-3, rtol=2e-3), \
        "kernel vs bf16-matched reference mismatch"

    # Loose sanity check vs the pure-f32 reference (bf16 MXU operands only
    # introduce small, bounded deviations; state math is f32 throughout).
    ref_f32 = _reference_forward(x, params, mxu_dtype=jnp.float32)
    assert jnp.allclose(logits, ref_f32, atol=1e-1, rtol=1e-1), \
        "kernel vs f32 reference mismatch"

    print("KERNEL_OK")
</pallas_src>

<mosaic_0001>
module attributes {stable_mosaic.version = 11 : i64} {
  func.func @_lstm_classifier_kernel(%arg0: i32, %arg1: memref<1x64x128xf32, #tpu.memory_space<vmem>>, %arg2: memref<128x512xbf16, #tpu.memory_space<vmem>>, %arg3: memref<128x512xbf16, #tpu.memory_space<vmem>>, %arg4: memref<1x512xf32, #tpu.memory_space<vmem>>, %arg5: memref<128x512xbf16, #tpu.memory_space<vmem>>, %arg6: memref<128x512xbf16, #tpu.memory_space<vmem>>, %arg7: memref<1x512xf32, #tpu.memory_space<vmem>>, %arg8: memref<128x128xbf16, #tpu.memory_space<vmem>>, %arg9: memref<1x128xf32, #tpu.memory_space<vmem>>, %arg10: memref<8x128xf32, #tpu.memory_space<vmem>>, %arg11: memref<64x512xf32, #tpu.memory_space<vmem>>, %arg12: memref<64x128xf32, #tpu.memory_space<vmem>>, %arg13: memref<64x512xf32, #tpu.memory_space<vmem>>) attributes {dimension_semantics = [#tpu.dimension_semantics<parallel>], iteration_bounds = array<i64: 1>, scalar_prefetch = 0 : i64, scratch_operands = 3 : i64, tpu.core_type = #tpu.core_type<tc>, window_params = [{transform_indices = @transform_0, window_bounds = array<i64: 1, 64, 128>}, {pipeline_mode = #tpu.pipeline_mode<synchronous>, transform_indices = @transform_1, window_bounds = array<i64: 128, 512>}, {pipeline_mode = #tpu.pipeline_mode<synchronous>, transform_indices = @transform_2, window_bounds = array<i64: 128, 512>}, {pipeline_mode = #tpu.pipeline_mode<synchronous>, transform_indices = @transform_3, window_bounds = array<i64: 1, 512>}, {pipeline_mode = #tpu.pipeline_mode<synchronous>, transform_indices = @transform_4, window_bounds = array<i64: 128, 512>}, {pipeline_mode = #tpu.pipeline_mode<synchronous>, transform_indices = @transform_5, window_bounds = array<i64: 128, 512>}, {pipeline_mode = #tpu.pipeline_mode<synchronous>, transform_indices = @transform_6, window_bounds = array<i64: 1, 512>}, {pipeline_mode = #tpu.pipeline_mode<synchronous>, transform_indices = @transform_7, window_bounds = array<i64: 128, 128>}, {pipeline_mode = #tpu.pipeline_mode<synchronous>, transform_indices = @transform_8, window_bounds = array<i64: 1, 128>}, {transform_indices = @transform_9, window_bounds = array<i64: 8, 128>}]} {
    %c0 = arith.constant 0 : index
    %c0_0 = arith.constant 0 : index
    %c0_1 = arith.constant 0 : index
    %0 = vector.load %arg1[%c0, %c0_0, %c0_1] : memref<1x64x128xf32, #tpu.memory_space<vmem>>, vector<1x64x128xf32>
    %1 = vector.shape_cast %0 : vector<1x64x128xf32> to vector<64x128xf32>
    %2 = arith.truncf %1 : vector<64x128xf32> to vector<64x128xbf16>
    %c0_2 = arith.constant 0 : index
    %c0_3 = arith.constant 0 : index
    %3 = vector.load %arg2[%c0_2, %c0_3] : memref<128x512xbf16, #tpu.memory_space<vmem>>, vector<128x512xbf16>
    %cst = arith.constant dense<0.000000e+00> : vector<64x512xf32>
    %4 = tpu.matmul %2, %3, %cst {dimension_numbers = #tpu.dot_dimension_numbers<[1], [0], [0], [1], [0, 0, 1, 1], [], []>} : vector<64x128xbf16>, vector<128x512xbf16>, vector<64x512xf32> -> vector<64x512xf32>
    %c0_4 = arith.constant 0 : index
    %c0_5 = arith.constant 0 : index
    %5 = vector.load %arg4[%c0_4, %c0_5] : memref<1x512xf32, #tpu.memory_space<vmem>>, vector<1x512xf32>
    %6 = vector.broadcast %5 : vector<1x512xf32> to vector<64x512xf32>
    %7 = arith.addf %4, %6 : vector<64x512xf32>
    %c0_6 = arith.constant 0 : index
    %c0_7 = arith.constant 0 : index
    %8 = vector.load %arg11[%c0_6, %c0_7] : memref<64x512xf32, #tpu.memory_space<vmem>>, vector<64x512xf32>
    tpu.vector_store %arg11[%c0_6, %c0_7], %7 {strides = array<i32>} : memref<64x512xf32, #tpu.memory_space<vmem>>, vector<64x512xf32>,
    %cst_8 = arith.constant 0.000000e+00 : f32
    %9 = vector.broadcast %cst_8 : f32 to vector<8x128xf32>
    %c0_i32 = arith.constant 0 : i32
    %c8_i32 = arith.constant 8 : i32
    %10 = arith.muli %c0_i32, %c8_i32 : i32
    %11 = tpu.assume_multiple %10, 8 : i32
    %12 = arith.index_cast %11 : i32 to index
    %c0_9 = arith.constant 0 : index
    %13 = vector.load %arg11[%12, %c0_9] : memref<64x512xf32, #tpu.memory_space<vmem>>, vector<8x512xf32>
    %14 = arith.truncf %9 : vector<8x128xf32> to vector<8x128xbf16>
    %c0_10 = arith.constant 0 : index
    %c0_11 = arith.constant 0 : index
    %15 = vector.load %arg3[%c0_10, %c0_11] : memref<128x512xbf16, #tpu.memory_space<vmem>>, vector<128x512xbf16>
    %cst_12 = arith.constant dense<0.000000e+00> : vector<8x512xf32>
    %16 = tpu.matmul %14, %15, %cst_12 {dimension_numbers = #tpu.dot_dimension_numbers<[1], [0], [0], [1], [0, 0, 1, 1], [], []>} : vector<8x128xbf16>, vector<128x512xbf16>, vector<8x512xf32> -> vector<8x512xf32>
    %17 = arith.addf %13, %16 : vector<8x512xf32>
    %18 = vector.extract_strided_slice %17 {offsets = [0, 0], sizes = [8, 128], strides = [1, 1]} : vector<8x512xf32> to vector<8x128xf32>
    %19 = arith.negf %18 : vector<8x128xf32>
    %20 = math.exp %19 : vector<8x128xf32>
    %cst_13 = arith.constant 1.000000e+00 : f32
    %21 = vector.broadcast %cst_13 : f32 to vector<8x128xf32>
    %22 = arith.addf %21, %20 : vector<8x128xf32>
    %23 = arith.divf %21, %22 : vector<8x128xf32>
    %24 = vector.extract_strided_slice %17 {offsets = [0, 128], sizes = [8, 128], strides = [1, 1]} : vector<8x512xf32> to vector<8x128xf32>
    %25 = arith.negf %24 : vector<8x128xf32>
    %26 = math.exp %25 : vector<8x128xf32>
    %cst_14 = arith.constant 1.000000e+00 : f32
    %27 = vector.broadcast %cst_14 : f32 to vector<8x128xf32>
    %28 = arith.addf %27, %26 : vector<8x128xf32>
    %29 = arith.divf %27, %28 : vector<8x128xf32>
    %30 = vector.extract_strided_slice %17 {offsets = [0, 256], sizes = [8, 128], strides = [1, 1]} : vector<8x512xf32> to vector<8x128xf32>
    %31 = math.tanh %30 : vector<8x128xf32>
    %32 = vector.extract_strided_slice %17 {offsets = [0, 384], sizes = [8, 128], strides = [1, 1]} : vector<8x512xf32> to vector<8x128xf32>
    %33 = arith.negf %32 : vector<8x128xf32>
    %34 = math.exp %33 : vector<8x128xf32>
    %cst_15 = arith.constant 1.000000e+00 : f32
    %35 = vector.broadcast %cst_15 : f32 to vector<8x128xf32>
    %36 = arith.addf %35, %34 : vector<8x128xf32>
    %37 = arith.divf %35, %36 : vector<8x128xf32>
    %38 = arith.mulf %29, %9 : vector<8x128xf32>
    %39 = arith.mulf %23, %31 : vector<8x128xf32>
    %40 = arith.addf %38, %39 : vector<8x128xf32>
    %41 = math.tanh %40 : vector<8x128xf32>
    %42 = arith.mulf %37, %41 : vector<8x128xf32>
    %43 = arith.index_cast %11 : i32 to index
    %c0_16 = arith.constant 0 : index
    %44 = vector.load %arg12[%43, %c0_16] : memref<64x128xf32, #tpu.memory_space<vmem>>, vector<8x128xf32>
    tpu.vector_store %arg12[%43, %c0_16], %42 {strides = array<i32>} : memref<64x128xf32, #tpu.memory_space<vmem>>, vector<8x128xf32>,
    %c1_i32 = arith.constant 1 : i32
    %c8_i32_17 = arith.constant 8 : i32
    %45 = arith.muli %c1_i32, %c8_i32_17 : i32
    %46 = tpu.assume_multiple %45, 8 : i32
    %47 = arith.index_cast %46 : i32 to index
    %c0_18 = arith.constant 0 : index
    %48 = vector.load %arg11[%47, %c0_18] : memref<64x512xf32, #tpu.memory_space<vmem>>, vector<8x512xf32>
    %49 = arith.truncf %42 : vector<8x128xf32> to vector<8x128xbf16>
    %c0_19 = arith.constant 0 : index
    %c0_20 = arith.constant 0 : index
    %50 = vector.load %arg3[%c0_19, %c0_20] : memref<128x512xbf16, #tpu.memory_space<vmem>>, vector<128x512xbf16>
    %cst_21 = arith.constant dense<0.000000e+00> : vector<8x512xf32>
    %51 = tpu.matmul %49, %50, %cst_21 {dimension_numbers = #tpu.dot_dimension_numbers<[1], [0], [0], [1], [0, 0, 1, 1], [], []>} : vector<8x128xbf16>, vector<128x512xbf16>, vector<8x512xf32> -> vector<8x512xf32>
    %52 = arith.addf %48, %51 : vector<8x512xf32>
    %53 = vector.extract_strided_slice %52 {offsets = [0, 0], sizes = [8, 128], strides = [1, 1]} : vector<8x512xf32> to vector<8x128xf32>
    %54 = arith.negf %53 : vector<8x128xf32>
    %55 = math.exp %54 : vector<8x128xf32>
    %cst_22 = arith.constant 1.000000e+00 : f32
    %56 = vector.broadcast %cst_22 : f32 to vector<8x128xf32>
    %57 = arith.addf %56, %55 : vector<8x128xf32>
    %58 = arith.divf %56, %57 : vector<8x128xf32>
    %59 = vector.extract_strided_slice %52 {offsets = [0, 128], sizes = [8, 128], strides = [1, 1]} : vector<8x512xf32> to vector<8x128xf32>
    %60 = arith.negf %59 : vector<8x128xf32>
    %61 = math.exp %60 : vector<8x128xf32>
    %cst_23 = arith.constant 1.000000e+00 : f32
    %62 = vector.broadcast %cst_23 : f32 to vector<8x128xf32>
    %63 = arith.addf %62, %61 : vector<8x128xf32>
    %64 = arith.divf %62, %63 : vector<8x128xf32>
    %65 = vector.extract_strided_slice %52 {offsets = [0, 256], sizes = [8, 128], strides = [1, 1]} : vector<8x512xf32> to vector<8x128xf32>
    %66 = math.tanh %65 : vector<8x128xf32>
    %67 = vector.extract_strided_slice %52 {offsets = [0, 384], sizes = [8, 128], strides = [1, 1]} : vector<8x512xf32> to vector<8x128xf32>
    %68 = arith.negf %67 : vector<8x128xf32>
    %69 = math.exp %68 : vector<8x128xf32>
    %cst_24 = arith.constant 1.000000e+00 : f32
    %70 = vector.broadcast %cst_24 : f32 to vector<8x128xf32>
    %71 = arith.addf %70, %69 : vector<8x128xf32>
    %72 = arith.divf %70, %71 : vector<8x128xf32>
    %73 = arith.mulf %64, %40 : vector<8x128xf32>
    %74 = arith.mulf %58, %66 : vector<8x128xf32>
    %75 = arith.addf %73, %74 : vector<8x128xf32>
    %76 = math.tanh %75 : vector<8x128xf32>
    %77 = arith.mulf %72, %76 : vector<8x128xf32>
    %78 = arith.index_cast %46 : i32 to index
    %c0_25 = arith.constant 0 : index
    %79 = vector.load %arg12[%78, %c0_25] : memref<64x128xf32, #tpu.memory_space<vmem>>, vector<8x128xf32>
    tpu.vector_store %arg12[%78, %c0_25], %77 {strides = array<i32>} : memref<64x128xf32, #tpu.memory_space<vmem>>, vector<8x128xf32>,
    %c2_i32 = arith.constant 2 : i32
    %c8_i32_26 = arith.constant 8 : i32
    %80 = arith.muli %c2_i32, %c8_i32_26 : i32
    %81 = tpu.assume_multiple %80, 8 : i32
    %82 = arith.index_cast %81 : i32 to index
    %c0_27 = arith.constant 0 : index
    %83 = vector.load %arg11[%82, %c0_27] : memref<64x512xf32, #tpu.memory_space<vmem>>, vector<8x512xf32>
    %84 = arith.truncf %77 : vector<8x128xf32> to vector<8x128xbf16>
    %c0_28 = arith.constant 0 : index
    %c0_29 = arith.constant 0 : index
    %85 = vector.load %arg3[%c0_28, %c0_29] : memref<128x512xbf16, #tpu.memory_space<vmem>>, vector<128x512xbf16>
    %cst_30 = arith.constant dense<0.000000e+00> : vector<8x512xf32>
    %86 = tpu.matmul %84, %85, %cst_30 {dimension_numbers = #tpu.dot_dimension_numbers<[1], [0], [0], [1], [0, 0, 1, 1], [], []>} : vector<8x128xbf16>, vector<128x512xbf16>, vector<8x512xf32> -> vector<8x512xf32>
    %87 = arith.addf %83, %86 : vector<8x512xf32>
    %88 = vector.extract_strided_slice %87 {offsets = [0, 0], sizes = [8, 128], strides = [1, 1]} : vector<8x512xf32> to vector<8x128xf32>
    %89 = arith.negf %88 : vector<8x128xf32>
    %90 = math.exp %89 : vector<8x128xf32>
    %cst_31 = arith.constant 1.000000e+00 : f32
    %91 = vector.broadcast %cst_31 : f32 to vector<8x128xf32>
    %92 = arith.addf %91, %90 : vector<8x128xf32>
    %93 = arith.divf %91, %92 : vector<8x128xf32>
    %94 = vector.extract_strided_slice %87 {offsets = [0, 128], sizes = [8, 128], strides = [1, 1]} : vector<8x512xf32> to vector<8x128xf32>
    %95 = arith.negf %94 : vector<8x128xf32>
    %96 = math.exp %95 : vector<8x128xf32>
    %cst_32 = arith.constant 1.000000e+00 : f32
    %97 = vector.broadcast %cst_32 : f32 to vector<8x128xf32>
    %98 = arith.addf %97, %96 : vector<8x128xf32>
    %99 = arith.divf %97, %98 : vector<8x128xf32>
    %100 = vector.extract_strided_slice %87 {offsets = [0, 256], sizes = [8, 128], strides = [1, 1]} : vector<8x512xf32> to vector<8x128xf32>
    %101 = math.tanh %100 : vector<8x128xf32>
    %102 = vector.extract_strided_slice %87 {offsets = [0, 384], sizes = [8, 128], strides = [1, 1]} : vector<8x512xf32> to vector<8x128xf32>
    %103 = arith.negf %102 : vector<8x128xf32>
    %104 = math.exp %103 : vector<8x128xf32>
    %cst_33 = arith.constant 1.000000e+00 : f32
    %105 = vector.broadcast %cst_33 : f32 to vector<8x128xf32>
    %106 = arith.addf %105, %104 : vector<8x128xf32>
    %107 = arith.divf %105, %106 : vector<8x128xf32>
    %108 = arith.mulf %99, %75 : vector<8x128xf32>
    %109 = arith.mulf %93, %101 : vector<8x128xf32>
    %110 = arith.addf %108, %109 : vector<8x128xf32>
    %111 = math.tanh %110 : vector<8x128xf32>
    %112 = arith.mulf %107, %111 : vector<8x128xf32>
    %113 = arith.index_cast %81 : i32 to index
    %c0_34 = arith.constant 0 : index
    %114 = vector.load %arg12[%113, %c0_34] : memref<64x128xf32, #tpu.memory_space<vmem>>, vector<8x128xf32>
    tpu.vector_store %arg12[%113, %c0_34], %112 {strides = array<i32>} : memref<64x128xf32, #tpu.memory_space<vmem>>, vector<8x128xf32>,
    %c3_i32 = arith.constant 3 : i32
    %c8_i32_35 = arith.constant 8 : i32
    %115 = arith.muli %c3_i32, %c8_i32_35 : i32
    %116 = tpu.assume_multiple %115, 8 : i32
    %117 = arith.index_cast %116 : i32 to index
    %c0_36 = arith.constant 0 : index
    %118 = vector.load %arg11[%117, %c0_36] : memref<64x512xf32, #tpu.memory_space<vmem>>, vector<8x512xf32>
    %119 = arith.truncf %112 : vector<8x128xf32> to vector<8x128xbf16>
    %c0_37 = arith.constant 0 : index
    %c0_38 = arith.constant 0 : index
    %120 = vector.load %arg3[%c0_37, %c0_38] : memref<128x512xbf16, #tpu.memory_space<vmem>>, vector<128x512xbf16>
    %cst_39 = arith.constant dense<0.000000e+00> : vector<8x512xf32>
    %121 = tpu.matmul %119, %120, %cst_39 {dimension_numbers = #tpu.dot_dimension_numbers<[1], [0], [0], [1], [0, 0, 1, 1], [], []>} : vector<8x128xbf16>, vector<128x512xbf16>, vector<8x512xf32> -> vector<8x512xf32>
    %122 = arith.addf %118, %121 : vector<8x512xf32>
    %123 = vector.extract_strided_slice %122 {offsets = [0, 0], sizes = [8, 128], strides = [1, 1]} : vector<8x512xf32> to vector<8x128xf32>
    %124 = arith.negf %123 : vector<8x128xf32>
    %125 = math.exp %124 : vector<8x128xf32>
    %cst_40 = arith.constant 1.000000e+00 : f32
    %126 = vector.broadcast %cst_40 : f32 to vector<8x128xf32>
    %127 = arith.addf %126, %125 : vector<8x128xf32>
    %128 = arith.divf %126, %127 : vector<8x128xf32>
    %129 = vector.extract_strided_slice %122 {offsets = [0, 128], sizes = [8, 128], strides = [1, 1]} : vector<8x512xf32> to vector<8x128xf32>
    %130 = arith.negf %129 : vector<8x128xf32>
    %131 = math.exp %130 : vector<8x128xf32>
    %cst_41 = arith.constant 1.000000e+00 : f32
    %132 = vector.broadcast %cst_41 : f32 to vector<8x128xf32>
    %133 = arith.addf %132, %131 : vector<8x128xf32>
    %134 = arith.divf %132, %133 : vector<8x128xf32>
    %135 = vector.extract_strided_slice %122 {offsets = [0, 256], sizes = [8, 128], strides = [1, 1]} : vector<8x512xf32> to vector<8x128xf32>
    %136 = math.tanh %135 : vector<8x128xf32>
    %137 = vector.extract_strided_slice %122 {offsets = [0, 384], sizes = [8, 128], strides = [1, 1]} : vector<8x512xf32> to vector<8x128xf32>
    %138 = arith.negf %137 : vector<8x128xf32>
    %139 = math.exp %138 : vector<8x128xf32>
    %cst_42 = arith.constant 1.000000e+00 : f32
    %140 = vector.broadcast %cst_42 : f32 to vector<8x128xf32>
    %141 = arith.addf %140, %139 : vector<8x128xf32>
    %142 = arith.divf %140, %141 : vector<8x128xf32>
    %143 = arith.mulf %134, %110 : vector<8x128xf32>
    %144 = arith.mulf %128, %136 : vector<8x128xf32>
    %145 = arith.addf %143, %144 : vector<8x128xf32>
    %146 = math.tanh %145 : vector<8x128xf32>
    %147 = arith.mulf %142, %146 : vector<8x128xf32>
    %148 = arith.index_cast %116 : i32 to index
    %c0_43 = arith.constant 0 : index
    %149 = vector.load %arg12[%148, %c0_43] : memref<64x128xf32, #tpu.memory_space<vmem>>, vector<8x128xf32>
    tpu.vector_store %arg12[%148, %c0_43], %147 {strides = array<i32>} : memref<64x128xf32, #tpu.memory_space<vmem>>, vector<8x128xf32>,
    %c4_i32 = arith.constant 4 : i32
    %c8_i32_44 = arith.constant 8 : i32
    %150 = arith.muli %c4_i32, %c8_i32_44 : i32
    %151 = tpu.assume_multiple %150, 8 : i32
    %152 = arith.index_cast %151 : i32 to index
    %c0_45 = arith.constant 0 : index
    %153 = vector.load %arg11[%152, %c0_45] : memref<64x512xf32, #tpu.memory_space<vmem>>, vector<8x512xf32>
    %154 = arith.truncf %147 : vector<8x128xf32> to vector<8x128xbf16>
    %c0_46 = arith.constant 0 : index
    %c0_47 = arith.constant 0 : index
    %155 = vector.load %arg3[%c0_46, %c0_47] : memref<128x512xbf16, #tpu.memory_space<vmem>>, vector<128x512xbf16>
    %cst_48 = arith.constant dense<0.000000e+00> : vector<8x512xf32>
    %156 = tpu.matmul %154, %155, %cst_48 {dimension_numbers = #tpu.dot_dimension_numbers<[1], [0], [0], [1], [0, 0, 1, 1], [], []>} : vector<8x128xbf16>, vector<128x512xbf16>, vector<8x512xf32> -> vector<8x512xf32>
    %157 = arith.addf %153, %156 : vector<8x512xf32>
    %158 = vector.extract_strided_slice %157 {offsets = [0, 0], sizes = [8, 128], strides = [1, 1]} : vector<8x512xf32> to vector<8x128xf32>
    %159 = arith.negf %158 : vector<8x128xf32>
    %160 = math.exp %159 : vector<8x128xf32>
    %cst_49 = arith.constant 1.000000e+00 : f32
    %161 = vector.broadcast %cst_49 : f32 to vector<8x128xf32>
    %162 = arith.addf %161, %160 : vector<8x128xf32>
    %163 = arith.divf %161, %162 : vector<8x128xf32>
    %164 = vector.extract_strided_slice %157 {offsets = [0, 128], sizes = [8, 128], strides = [1, 1]} : vector<8x512xf32> to vector<8x128xf32>
    %165 = arith.negf %164 : vector<8x128xf32>
    %166 = math.exp %165 : vector<8x128xf32>
    %cst_50 = arith.constant 1.000000e+00 : f32
    %167 = vector.broadcast %cst_50 : f32 to vector<8x128xf32>
    %168 = arith.addf %167, %166 : vector<8x128xf32>
    %169 = arith.divf %167, %168 : vector<8x128xf32>
    %170 = vector.extract_strided_slice %157 {offsets = [0, 256], sizes = [8, 128], strides = [1, 1]} : vector<8x512xf32> to vector<8x128xf32>
    %171 = math.tanh %170 : vector<8x128xf32>
    %172 = vector.extract_strided_slice %157 {offsets = [0, 384], sizes = [8, 128], strides = [1, 1]} : vector<8x512xf32> to vector<8x128xf32>
    %173 = arith.negf %172 : vector<8x128xf32>
    %174 = math.exp %173 : vector<8x128xf32>
    %cst_51 = arith.constant 1.000000e+00 : f32
    %175 = vector.broadcast %cst_51 : f32 to vector<8x128xf32>
    %176 = arith.addf %175, %174 : vector<8x128xf32>
    %177 = arith.divf %175, %176 : vector<8x128xf32>
    %178 = arith.mulf %169, %145 : vector<8x128xf32>
    %179 = arith.mulf %163, %171 : vector<8x128xf32>
    %180 = arith.addf %178, %179 : vector<8x128xf32>
    %181 = math.tanh %180 : vector<8x128xf32>
    %182 = arith.mulf %177, %181 : vector<8x128xf32>
    %183 = arith.index_cast %151 : i32 to index
    %c0_52 = arith.constant 0 : index
    %184 = vector.load %arg12[%183, %c0_52] : memref<64x128xf32, #tpu.memory_space<vmem>>, vector<8x128xf32>
    tpu.vector_store %arg12[%183, %c0_52], %182 {strides = array<i32>} : memref<64x128xf32, #tpu.memory_space<vmem>>, vector<8x128xf32>,
    %c5_i32 = arith.constant 5 : i32
    %c8_i32_53 = arith.constant 8 : i32
    %185 = arith.muli %c5_i32, %c8_i32_53 : i32
    %186 = tpu.assume_multiple %185, 8 : i32
    %187 = arith.index_cast %186 : i32 to index
    %c0_54 = arith.constant 0 : index
    %188 = vector.load %arg11[%187, %c0_54] : memref<64x512xf32, #tpu.memory_space<vmem>>, vector<8x512xf32>
    %189 = arith.truncf %182 : vector<8x128xf32> to vector<8x128xbf16>
    %c0_55 = arith.constant 0 : index
    %c0_56 = arith.constant 0 : index
    %190 = vector.load %arg3[%c0_55, %c0_56] : memref<128x512xbf16, #tpu.memory_space<vmem>>, vector<128x512xbf16>
    %cst_57 = arith.constant dense<0.000000e+00> : vector<8x512xf32>
    %191 = tpu.matmul %189, %190, %cst_57 {dimension_numbers = #tpu.dot_dimension_numbers<[1], [0], [0], [1], [0, 0, 1, 1], [], []>} : vector<8x128xbf16>, vector<128x512xbf16>, vector<8x512xf32> -> vector<8x512xf32>
    %192 = arith.addf %188, %191 : vector<8x512xf32>
    %193 = vector.extract_strided_slice %192 {offsets = [0, 0], sizes = [8, 128], strides = [1, 1]} : vector<8x512xf32> to vector<8x128xf32>
    %194 = arith.negf %193 : vector<8x128xf32>
    %195 = math.exp %194 : vector<8x128xf32>
    %cst_58 = arith.constant 1.000000e+00 : f32
    %196 = vector.broadcast %cst_58 : f32 to vector<8x128xf32>
    %197 = arith.addf %196, %195 : vector<8x128xf32>
    %198 = arith.divf %196, %197 : vector<8x128xf32>
    %199 = vector.extract_strided_slice %192 {offsets = [0, 128], sizes = [8, 128], strides = [1, 1]} : vector<8x512xf32> to vector<8x128xf32>
    %200 = arith.negf %199 : vector<8x128xf32>
    %201 = math.exp %200 : vector<8x128xf32>
    %cst_59 = arith.constant 1.000000e+00 : f32
    %202 = vector.broadcast %cst_59 : f32 to vector<8x128xf32>
    %203 = arith.addf %202, %201 : vector<8x128xf32>
    %204 = arith.divf %202, %203 : vector<8x128xf32>
    %205 = vector.extract_strided_slice %192 {offsets = [0, 256], sizes = [8, 128], strides = [1, 1]} : vector<8x512xf32> to vector<8x128xf32>
    %206 = math.tanh %205 : vector<8x128xf32>
    %207 = vector.extract_strided_slice %192 {offsets = [0, 384], sizes = [8, 128], strides = [1, 1]} : vector<8x512xf32> to vector<8x128xf32>
    %208 = arith.negf %207 : vector<8x128xf32>
    %209 = math.exp %208 : vector<8x128xf32>
    %cst_60 = arith.constant 1.000000e+00 : f32
    %210 = vector.broadcast %cst_60 : f32 to vector<8x128xf32>
    %211 = arith.addf %210, %209 : vector<8x128xf32>
    %212 = arith.divf %210, %211 : vector<8x128xf32>
    %213 = arith.mulf %204, %180 : vector<8x128xf32>
    %214 = arith.mulf %198, %206 : vector<8x128xf32>
    %215 = arith.addf %213, %214 : vector<8x128xf32>
    %216 = math.tanh %215 : vector<8x128xf32>
    %217 = arith.mulf %212, %216 : vector<8x128xf32>
    %218 = arith.index_cast %186 : i32 to index
    %c0_61 = arith.constant 0 : index
    %219 = vector.load %arg12[%218, %c0_61] : memref<64x128xf32, #tpu.memory_space<vmem>>, vector<8x128xf32>
    tpu.vector_store %arg12[%218, %c0_61], %217 {strides = array<i32>} : memref<64x128xf32, #tpu.memory_space<vmem>>, vector<8x128xf32>,
    %c6_i32 = arith.constant 6 : i32
    %c8_i32_62 = arith.constant 8 : i32
    %220 = arith.muli %c6_i32, %c8_i32_62 : i32
    %221 = tpu.assume_multiple %220, 8 : i32
    %222 = arith.index_cast %221 : i32 to index
    %c0_63 = arith.constant 0 : index
    %223 = vector.load %arg11[%222, %c0_63] : memref<64x512xf32, #tpu.memory_space<vmem>>, vector<8x512xf32>
    %224 = arith.truncf %217 : vector<8x128xf32> to vector<8x128xbf16>
    %c0_64 = arith.constant 0 : index
    %c0_65 = arith.constant 0 : index
    %225 = vector.load %arg3[%c0_64, %c0_65] : memref<128x512xbf16, #tpu.memory_space<vmem>>, vector<128x512xbf16>
    %cst_66 = arith.constant dense<0.000000e+00> : vector<8x512xf32>
    %226 = tpu.matmul %224, %225, %cst_66 {dimension_numbers = #tpu.dot_dimension_numbers<[1], [0], [0], [1], [0, 0, 1, 1], [], []>} : vector<8x128xbf16>, vector<128x512xbf16>, vector<8x512xf32> -> vector<8x512xf32>
    %227 = arith.addf %223, %226 : vector<8x512xf32>
    %228 = vector.extract_strided_slice %227 {offsets = [0, 0], sizes = [8, 128], strides = [1, 1]} : vector<8x512xf32> to vector<8x128xf32>
    %229 = arith.negf %228 : vector<8x128xf32>
    %230 = math.exp %229 : vector<8x128xf32>
    %cst_67 = arith.constant 1.000000e+00 : f32
    %231 = vector.broadcast %cst_67 : f32 to vector<8x128xf32>
    %232 = arith.addf %231, %230 : vector<8x128xf32>
    %233 = arith.divf %231, %232 : vector<8x128xf32>
    %234 = vector.extract_strided_slice %227 {offsets = [0, 128], sizes = [8, 128], strides = [1, 1]} : vector<8x512xf32> to vector<8x128xf32>
    %235 = arith.negf %234 : vector<8x128xf32>
    %236 = math.exp %235 : vector<8x128xf32>
    %cst_68 = arith.constant 1.000000e+00 : f32
    %237 = vector.broadcast %cst_68 : f32 to vector<8x128xf32>
    %238 = arith.addf %237, %236 : vector<8x128xf32>
    %239 = arith.divf %237, %238 : vector<8x128xf32>
    %240 = vector.extract_strided_slice %227 {offsets = [0, 256], sizes = [8, 128], strides = [1, 1]} : vector<8x512xf32> to vector<8x128xf32>
    %241 = math.tanh %240 : vector<8x128xf32>
    %242 = vector.extract_strided_slice %227 {offsets = [0, 384], sizes = [8, 128], strides = [1, 1]} : vector<8x512xf32> to vector<8x128xf32>
    %243 = arith.negf %242 : vector<8x128xf32>
    %244 = math.exp %243 : vector<8x128xf32>
    %cst_69 = arith.constant 1.000000e+00 : f32
    %245 = vector.broadcast %cst_69 : f32 to vector<8x128xf32>
    %246 = arith.addf %245, %244 : vector<8x128xf32>
    %247 = arith.divf %245, %246 : vector<8x128xf32>
    %248 = arith.mulf %239, %215 : vector<8x128xf32>
    %249 = arith.mulf %233, %241 : vector<8x128xf32>
    %250 = arith.addf %248, %249 : vector<8x128xf32>
    %251 = math.tanh %250 : vector<8x128xf32>
    %252 = arith.mulf %247, %251 : vector<8x128xf32>
    %253 = arith.index_cast %221 : i32 to index
    %c0_70 = arith.constant 0 : index
    %254 = vector.load %arg12[%253, %c0_70] : memref<64x128xf32, #tpu.memory_space<vmem>>, vector<8x128xf32>
    tpu.vector_store %arg12[%253, %c0_70], %252 {strides = array<i32>} : memref<64x128xf32, #tpu.memory_space<vmem>>, vector<8x128xf32>,
    %c7_i32 = arith.constant 7 : i32
    %c8_i32_71 = arith.constant 8 : i32
    %255 = arith.muli %c7_i32, %c8_i32_71 : i32
    %256 = tpu.assume_multiple %255, 8 : i32
    %257 = arith.index_cast %256 : i32 to index
    %c0_72 = arith.constant 0 : index
    %258 = vector.load %arg11[%257, %c0_72] : memref<64x512xf32, #tpu.memory_space<vmem>>, vector<8x512xf32>
    %259 = arith.truncf %252 : vector<8x128xf32> to vector<8x128xbf16>
    %c0_73 = arith.constant 0 : index
    %c0_74 = arith.constant 0 : index
    %260 = vector.load %arg3[%c0_73, %c0_74] : memref<128x512xbf16, #tpu.memory_space<vmem>>, vector<128x512xbf16>
    %cst_75 = arith.constant dense<0.000000e+00> : vector<8x512xf32>
    %261 = tpu.matmul %259, %260, %cst_75 {dimension_numbers = #tpu.dot_dimension_numbers<[1], [0], [0], [1], [0, 0, 1, 1], [], []>} : vector<8x128xbf16>, vector<128x512xbf16>, vector<8x512xf32> -> vector<8x512xf32>
    %262 = arith.addf %258, %261 : vector<8x512xf32>
    %263 = vector.extract_strided_slice %262 {offsets = [0, 0], sizes = [8, 128], strides = [1, 1]} : vector<8x512xf32> to vector<8x128xf32>
    %264 = arith.negf %263 : vector<8x128xf32>
    %265 = math.exp %264 : vector<8x128xf32>
    %cst_76 = arith.constant 1.000000e+00 : f32
    %266 = vector.broadcast %cst_76 : f32 to vector<8x128xf32>
    %267 = arith.addf %266, %265 : vector<8x128xf32>
    %268 = arith.divf %266, %267 : vector<8x128xf32>
    %269 = vector.extract_strided_slice %262 {offsets = [0, 128], sizes = [8, 128], strides = [1, 1]} : vector<8x512xf32> to vector<8x128xf32>
    %270 = arith.negf %269 : vector<8x128xf32>
    %271 = math.exp %270 : vector<8x128xf32>
    %cst_77 = arith.constant 1.000000e+00 : f32
    %272 = vector.broadcast %cst_77 : f32 to vector<8x128xf32>
    %273 = arith.addf %272, %271 : vector<8x128xf32>
    %274 = arith.divf %272, %273 : vector<8x128xf32>
    %275 = vector.extract_strided_slice %262 {offsets = [0, 256], sizes = [8, 128], strides = [1, 1]} : vector<8x512xf32> to vector<8x128xf32>
    %276 = math.tanh %275 : vector<8x128xf32>
    %277 = vector.extract_strided_slice %262 {offsets = [0, 384], sizes = [8, 128], strides = [1, 1]} : vector<8x512xf32> to vector<8x128xf32>
    %278 = arith.negf %277 : vector<8x128xf32>
    %279 = math.exp %278 : vector<8x128xf32>
    %cst_78 = arith.constant 1.000000e+00 : f32
    %280 = vector.broadcast %cst_78 : f32 to vector<8x128xf32>
    %281 = arith.addf %280, %279 : vector<8x128xf32>
    %282 = arith.divf %280, %281 : vector<8x128xf32>
    %283 = arith.mulf %274, %250 : vector<8x128xf32>
    %284 = arith.mulf %268, %276 : vector<8x128xf32>
    %285 = arith.addf %283, %284 : vector<8x128xf32>
    %286 = math.tanh %285 : vector<8x128xf32>
    %287 = arith.mulf %282, %286 : vector<8x128xf32>
    %288 = arith.index_cast %256 : i32 to index
    %c0_79 = arith.constant 0 : index
    %289 = vector.load %arg12[%288, %c0_79] : memref<64x128xf32, #tpu.memory_space<vmem>>, vector<8x128xf32>
    tpu.vector_store %arg12[%288, %c0_79], %287 {strides = array<i32>} : memref<64x128xf32, #tpu.memory_space<vmem>>, vector<8x128xf32>,
    %c8_i32_80 = arith.constant 8 : i32
    %c0_81 = arith.constant 0 : index
    %c0_82 = arith.constant 0 : index
    %290 = vector.load %arg12[%c0_81, %c0_82] : memref<64x128xf32, #tpu.memory_space<vmem>>, vector<64x128xf32>
    %291 = arith.truncf %290 : vector<64x128xf32> to vector<64x128xbf16>
    %c0_83 = arith.constant 0 : index
    %c0_84 = arith.constant 0 : index
    %292 = vector.load %arg5[%c0_83, %c0_84] : memref<128x512xbf16, #tpu.memory_space<vmem>>, vector<128x512xbf16>
    %cst_85 = arith.constant dense<0.000000e+00> : vector<64x512xf32>
    %293 = tpu.matmul %291, %292, %cst_85 {dimension_numbers = #tpu.dot_dimension_numbers<[1], [0], [0], [1], [0, 0, 1, 1], [], []>} : vector<64x128xbf16>, vector<128x512xbf16>, vector<64x512xf32> -> vector<64x512xf32>
    %c0_86 = arith.constant 0 : index
    %c0_87 = arith.constant 0 : index
    %294 = vector.load %arg7[%c0_86, %c0_87] : memref<1x512xf32, #tpu.memory_space<vmem>>, vector<1x512xf32>
    %295 = vector.broadcast %294 : vector<1x512xf32> to vector<64x512xf32>
    %296 = arith.addf %293, %295 : vector<64x512xf32>
    %c0_88 = arith.constant 0 : index
    %c0_89 = arith.constant 0 : index
    %297 = vector.load %arg13[%c0_88, %c0_89] : memref<64x512xf32, #tpu.memory_space<vmem>>, vector<64x512xf32>
    tpu.vector_store %arg13[%c0_88, %c0_89], %296 {strides = array<i32>} : memref<64x512xf32, #tpu.memory_space<vmem>>, vector<64x512xf32>,
    %c0_i32_90 = arith.constant 0 : i32
    %c8_i32_91 = arith.constant 8 : i32
    %298 = arith.muli %c0_i32_90, %c8_i32_91 : i32
    %299 = tpu.assume_multiple %298, 8 : i32
    %300 = arith.index_cast %299 : i32 to index
    %c0_92 = arith.constant 0 : index
    %301 = vector.load %arg13[%300, %c0_92] : memref<64x512xf32, #tpu.memory_space<vmem>>, vector<8x512xf32>
    %302 = arith.truncf %9 : vector<8x128xf32> to vector<8x128xbf16>
    %c0_93 = arith.constant 0 : index
    %c0_94 = arith.constant 0 : index
    %303 = vector.load %arg6[%c0_93, %c0_94] : memref<128x512xbf16, #tpu.memory_space<vmem>>, vector<128x512xbf16>
    %cst_95 = arith.constant dense<0.000000e+00> : vector<8x512xf32>
    %304 = tpu.matmul %302, %303, %cst_95 {dimension_numbers = #tpu.dot_dimension_numbers<[1], [0], [0], [1], [0, 0, 1, 1], [], []>} : vector<8x128xbf16>, vector<128x512xbf16>, vector<8x512xf32> -> vector<8x512xf32>
    %305 = arith.addf %301, %304 : vector<8x512xf32>
    %306 = vector.extract_strided_slice %305 {offsets = [0, 0], sizes = [8, 128], strides = [1, 1]} : vector<8x512xf32> to vector<8x128xf32>
    %307 = arith.negf %306 : vector<8x128xf32>
    %308 = math.exp %307 : vector<8x128xf32>
    %cst_96 = arith.constant 1.000000e+00 : f32
    %309 = vector.broadcast %cst_96 : f32 to vector<8x128xf32>
    %310 = arith.addf %309, %308 : vector<8x128xf32>
    %311 = arith.divf %309, %310 : vector<8x128xf32>
    %312 = vector.extract_strided_slice %305 {offsets = [0, 128], sizes = [8, 128], strides = [1, 1]} : vector<8x512xf32> to vector<8x128xf32>
    %313 = arith.negf %312 : vector<8x128xf32>
    %314 = math.exp %313 : vector<8x128xf32>
    %cst_97 = arith.constant 1.000000e+00 : f32
    %315 = vector.broadcast %cst_97 : f32 to vector<8x128xf32>
    %316 = arith.addf %315, %314 : vector<8x128xf32>
    %317 = arith.divf %315, %316 : vector<8x128xf32>
    %318 = vector.extract_strided_slice %305 {offsets = [0, 256], sizes = [8, 128], strides = [1, 1]} : vector<8x512xf32> to vector<8x128xf32>
    %319 = math.tanh %318 : vector<8x128xf32>
    %320 = vector.extract_strided_slice %305 {offsets = [0, 384], sizes = [8, 128], strides = [1, 1]} : vector<8x512xf32> to vector<8x128xf32>
    %321 = arith.negf %320 : vector<8x128xf32>
    %322 = math.exp %321 : vector<8x128xf32>
    %cst_98 = arith.constant 1.000000e+00 : f32
    %323 = vector.broadcast %cst_98 : f32 to vector<8x128xf32>
    %324 = arith.addf %323, %322 : vector<8x128xf32>
    %325 = arith.divf %323, %324 : vector<8x128xf32>
    %326 = arith.mulf %317, %9 : vector<8x128xf32>
    %327 = arith.mulf %311, %319 : vector<8x128xf32>
    %328 = arith.addf %326, %327 : vector<8x128xf32>
    %329 = math.tanh %328 : vector<8x128xf32>
    %330 = arith.mulf %325, %329 : vector<8x128xf32>
    %c1_i32_99 = arith.constant 1 : i32
    %c8_i32_100 = arith.constant 8 : i32
    %331 = arith.muli %c1_i32_99, %c8_i32_100 : i32
    %332 = tpu.assume_multiple %331, 8 : i32
    %333 = arith.index_cast %332 : i32 to index
    %c0_101 = arith.constant 0 : index
    %334 = vector.load %arg13[%333, %c0_101] : memref<64x512xf32, #tpu.memory_space<vmem>>, vector<8x512xf32>
    %335 = arith.truncf %330 : vector<8x128xf32> to vector<8x128xbf16>
    %c0_102 = arith.constant 0 : index
    %c0_103 = arith.constant 0 : index
    %336 = vector.load %arg6[%c0_102, %c0_103] : memref<128x512xbf16, #tpu.memory_space<vmem>>, vector<128x512xbf16>
    %cst_104 = arith.constant dense<0.000000e+00> : vector<8x512xf32>
    %337 = tpu.matmul %335, %336, %cst_104 {dimension_numbers = #tpu.dot_dimension_numbers<[1], [0], [0], [1], [0, 0, 1, 1], [], []>} : vector<8x128xbf16>, vector<128x512xbf16>, vector<8x512xf32> -> vector<8x512xf32>
    %338 = arith.addf %334, %337 : vector<8x512xf32>
    %339 = vector.extract_strided_slice %338 {offsets = [0, 0], sizes = [8, 128], strides = [1, 1]} : vector<8x512xf32> to vector<8x128xf32>
    %340 = arith.negf %339 : vector<8x128xf32>
    %341 = math.exp %340 : vector<8x128xf32>
    %cst_105 = arith.constant 1.000000e+00 : f32
    %342 = vector.broadcast %cst_105 : f32 to vector<8x128xf32>
    %343 = arith.addf %342, %341 : vector<8x128xf32>
    %344 = arith.divf %342, %343 : vector<8x128xf32>
    %345 = vector.extract_strided_slice %338 {offsets = [0, 128], sizes = [8, 128], strides = [1, 1]} : vector<8x512xf32> to vector<8x128xf32>
    %346 = arith.negf %345 : vector<8x128xf32>
    %347 = math.exp %346 : vector<8x128xf32>
    %cst_106 = arith.constant 1.000000e+00 : f32
    %348 = vector.broadcast %cst_106 : f32 to vector<8x128xf32>
    %349 = arith.addf %348, %347 : vector<8x128xf32>
    %350 = arith.divf %348, %349 : vector<8x128xf32>
    %351 = vector.extract_strided_slice %338 {offsets = [0, 256], sizes = [8, 128], strides = [1, 1]} : vector<8x512xf32> to vector<8x128xf32>
    %352 = math.tanh %351 : vector<8x128xf32>
    %353 = vector.extract_strided_slice %338 {offsets = [0, 384], sizes = [8, 128], strides = [1, 1]} : vector<8x512xf32> to vector<8x128xf32>
    %354 = arith.negf %353 : vector<8x128xf32>
    %355 = math.exp %354 : vector<8x128xf32>
    %cst_107 = arith.constant 1.000000e+00 : f32
    %356 = vector.broadcast %cst_107 : f32 to vector<8x128xf32>
    %357 = arith.addf %356, %355 : vector<8x128xf32>
    %358 = arith.divf %356, %357 : vector<8x128xf32>
    %359 = arith.mulf %350, %328 : vector<8x128xf32>
    %360 = arith.mulf %344, %352 : vector<8x128xf32>
    %361 = arith.addf %359, %360 : vector<8x128xf32>
    %362 = math.tanh %361 : vector<8x128xf32>
    %363 = arith.mulf %358, %362 : vector<8x128xf32>
    %c2_i32_108 = arith.constant 2 : i32
    %c8_i32_109 = arith.constant 8 : i32
    %364 = arith.muli %c2_i32_108, %c8_i32_109 : i32
    %365 = tpu.assume_multiple %364, 8 : i32
    %366 = arith.index_cast %365 : i32 to index
    %c0_110 = arith.constant 0 : index
    %367 = vector.load %arg13[%366, %c0_110] : memref<64x512xf32, #tpu.memory_space<vmem>>, vector<8x512xf32>
    %368 = arith.truncf %363 : vector<8x128xf32> to vector<8x128xbf16>
    %c0_111 = arith.constant 0 : index
    %c0_112 = arith.constant 0 : index
    %369 = vector.load %arg6[%c0_111, %c0_112] : memref<128x512xbf16, #tpu.memory_space<vmem>>, vector<128x512xbf16>
    %cst_113 = arith.constant dense<0.000000e+00> : vector<8x512xf32>
    %370 = tpu.matmul %368, %369, %cst_113 {dimension_numbers = #tpu.dot_dimension_numbers<[1], [0], [0], [1], [0, 0, 1, 1], [], []>} : vector<8x128xbf16>, vector<128x512xbf16>, vector<8x512xf32> -> vector<8x512xf32>
    %371 = arith.addf %367, %370 : vector<8x512xf32>
    %372 = vector.extract_strided_slice %371 {offsets = [0, 0], sizes = [8, 128], strides = [1, 1]} : vector<8x512xf32> to vector<8x128xf32>
    %373 = arith.negf %372 : vector<8x128xf32>
    %374 = math.exp %373 : vector<8x128xf32>
    %cst_114 = arith.constant 1.000000e+00 : f32
    %375 = vector.broadcast %cst_114 : f32 to vector<8x128xf32>
    %376 = arith.addf %375, %374 : vector<8x128xf32>
    %377 = arith.divf %375, %376 : vector<8x128xf32>
    %378 = vector.extract_strided_slice %371 {offsets = [0, 128], sizes = [8, 128], strides = [1, 1]} : vector<8x512xf32> to vector<8x128xf32>
    %379 = arith.negf %378 : vector<8x128xf32>
    %380 = math.exp %379 : vector<8x128xf32>
    %cst_115 = arith.constant 1.000000e+00 : f32
    %381 = vector.broadcast %cst_115 : f32 to vector<8x128xf32>
    %382 = arith.addf %381, %380 : vector<8x128xf32>
    %383 = arith.divf %381, %382 : vector<8x128xf32>
    %384 = vector.extract_strided_slice %371 {offsets = [0, 256], sizes = [8, 128], strides = [1, 1]} : vector<8x512xf32> to vector<8x128xf32>
    %385 = math.tanh %384 : vector<8x128xf32>
    %386 = vector.extract_strided_slice %371 {offsets = [0, 384], sizes = [8, 128], strides = [1, 1]} : vector<8x512xf32> to vector<8x128xf32>
    %387 = arith.negf %386 : vector<8x128xf32>
    %388 = math.exp %387 : vector<8x128xf32>
    %cst_116 = arith.constant 1.000000e+00 : f32
    %389 = vector.broadcast %cst_116 : f32 to vector<8x128xf32>
    %390 = arith.addf %389, %388 : vector<8x128xf32>
    %391 = arith.divf %389, %390 : vector<8x128xf32>
    %392 = arith.mulf %383, %361 : vector<8x128xf32>
    %393 = arith.mulf %377, %385 : vector<8x128xf32>
    %394 = arith.addf %392, %393 : vector<8x128xf32>
    %395 = math.tanh %394 : vector<8x128xf32>
    %396 = arith.mulf %391, %395 : vector<8x128xf32>
    %c3_i32_117 = arith.constant 3 : i32
    %c8_i32_118 = arith.constant 8 : i32
    %397 = arith.muli %c3_i32_117, %c8_i32_118 : i32
    %398 = tpu.assume_multiple %397, 8 : i32
    %399 = arith.index_cast %398 : i32 to index
    %c0_119 = arith.constant 0 : index
    %400 = vector.load %arg13[%399, %c0_119] : memref<64x512xf32, #tpu.memory_space<vmem>>, vector<8x512xf32>
    %401 = arith.truncf %396 : vector<8x128xf32> to vector<8x128xbf16>
    %c0_120 = arith.constant 0 : index
    %c0_121 = arith.constant 0 : index
    %402 = vector.load %arg6[%c0_120, %c0_121] : memref<128x512xbf16, #tpu.memory_space<vmem>>, vector<128x512xbf16>
    %cst_122 = arith.constant dense<0.000000e+00> : vector<8x512xf32>
    %403 = tpu.matmul %401, %402, %cst_122 {dimension_numbers = #tpu.dot_dimension_numbers<[1], [0], [0], [1], [0, 0, 1, 1], [], []>} : vector<8x128xbf16>, vector<128x512xbf16>, vector<8x512xf32> -> vector<8x512xf32>
    %404 = arith.addf %400, %403 : vector<8x512xf32>
    %405 = vector.extract_strided_slice %404 {offsets = [0, 0], sizes = [8, 128], strides = [1, 1]} : vector<8x512xf32> to vector<8x128xf32>
    %406 = arith.negf %405 : vector<8x128xf32>
    %407 = math.exp %406 : vector<8x128xf32>
    %cst_123 = arith.constant 1.000000e+00 : f32
    %408 = vector.broadcast %cst_123 : f32 to vector<8x128xf32>
    %409 = arith.addf %408, %407 : vector<8x128xf32>
    %410 = arith.divf %408, %409 : vector<8x128xf32>
    %411 = vector.extract_strided_slice %404 {offsets = [0, 128], sizes = [8, 128], strides = [1, 1]} : vector<8x512xf32> to vector<8x128xf32>
    %412 = arith.negf %411 : vector<8x128xf32>
    %413 = math.exp %412 : vector<8x128xf32>
    %cst_124 = arith.constant 1.000000e+00 : f32
    %414 = vector.broadcast %cst_124 : f32 to vector<8x128xf32>
    %415 = arith.addf %414, %413 : vector<8x128xf32>
    %416 = arith.divf %414, %415 : vector<8x128xf32>
    %417 = vector.extract_strided_slice %404 {offsets = [0, 256], sizes = [8, 128], strides = [1, 1]} : vector<8x512xf32> to vector<8x128xf32>
    %418 = math.tanh %417 : vector<8x128xf32>
    %419 = vector.extract_strided_slice %404 {offsets = [0, 384], sizes = [8, 128], strides = [1, 1]} : vector<8x512xf32> to vector<8x128xf32>
    %420 = arith.negf %419 : vector<8x128xf32>
    %421 = math.exp %420 : vector<8x128xf32>
    %cst_125 = arith.constant 1.000000e+00 : f32
    %422 = vector.broadcast %cst_125 : f32 to vector<8x128xf32>
    %423 = arith.addf %422, %421 : vector<8x128xf32>
    %424 = arith.divf %422, %423 : vector<8x128xf32>
    %425 = arith.mulf %416, %394 : vector<8x128xf32>
    %426 = arith.mulf %410, %418 : vector<8x128xf32>
    %427 = arith.addf %425, %426 : vector<8x128xf32>
    %428 = math.tanh %427 : vector<8x128xf32>
    %429 = arith.mulf %424, %428 : vector<8x128xf32>
    %c4_i32_126 = arith.constant 4 : i32
    %c8_i32_127 = arith.constant 8 : i32
    %430 = arith.muli %c4_i32_126, %c8_i32_127 : i32
    %431 = tpu.assume_multiple %430, 8 : i32
    %432 = arith.index_cast %431 : i32 to index
    %c0_128 = arith.constant 0 : index
    %433 = vector.load %arg13[%432, %c0_128] : memref<64x512xf32, #tpu.memory_space<vmem>>, vector<8x512xf32>
    %434 = arith.truncf %429 : vector<8x128xf32> to vector<8x128xbf16>
    %c0_129 = arith.constant 0 : index
    %c0_130 = arith.constant 0 : index
    %435 = vector.load %arg6[%c0_129, %c0_130] : memref<128x512xbf16, #tpu.memory_space<vmem>>, vector<128x512xbf16>
    %cst_131 = arith.constant dense<0.000000e+00> : vector<8x512xf32>
    %436 = tpu.matmul %434, %435, %cst_131 {dimension_numbers = #tpu.dot_dimension_numbers<[1], [0], [0], [1], [0, 0, 1, 1], [], []>} : vector<8x128xbf16>, vector<128x512xbf16>, vector<8x512xf32> -> vector<8x512xf32>
    %437 = arith.addf %433, %436 : vector<8x512xf32>
    %438 = vector.extract_strided_slice %437 {offsets = [0, 0], sizes = [8, 128], strides = [1, 1]} : vector<8x512xf32> to vector<8x128xf32>
    %439 = arith.negf %438 : vector<8x128xf32>
    %440 = math.exp %439 : vector<8x128xf32>
    %cst_132 = arith.constant 1.000000e+00 : f32
    %441 = vector.broadcast %cst_132 : f32 to vector<8x128xf32>
    %442 = arith.addf %441, %440 : vector<8x128xf32>
    %443 = arith.divf %441, %442 : vector<8x128xf32>
    %444 = vector.extract_strided_slice %437 {offsets = [0, 128], sizes = [8, 128], strides = [1, 1]} : vector<8x512xf32> to vector<8x128xf32>
    %445 = arith.negf %444 : vector<8x128xf32>
    %446 = math.exp %445 : vector<8x128xf32>
    %cst_133 = arith.constant 1.000000e+00 : f32
    %447 = vector.broadcast %cst_133 : f32 to vector<8x128xf32>
    %448 = arith.addf %447, %446 : vector<8x128xf32>
    %449 = arith.divf %447, %448 : vector<8x128xf32>
    %450 = vector.extract_strided_slice %437 {offsets = [0, 256], sizes = [8, 128], strides = [1, 1]} : vector<8x512xf32> to vector<8x128xf32>
    %451 = math.tanh %450 : vector<8x128xf32>
    %452 = vector.extract_strided_slice %437 {offsets = [0, 384], sizes = [8, 128], strides = [1, 1]} : vector<8x512xf32> to vector<8x128xf32>
    %453 = arith.negf %452 : vector<8x128xf32>
    %454 = math.exp %453 : vector<8x128xf32>
    %cst_134 = arith.constant 1.000000e+00 : f32
    %455 = vector.broadcast %cst_134 : f32 to vector<8x128xf32>
    %456 = arith.addf %455, %454 : vector<8x128xf32>
    %457 = arith.divf %455, %456 : vector<8x128xf32>
    %458 = arith.mulf %449, %427 : vector<8x128xf32>
    %459 = arith.mulf %443, %451 : vector<8x128xf32>
    %460 = arith.addf %458, %459 : vector<8x128xf32>
    %461 = math.tanh %460 : vector<8x128xf32>
    %462 = arith.mulf %457, %461 : vector<8x128xf32>
    %c5_i32_135 = arith.constant 5 : i32
    %c8_i32_136 = arith.constant 8 : i32
    %463 = arith.muli %c5_i32_135, %c8_i32_136 : i32
    %464 = tpu.assume_multiple %463, 8 : i32
    %465 = arith.index_cast %464 : i32 to index
    %c0_137 = arith.constant 0 : index
    %466 = vector.load %arg13[%465, %c0_137] : memref<64x512xf32, #tpu.memory_space<vmem>>, vector<8x512xf32>
    %467 = arith.truncf %462 : vector<8x128xf32> to vector<8x128xbf16>
    %c0_138 = arith.constant 0 : index
    %c0_139 = arith.constant 0 : index
    %468 = vector.load %arg6[%c0_138, %c0_139] : memref<128x512xbf16, #tpu.memory_space<vmem>>, vector<128x512xbf16>
    %cst_140 = arith.constant dense<0.000000e+00> : vector<8x512xf32>
    %469 = tpu.matmul %467, %468, %cst_140 {dimension_numbers = #tpu.dot_dimension_numbers<[1], [0], [0], [1], [0, 0, 1, 1], [], []>} : vector<8x128xbf16>, vector<128x512xbf16>, vector<8x512xf32> -> vector<8x512xf32>
    %470 = arith.addf %466, %469 : vector<8x512xf32>
    %471 = vector.extract_strided_slice %470 {offsets = [0, 0], sizes = [8, 128], strides = [1, 1]} : vector<8x512xf32> to vector<8x128xf32>
    %472 = arith.negf %471 : vector<8x128xf32>
    %473 = math.exp %472 : vector<8x128xf32>
    %cst_141 = arith.constant 1.000000e+00 : f32
    %474 = vector.broadcast %cst_141 : f32 to vector<8x128xf32>
    %475 = arith.addf %474, %473 : vector<8x128xf32>
    %476 = arith.divf %474, %475 : vector<8x128xf32>
    %477 = vector.extract_strided_slice %470 {offsets = [0, 128], sizes = [8, 128], strides = [1, 1]} : vector<8x512xf32> to vector<8x128xf32>
    %478 = arith.negf %477 : vector<8x128xf32>
    %479 = math.exp %478 : vector<8x128xf32>
    %cst_142 = arith.constant 1.000000e+00 : f32
    %480 = vector.broadcast %cst_142 : f32 to vector<8x128xf32>
    %481 = arith.addf %480, %479 : vector<8x128xf32>
    %482 = arith.divf %480, %481 : vector<8x128xf32>
    %483 = vector.extract_strided_slice %470 {offsets = [0, 256], sizes = [8, 128], strides = [1, 1]} : vector<8x512xf32> to vector<8x128xf32>
    %484 = math.tanh %483 : vector<8x128xf32>
    %485 = vector.extract_strided_slice %470 {offsets = [0, 384], sizes = [8, 128], strides = [1, 1]} : vector<8x512xf32> to vector<8x128xf32>
    %486 = arith.negf %485 : vector<8x128xf32>
    %487 = math.exp %486 : vector<8x128xf32>
    %cst_143 = arith.constant 1.000000e+00 : f32
    %488 = vector.broadcast %cst_143 : f32 to vector<8x128xf32>
    %489 = arith.addf %488, %487 : vector<8x128xf32>
    %490 = arith.divf %488, %489 : vector<8x128xf32>
    %491 = arith.mulf %482, %460 : vector<8x128xf32>
    %492 = arith.mulf %476, %484 : vector<8x128xf32>
    %493 = arith.addf %491, %492 : vector<8x128xf32>
    %494 = math.tanh %493 : vector<8x128xf32>
    %495 = arith.mulf %490, %494 : vector<8x128xf32>
    %c6_i32_144 = arith.constant 6 : i32
    %c8_i32_145 = arith.constant 8 : i32
    %496 = arith.muli %c6_i32_144, %c8_i32_145 : i32
    %497 = tpu.assume_multiple %496, 8 : i32
    %498 = arith.index_cast %497 : i32 to index
    %c0_146 = arith.constant 0 : index
    %499 = vector.load %arg13[%498, %c0_146] : memref<64x512xf32, #tpu.memory_space<vmem>>, vector<8x512xf32>
    %500 = arith.truncf %495 : vector<8x128xf32> to vector<8x128xbf16>
    %c0_147 = arith.constant 0 : index
    %c0_148 = arith.constant 0 : index
    %501 = vector.load %arg6[%c0_147, %c0_148] : memref<128x512xbf16, #tpu.memory_space<vmem>>, vector<128x512xbf16>
    %cst_149 = arith.constant dense<0.000000e+00> : vector<8x512xf32>
    %502 = tpu.matmul %500, %501, %cst_149 {dimension_numbers = #tpu.dot_dimension_numbers<[1], [0], [0], [1], [0, 0, 1, 1], [], []>} : vector<8x128xbf16>, vector<128x512xbf16>, vector<8x512xf32> -> vector<8x512xf32>
    %503 = arith.addf %499, %502 : vector<8x512xf32>
    %504 = vector.extract_strided_slice %503 {offsets = [0, 0], sizes = [8, 128], strides = [1, 1]} : vector<8x512xf32> to vector<8x128xf32>
    %505 = arith.negf %504 : vector<8x128xf32>
    %506 = math.exp %505 : vector<8x128xf32>
    %cst_150 = arith.constant 1.000000e+00 : f32
    %507 = vector.broadcast %cst_150 : f32 to vector<8x128xf32>
    %508 = arith.addf %507, %506 : vector<8x128xf32>
    %509 = arith.divf %507, %508 : vector<8x128xf32>
    %510 = vector.extract_strided_slice %503 {offsets = [0, 128], sizes = [8, 128], strides = [1, 1]} : vector<8x512xf32> to vector<8x128xf32>
    %511 = arith.negf %510 : vector<8x128xf32>
    %512 = math.exp %511 : vector<8x128xf32>
    %cst_151 = arith.constant 1.000000e+00 : f32
    %513 = vector.broadcast %cst_151 : f32 to vector<8x128xf32>
    %514 = arith.addf %513, %512 : vector<8x128xf32>
    %515 = arith.divf %513, %514 : vector<8x128xf32>
    %516 = vector.extract_strided_slice %503 {offsets = [0, 256], sizes = [8, 128], strides = [1, 1]} : vector<8x512xf32> to vector<8x128xf32>
    %517 = math.tanh %516 : vector<8x128xf32>
    %518 = vector.extract_strided_slice %503 {offsets = [0, 384], sizes = [8, 128], strides = [1, 1]} : vector<8x512xf32> to vector<8x128xf32>
    %519 = arith.negf %518 : vector<8x128xf32>
    %520 = math.exp %519 : vector<8x128xf32>
    %cst_152 = arith.constant 1.000000e+00 : f32
    %521 = vector.broadcast %cst_152 : f32 to vector<8x128xf32>
    %522 = arith.addf %521, %520 : vector<8x128xf32>
    %523 = arith.divf %521, %522 : vector<8x128xf32>
    %524 = arith.mulf %515, %493 : vector<8x128xf32>
    %525 = arith.mulf %509, %517 : vector<8x128xf32>
    %526 = arith.addf %524, %525 : vector<8x128xf32>
    %527 = math.tanh %526 : vector<8x128xf32>
    %528 = arith.mulf %523, %527 : vector<8x128xf32>
    %c7_i32_153 = arith.constant 7 : i32
    %c8_i32_154 = arith.constant 8 : i32
    %529 = arith.muli %c7_i32_153, %c8_i32_154 : i32
    %530 = tpu.assume_multiple %529, 8 : i32
    %531 = arith.index_cast %530 : i32 to index
    %c0_155 = arith.constant 0 : index
    %532 = vector.load %arg13[%531, %c0_155] : memref<64x512xf32, #tpu.memory_space<vmem>>, vector<8x512xf32>
    %533 = arith.truncf %528 : vector<8x128xf32> to vector<8x128xbf16>
    %c0_156 = arith.constant 0 : index
    %c0_157 = arith.constant 0 : index
    %534 = vector.load %arg6[%c0_156, %c0_157] : memref<128x512xbf16, #tpu.memory_space<vmem>>, vector<128x512xbf16>
    %cst_158 = arith.constant dense<0.000000e+00> : vector<8x512xf32>
    %535 = tpu.matmul %533, %534, %cst_158 {dimension_numbers = #tpu.dot_dimension_numbers<[1], [0], [0], [1], [0, 0, 1, 1], [], []>} : vector<8x128xbf16>, vector<128x512xbf16>, vector<8x512xf32> -> vector<8x512xf32>
    %536 = arith.addf %532, %535 : vector<8x512xf32>
    %537 = vector.extract_strided_slice %536 {offsets = [0, 0], sizes = [8, 128], strides = [1, 1]} : vector<8x512xf32> to vector<8x128xf32>
    %538 = arith.negf %537 : vector<8x128xf32>
    %539 = math.exp %538 : vector<8x128xf32>
    %cst_159 = arith.constant 1.000000e+00 : f32
    %540 = vector.broadcast %cst_159 : f32 to vector<8x128xf32>
    %541 = arith.addf %540, %539 : vector<8x128xf32>
    %542 = arith.divf %540, %541 : vector<8x128xf32>
    %543 = vector.extract_strided_slice %536 {offsets = [0, 128], sizes = [8, 128], strides = [1, 1]} : vector<8x512xf32> to vector<8x128xf32>
    %544 = arith.negf %543 : vector<8x128xf32>
    %545 = math.exp %544 : vector<8x128xf32>
    %cst_160 = arith.constant 1.000000e+00 : f32
    %546 = vector.broadcast %cst_160 : f32 to vector<8x128xf32>
    %547 = arith.addf %546, %545 : vector<8x128xf32>
    %548 = arith.divf %546, %547 : vector<8x128xf32>
    %549 = vector.extract_strided_slice %536 {offsets = [0, 256], sizes = [8, 128], strides = [1, 1]} : vector<8x512xf32> to vector<8x128xf32>
    %550 = math.tanh %549 : vector<8x128xf32>
    %551 = vector.extract_strided_slice %536 {offsets = [0, 384], sizes = [8, 128], strides = [1, 1]} : vector<8x512xf32> to vector<8x128xf32>
    %552 = arith.negf %551 : vector<8x128xf32>
    %553 = math.exp %552 : vector<8x128xf32>
    %cst_161 = arith.constant 1.000000e+00 : f32
    %554 = vector.broadcast %cst_161 : f32 to vector<8x128xf32>
    %555 = arith.addf %554, %553 : vector<8x128xf32>
    %556 = arith.divf %554, %555 : vector<8x128xf32>
    %557 = arith.mulf %548, %526 : vector<8x128xf32>
    %558 = arith.mulf %542, %550 : vector<8x128xf32>
    %559 = arith.addf %557, %558 : vector<8x128xf32>
    %560 = math.tanh %559 : vector<8x128xf32>
    %561 = arith.mulf %556, %560 : vector<8x128xf32>
    %c8_i32_162 = arith.constant 8 : i32
    %562 = arith.truncf %561 : vector<8x128xf32> to vector<8x128xbf16>
    %c0_163 = arith.constant 0 : index
    %c0_164 = arith.constant 0 : index
    %563 = vector.load %arg8[%c0_163, %c0_164] : memref<128x128xbf16, #tpu.memory_space<vmem>>, vector<128x128xbf16>
    %cst_165 = arith.constant dense<0.000000e+00> : vector<8x128xf32>
    %564 = tpu.matmul %562, %563, %cst_165 {dimension_numbers = #tpu.dot_dimension_numbers<[1], [0], [0], [1], [0, 0, 1, 1], [], []>} : vector<8x128xbf16>, vector<128x128xbf16>, vector<8x128xf32> -> vector<8x128xf32>
    %c0_166 = arith.constant 0 : index
    %c0_167 = arith.constant 0 : index
    %565 = vector.load %arg9[%c0_166, %c0_167] : memref<1x128xf32, #tpu.memory_space<vmem>>, vector<1x128xf32>
    %566 = vector.broadcast %565 : vector<1x128xf32> to vector<8x128xf32>
    %567 = arith.addf %564, %566 : vector<8x128xf32>
    %c0_168 = arith.constant 0 : index
    %c0_169 = arith.constant 0 : index
    %568 = vector.load %arg10[%c0_168, %c0_169] : memref<8x128xf32, #tpu.memory_space<vmem>>, vector<8x128xf32>
    tpu.vector_store %arg10[%c0_168, %c0_169], %567 {strides = array<i32>} : memref<8x128xf32, #tpu.memory_space<vmem>>, vector<8x128xf32>,
    return
  }
  func.func @transform_0(%arg0: i32) -> (i32, i32, i32) {
    %c0_i32 = arith.constant 0 : i32
    %c0_i32_0 = arith.constant 0 : i32
    %c0_i32_1 = arith.constant 0 : i32
    return %arg0, %c0_i32, %c0_i32_0 : i32, i32, i32
  }
  func.func @transform_1(%arg0: i32) -> (i32, i32) {
    %c0_i32 = arith.constant 0 : i32
    %c0_i32_0 = arith.constant 0 : i32
    %c0_i32_1 = arith.constant 0 : i32
    return %c0_i32, %c0_i32_0 : i32, i32
  }
  func.func @transform_2(%arg0: i32) -> (i32, i32) {
    %c0_i32 = arith.constant 0 : i32
    %c0_i32_0 = arith.constant 0 : i32
    %c0_i32_1 = arith.constant 0 : i32
    return %c0_i32, %c0_i32_0 : i32, i32
  }
  func.func @transform_3(%arg0: i32) -> (i32, i32) {
    %c0_i32 = arith.constant 0 : i32
    %c0_i32_0 = arith.constant 0 : i32
    %c0_i32_1 = arith.constant 0 : i32
    return %c0_i32, %c0_i32_0 : i32, i32
  }
  func.func @transform_4(%arg0: i32) -> (i32, i32) {
    %c0_i32 = arith.constant 0 : i32
    %c0_i32_0 = arith.constant 0 : i32
    %c0_i32_1 = arith.constant 0 : i32
    return %c0_i32, %c0_i32_0 : i32, i32
  }
  func.func @transform_5(%arg0: i32) -> (i32, i32) {
    %c0_i32 = arith.constant 0 : i32
    %c0_i32_0 = arith.constant 0 : i32
    %c0_i32_1 = arith.constant 0 : i32
    return %c0_i32, %c0_i32_0 : i32, i32
  }
  func.func @transform_6(%arg0: i32) -> (i32, i32) {
    %c0_i32 = arith.constant 0 : i32
    %c0_i32_0 = arith.constant 0 : i32
    %c0_i32_1 = arith.constant 0 : i32
    return %c0_i32, %c0_i32_0 : i32, i32
  }
  func.func @transform_7(%arg0: i32) -> (i32, i32) {
    %c0_i32 = arith.constant 0 : i32
    %c0_i32_0 = arith.constant 0 : i32
    %c0_i32_1 = arith.constant 0 : i32
    return %c0_i32, %c0_i32_0 : i32, i32
  }
  func.func @transform_8(%arg0: i32) -> (i32, i32) {
    %c0_i32 = arith.constant 0 : i32
    %c0_i32_0 = arith.constant 0 : i32
    %c0_i32_1 = arith.constant 0 : i32
    return %c0_i32, %c0_i32_0 : i32, i32
  }
  func.func @transform_9(%arg0: i32) -> (i32, i32) {
    %c0_i32 = arith.constant 0 : i32
    %c0_i32_0 = arith.constant 0 : i32
    return %arg0, %c0_i32 : i32, i32
  }
}

</mosaic_0001>

<llo_original>
// kernel: tpu_custom_call.1
$region0: #{tpu_custom_call.1}
  #allocation0 [shape = 'u32[]', space=smem, size = 0x4, offset = 0x4, fixed_abs, tag = 'smem constant byte address 0x4 - core index']
  #allocation1 [shape = 'u32[144,128]{1,0:T(1,128)}', space=vmem, size = 0x12000, scoped, tag = 'internal scratch']
  #allocation2 [shape = 'f32[64,512]{1,0:T(8,128)}', space=vmem, size = 0x20000, scoped, tag = 'scratch operand']
  #allocation3 [shape = 'f32[64,128]{1,0:T(8,128)}', space=vmem, size = 0x8000, scoped, tag = 'scratch operand']
  #allocation4 [shape = 'f32[64,512]{1,0:T(8,128)}', space=vmem, size = 0x20000, scoped, tag = 'scratch operand']
  %s0 = inlined_call_operand.hbm [shape: f32[1,64,128], index: 0, kind: input, shape index: {}]
  %s1 = inlined_call_operand.hbm [shape: bf16[128,512], index: 1, kind: input, shape index: {}]
  %s2 = inlined_call_operand.hbm [shape: bf16[128,512], index: 2, kind: input, shape index: {}]
  %s3 = inlined_call_operand.vmem [shape: f32[1,512], index: 3, kind: input, shape index: {}]
  %s4 = inlined_call_operand.hbm [shape: bf16[128,512], index: 4, kind: input, shape index: {}]
  %s5 = inlined_call_operand.hbm [shape: bf16[128,512], index: 5, kind: input, shape index: {}]
  %s6 = inlined_call_operand.vmem [shape: f32[1,512], index: 6, kind: input, shape index: {}]
  %s7 = inlined_call_operand.hbm [shape: bf16[128,128], index: 7, kind: input, shape index: {}]
  %s8 = inlined_call_operand.vmem [shape: f32[1,128], index: 8, kind: input, shape index: {}]
  %s9 = inlined_call_operand.hbm [shape: f32[8,128], index: 9, kind: output, shape index: {}]
  %s10 = sld [smem:[#allocation0]]
  $region70: #{tpu_custom_call.1} parent=0
    _
  %s12 = ssub.s32 1, %s10
  %s13 = scalar_select 0, %s12, %s10
  $region1: #{tpu_custom_call.1} parent=0
    #allocation5 [shape = 'u8[32768]{0}', space=vmem, size = 0x8000, scoped, tag = 'input window, operand 0, single buffered']
    #allocation6 [shape = 's32[1]{0}', space=sflag, size = 0x4, scoped, tag = 'scoped memory for tpu_custom_call.1']
    #allocation7 [shape = 's32[1]{0}', space=sflag, size = 0x4, scoped, tag = 'scoped memory for tpu_custom_call.1']
    #allocation8 [shape = 'u8[131072]{0}', space=vmem, size = 0x20000, scoped, tag = 'input window, operand 1, single buffered']
    #allocation9 [shape = 's32[1]{0}', space=sflag, size = 0x4, scoped, tag = 'scoped memory for tpu_custom_call.1']
    #allocation10 [shape = 'u8[131072]{0}', space=vmem, size = 0x20000, scoped, tag = 'input window, operand 2, single buffered']
    #allocation11 [shape = 'u8[131072]{0}', space=vmem, size = 0x20000, scoped, tag = 'input window, operand 4, single buffered']
    #allocation12 [shape = 's32[1]{0}', space=sflag, size = 0x4, scoped, tag = 'scoped memory for tpu_custom_call.1']
    #allocation13 [shape = 'u8[131072]{0}', space=vmem, size = 0x20000, scoped, tag = 'input window, operand 5, single buffered']
    #allocation14 [shape = 'u8[32768]{0}', space=vmem, size = 0x8000, scoped, tag = 'input window, operand 7, single buffered']
    #allocation15 [shape = 's32[1]{0}', space=sflag, size = 0x4, scoped, tag = 'scoped memory for tpu_custom_call.1']
    #allocation16 [shape = 'u8[4096]{0}', space=vmem, size = 0x1000, scoped, tag = 'output window, operand 0, single buffered']
    %14 = vsyncpa [#allocation6], 0
    %15 = vsyncpa [#allocation9], 0
    %16 = vsyncpa [#allocation12], 0
    %17 = vsyncpa [#allocation15], 0
    %18 = vsyncpa [#allocation7], 0
    // Predicated region
    $region2: #{tpu_custom_call.1} parent=1 // pred_check
      _
    $region3: #{tpu_custom_call.1} parent=1 // pred_check_branch
      %20 = sbr.rel (0) target = $region5
    $region4: #{tpu_custom_call.1} parent=1 // pred_region
      %s22 = ssub.s32 1024, 1024
      %23 = vsyncadd [#allocation6], %s22
      %s24 = sshll.u32 [#allocation5], 4
      %s25 = int_to_ptr.vmem [resolvable:$true] %s24
      %30 = dma.hbm_to_vmem [thread:$0]  %s0, 1024, %s25, [#allocation6], 128, 128, 8
    $region5: #{tpu_custom_call.1} parent=1 // pred_fallthru
      _
    // Predicated region
    $region6: #{tpu_custom_call.1} parent=1 // pred_check
      _
    $region7: #{tpu_custom_call.1} parent=1 // pred_check_branch
      %32 = sbr.rel (0) target = $region9
    $region8: #{tpu_custom_call.1} parent=1 // pred_region
      %s34 = ssub.s32 4096, 4096
      %35 = vsyncadd [#allocation9], %s34
      %s36 = sshll.u32 [#allocation8], 4
      %s37 = int_to_ptr.vmem [resolvable:$true] %s36
      %42 = dma.hbm_to_vmem [thread:$0]  %s1, 4096, %s37, [#allocation9], 256, 256, 16
    $region9: #{tpu_custom_call.1} parent=1 // pred_fallthru
      _
    // Predicated region
    $region10: #{tpu_custom_call.1} parent=1 // pred_check
      _
    $region11: #{tpu_custom_call.1} parent=1 // pred_check_branch
      %44 = sbr.rel (0) target = $region13
    $region12: #{tpu_custom_call.1} parent=1 // pred_region
      %s46 = ssub.s32 4096, 4096
      %47 = vsyncadd [#allocation9], %s46
      %s48 = sshll.u32 [#allocation10], 4
      %s49 = int_to_ptr.vmem [resolvable:$true] %s48
      %54 = dma.hbm_to_vmem [thread:$0]  %s2, 4096, %s49, [#allocation9], 256, 256, 16
    $region13: #{tpu_custom_call.1} parent=1 // pred_fallthru
      _
    // Predicated region
    $region14: #{tpu_custom_call.1} parent=1 // pred_check
      _
    $region15: #{tpu_custom_call.1} parent=1 // pred_check_branch
      %56 = sbr.rel (0) target = $region17
    $region16: #{tpu_custom_call.1} parent=1 // pred_region
      _
    $region17: #{tpu_custom_call.1} parent=1 // pred_fallthru
      _
    // Predicated region
    $region18: #{tpu_custom_call.1} parent=1 // pred_check
      _
    $region19: #{tpu_custom_call.1} parent=1 // pred_check_branch
      %58 = sbr.rel (0) target = $region21
    $region20: #{tpu_custom_call.1} parent=1 // pred_region
      %s60 = ssub.s32 4096, 4096
      %61 = vsyncadd [#allocation12], %s60
      %s62 = sshll.u32 [#allocation11], 4
      %s63 = int_to_ptr.vmem [resolvable:$true] %s62
      %68 = dma.hbm_to_vmem [thread:$0]  %s4, 4096, %s63, [#allocation12], 256, 256, 16
    $region21: #{tpu_custom_call.1} parent=1 // pred_fallthru
      _
    // Predicated region
    $region22: #{tpu_custom_call.1} parent=1 // pred_check
      _
    $region23: #{tpu_custom_call.1} parent=1 // pred_check_branch
      %70 = sbr.rel (0) target = $region25
    $region24: #{tpu_custom_call.1} parent=1 // pred_region
      %s72 = ssub.s32 4096, 4096
      %73 = vsyncadd [#allocation12], %s72
      %s74 = sshll.u32 [#allocation13], 4
      %s75 = int_to_ptr.vmem [resolvable:$true] %s74
      %80 = dma.hbm_to_vmem [thread:$0]  %s5, 4096, %s75, [#allocation12], 256, 256, 16
    $region25: #{tpu_custom_call.1} parent=1 // pred_fallthru
      _
    // Predicated region
    $region26: #{tpu_custom_call.1} parent=1 // pred_check
      _
    $region27: #{tpu_custom_call.1} parent=1 // pred_check_branch
      %82 = sbr.rel (0) target = $region29
    $region28: #{tpu_custom_call.1} parent=1 // pred_region
      _
    $region29: #{tpu_custom_call.1} parent=1 // pred_fallthru
      _
    // Predicated region
    $region30: #{tpu_custom_call.1} parent=1 // pred_check
      _
    $region31: #{tpu_custom_call.1} parent=1 // pred_check_branch
      %84 = sbr.rel (0) target = $region33
    $region32: #{tpu_custom_call.1} parent=1 // pred_region
      %s86 = ssub.s32 1024, 1024
      %87 = vsyncadd [#allocation15], %s86
      %s88 = sshll.u32 [#allocation14], 4
      %s89 = int_to_ptr.vmem [resolvable:$true] %s88
      %94 = dma.hbm_to_vmem [thread:$0]  %s7, 1024, %s89, [#allocation15], 64, 64, 4
    $region33: #{tpu_custom_call.1} parent=1 // pred_fallthru
      _
    // Predicated region
    $region34: #{tpu_custom_call.1} parent=1 // pred_check
      _
    $region35: #{tpu_custom_call.1} parent=1 // pred_check_branch
      %96 = sbr.rel (0) target = $region37
    $region36: #{tpu_custom_call.1} parent=1 // pred_region
      _
    $region37: #{tpu_custom_call.1} parent=1 // pred_fallthru
      _
    // Predicated region
    $region38: #{tpu_custom_call.1} parent=1 // pred_check
      _
    $region39: #{tpu_custom_call.1} parent=1 // pred_check_branch
      %98 = sbr.rel (0) target = $region41
    $region40: #{tpu_custom_call.1} parent=1 // pred_region
      %99 = dma.done [#allocation6], 1024
    $region41: #{tpu_custom_call.1} parent=1 // pred_fallthru
      _
    // Predicated region
    $region42: #{tpu_custom_call.1} parent=1 // pred_check
      _
    $region43: #{tpu_custom_call.1} parent=1 // pred_check_branch
      %101 = sbr.rel (0) target = $region45
    $region44: #{tpu_custom_call.1} parent=1 // pred_region
      %102 = dma.done [#allocation9], 4096
    $region45: #{tpu_custom_call.1} parent=1 // pred_fallthru
      _
    // Predicated region
    $region46: #{tpu_custom_call.1} parent=1 // pred_check
      _
    $region47: #{tpu_custom_call.1} parent=1 // pred_check_branch
      %104 = sbr.rel (0) target = $region49
    $region48: #{tpu_custom_call.1} parent=1 // pred_region
      %105 = dma.done [#allocation9], 4096
    $region49: #{tpu_custom_call.1} parent=1 // pred_fallthru
      _
    // Predicated region
    $region50: #{tpu_custom_call.1} parent=1 // pred_check
      _
    $region51: #{tpu_custom_call.1} parent=1 // pred_check_branch
      %107 = sbr.rel (0) target = $region53
    $region52: #{tpu_custom_call.1} parent=1 // pred_region
      %108 = dma.done [#allocation12], 4096
    $region53: #{tpu_custom_call.1} parent=1 // pred_fallthru
      _
    // Predicated region
    $region54: #{tpu_custom_call.1} parent=1 // pred_check
      _
    $region55: #{tpu_custom_call.1} parent=1 // pred_check_branch
      %110 = sbr.rel (0) target = $region57
    $region56: #{tpu_custom_call.1} parent=1 // pred_region
      %111 = dma.done [#allocation12], 4096
    $region57: #{tpu_custom_call.1} parent=1 // pred_fallthru
      _
    // Predicated region
    $region58: #{tpu_custom_call.1} parent=1 // pred_check
      _
    $region59: #{tpu_custom_call.1} parent=1 // pred_check_branch
      %113 = sbr.rel (0) target = $region61
    $region60: #{tpu_custom_call.1} parent=1 // pred_region
      %114 = dma.done [#allocation15], 1024
    $region61: #{tpu_custom_call.1} parent=1 // pred_fallthru
      _
    %v116 = vld [vmem:[#allocation5] sm:$0xff]
    %v117 = vld [vmem:[#allocation5 + $0x8] sm:$0xff]
    %v118 = vld [vmem:[#allocation5 + $0x10] sm:$0xff]
    %v119 = vld [vmem:[#allocation5 + $0x18] sm:$0xff]
    %v120 = vld [vmem:[#allocation5 + $0x20] sm:$0xff]
    %v121 = vld [vmem:[#allocation5 + $0x28] sm:$0xff]
    %v122 = vld [vmem:[#allocation5 + $0x30] sm:$0xff]
    %v123 = vld [vmem:[#allocation5 + $0x38] sm:$0xff]
    %v124 = vpack.c.bf16 %v117, %v116
    %v125 = vpack.c.bf16 %v119, %v118
    %v126 = vpack.c.bf16 %v121, %v120
    %v127 = vpack.c.bf16 %v123, %v122
    %v128 = vld [vmem:[#allocation8] sm:$0xff]
    %v129 = vld [vmem:[#allocation8 + $0x8] sm:$0xff]
    %v130 = vld [vmem:[#allocation8 + $0x10] sm:$0xff]
    %v131 = vld [vmem:[#allocation8 + $0x18] sm:$0xff]
    %v132 = vld [vmem:[#allocation8 + $0x20] sm:$0xff]
    %v133 = vld [vmem:[#allocation8 + $0x28] sm:$0xff]
    %v134 = vld [vmem:[#allocation8 + $0x30] sm:$0xff]
    %v135 = vld [vmem:[#allocation8 + $0x38] sm:$0xff]
    %v136 = vld [vmem:[#allocation8 + $0x40] sm:$0xff]
    %v137 = vld [vmem:[#allocation8 + $0x48] sm:$0xff]
    %v138 = vld [vmem:[#allocation8 + $0x50] sm:$0xff]
    %v139 = vld [vmem:[#allocation8 + $0x58] sm:$0xff]
    %v140 = vld [vmem:[#allocation8 + $0x60] sm:$0xff]
    %v141 = vld [vmem:[#allocation8 + $0x68] sm:$0xff]
    %v142 = vld [vmem:[#allocation8 + $0x70] sm:$0xff]
    %v143 = vld [vmem:[#allocation8 + $0x78] sm:$0xff]
    %v144 = vld [vmem:[#allocation8 + $0x80] sm:$0xff]
    %v145 = vld [vmem:[#allocation8 + $0x88] sm:$0xff]
    %v146 = vld [vmem:[#allocation8 + $0x90] sm:$0xff]
    %v147 = vld [vmem:[#allocation8 + $0x98] sm:$0xff]
    %v148 = vld [vmem:[#allocation8 + $0xa0] sm:$0xff]
    %v149 = vld [vmem:[#allocation8 + $0xa8] sm:$0xff]
    %v150 = vld [vmem:[#allocation8 + $0xb0] sm:$0xff]
    %v151 = vld [vmem:[#allocation8 + $0xb8] sm:$0xff]
    %v152 = vld [vmem:[#allocation8 + $0xc0] sm:$0xff]
    %v153 = vld [vmem:[#allocation8 + $0xc8] sm:$0xff]
    %v154 = vld [vmem:[#allocation8 + $0xd0] sm:$0xff]
    %v155 = vld [vmem:[#allocation8 + $0xd8] sm:$0xff]
    %v156 = vld [vmem:[#allocation8 + $0xe0] sm:$0xff]
    %v157 = vld [vmem:[#allocation8 + $0xe8] sm:$0xff]
    %v158 = vld [vmem:[#allocation8 + $0xf0] sm:$0xff]
    %v159 = vld [vmem:[#allocation8 + $0xf8] sm:$0xff]
    %v160 = vld [vmem:[%s3] sm:$0xf]
    %v162 = vlaneseq
    %v163 = vshrl.u32 %v162, 7
    %v164 = vsub.s32 0, %v163
    %v165 = vrot.slane %v160, %v164
    %v166 = vlaneseq
    %v167 = vshrl.u32 %v166, 7
    %v168 = vsub.s32 1, %v167
    %v169 = vrot.slane %v160, %v168
    %v170 = vlaneseq
    %v171 = vshrl.u32 %v170, 7
    %v172 = vsub.s32 2, %v171
    %v173 = vrot.slane %v160, %v172
    %v174 = vlaneseq
    %v175 = vshrl.u32 %v174, 7
    %v176 = vsub.s32 3, %v175
    %v177 = vrot.slane %v160, %v176
    %v214 = vunpack.c.l.b16 %v128
    %v215 = vunpack.c.h.b16 %v128
    %v216 = vunpack.c.l.b16 %v129
    %v217 = vunpack.c.h.b16 %v129
    %v218 = vunpack.c.l.b16 %v130
    %v219 = vunpack.c.h.b16 %v130
    %v220 = vunpack.c.l.b16 %v131
    %v221 = vunpack.c.h.b16 %v131
    %v222 = vunpack.c.l.b16 %v132
    %v223 = vunpack.c.h.b16 %v132
    %v224 = vunpack.c.l.b16 %v133
    %v225 = vunpack.c.h.b16 %v133
    %v226 = vunpack.c.l.b16 %v134
    %v227 = vunpack.c.h.b16 %v134
    %v228 = vunpack.c.l.b16 %v135
    %v229 = vunpack.c.h.b16 %v135
    %v230 = vunpack.c.l.b16 %v136
    %v231 = vunpack.c.h.b16 %v136
    %v232 = vunpack.c.l.b16 %v137
    %v233 = vunpack.c.h.b16 %v137
    %v234 = vunpack.c.l.b16 %v138
    %v235 = vunpack.c.h.b16 %v138
    %v236 = vunpack.c.l.b16 %v139
    %v237 = vunpack.c.h.b16 %v139
    %v238 = vunpack.c.l.b16 %v140
    %v239 = vunpack.c.h.b16 %v140
    %v240 = vunpack.c.l.b16 %v141
    %v241 = vunpack.c.h.b16 %v141
    %v242 = vunpack.c.l.b16 %v142
    %v243 = vunpack.c.h.b16 %v142
    %v244 = vunpack.c.l.b16 %v143
    %v245 = vunpack.c.h.b16 %v143
    %v246 = vunpack.c.l.b16 %v144
    %v247 = vunpack.c.h.b16 %v144
    %v248 = vunpack.c.l.b16 %v145
    %v249 = vunpack.c.h.b16 %v145
    %v250 = vunpack.c.l.b16 %v146
    %v251 = vunpack.c.h.b16 %v146
    %v252 = vunpack.c.l.b16 %v147
    %v253 = vunpack.c.h.b16 %v147
    %v254 = vunpack.c.l.b16 %v148
    %v255 = vunpack.c.h.b16 %v148
    %v256 = vunpack.c.l.b16 %v149
    %v257 = vunpack.c.h.b16 %v149
    %v258 = vunpack.c.l.b16 %v150
    %v259 = vunpack.c.h.b16 %v150
    %v260 = vunpack.c.l.b16 %v151
    %v261 = vunpack.c.h.b16 %v151
    %v262 = vunpack.c.l.b16 %v152
    %v263 = vunpack.c.h.b16 %v152
    %v264 = vunpack.c.l.b16 %v153
    %v265 = vunpack.c.h.b16 %v153
    %v266 = vunpack.c.l.b16 %v154
    %v267 = vunpack.c.h.b16 %v154
    %v268 = vunpack.c.l.b16 %v155
    %v269 = vunpack.c.h.b16 %v155
    %v270 = vunpack.c.l.b16 %v156
    %v271 = vunpack.c.h.b16 %v156
    %v272 = vunpack.c.l.b16 %v157
    %v273 = vunpack.c.h.b16 %v157
    %v274 = vunpack.c.l.b16 %v158
    %v275 = vunpack.c.h.b16 %v158
    %v276 = vunpack.c.l.b16 %v159
    %v277 = vunpack.c.h.b16 %v159
    %v278 = vpack.c.b16 %v218, %v214
    %v279 = vpack.c.b16 %v219, %v215
    %v280 = vpack.c.b16 %v220, %v216
    %v281 = vpack.c.b16 %v221, %v217
    %v282 = vpack.c.b16 %v226, %v222
    %v283 = vpack.c.b16 %v227, %v223
    %v284 = vpack.c.b16 %v228, %v224
    %v285 = vpack.c.b16 %v229, %v225
    %v286 = vpack.c.b16 %v234, %v230
    %v287 = vpack.c.b16 %v235, %v231
    %v288 = vpack.c.b16 %v236, %v232
    %v289 = vpack.c.b16 %v237, %v233
    %v290 = vpack.c.b16 %v242, %v238
    %v291 = vpack.c.b16 %v243, %v239
    %v292 = vpack.c.b16 %v244, %v240
    %v293 = vpack.c.b16 %v245, %v241
    %v294 = vpack.c.b16 %v250, %v246
    %v295 = vpack.c.b16 %v251, %v247
    %v296 = vpack.c.b16 %v252, %v248
    %v297 = vpack.c.b16 %v253, %v249
    %v298 = vpack.c.b16 %v258, %v254
    %v299 = vpack.c.b16 %v259, %v255
    %v300 = vpack.c.b16 %v260, %v256
    %v301 = vpack.c.b16 %v261, %v257
    %v302 = vpack.c.b16 %v266, %v262
    %v303 = vpack.c.b16 %v267, %v263
    %v304 = vpack.c.b16 %v268, %v264
    %v305 = vpack.c.b16 %v269, %v265
    %v306 = vpack.c.b16 %v274, %v270
    %v307 = vpack.c.b16 %v275, %v271
    %v308 = vpack.c.b16 %v276, %v272
    %v309 = vpack.c.b16 %v277, %v273
    %342 = vmatprep.subr.bf16.mxu0 %v279
    %343 = vmatpush1.bf16.msra.mxu0 %v278
    %344 = vmatprep.subr.bf16.mxu0 %v283
    %345 = vmatpush1.bf16.msra.mxu0 %v282
    %346 = vmatprep.subr.bf16.mxu0 %v287
    %347 = vmatpush1.bf16.msra.mxu0 %v286
    %348 = vmatprep.subr.bf16.mxu0 %v291
    %349 = vmatpush1.bf16.msra.mxu0 %v290
    %350 = vmatprep.subr.bf16.mxu0 %v295
    %351 = vmatpush1.bf16.msra.mxu0 %v294
    %352 = vmatprep.subr.bf16.mxu0 %v299
    %353 = vmatpush1.bf16.msra.mxu0 %v298
    %354 = vmatprep.subr.bf16.mxu0 %v303
    %355 = vmatpush1.bf16.msra.mxu0 %v302
    %356 = vmatprep.subr.bf16.mxu0 %v307
    %357 = vmatpush1.bf16.msra.mxu0 %v306
    %358 = vmatprep.subr.bf16.mxu0 0
    %359 = vmatpush1.bf16.msra.mxu0 0
    %360 = vmatprep.subr.bf16.mxu0 0
    %361 = vmatpush1.bf16.msra.mxu0 0
    %362 = vmatprep.subr.bf16.mxu0 0
    %363 = vmatpush1.bf16.msra.mxu0 0
    %364 = vmatprep.subr.bf16.mxu0 0
    %365 = vmatpush1.bf16.msra.mxu0 0
    %366 = vmatprep.subr.bf16.mxu0 0
    %367 = vmatpush1.bf16.msra.mxu0 0
    %368 = vmatprep.subr.bf16.mxu0 0
    %369 = vmatpush1.bf16.msra.mxu0 0
    %370 = vmatprep.subr.bf16.mxu0 0
    %371 = vmatpush1.bf16.msra.mxu0 0
    %372 = vmatprep.subr.bf16.mxu0 0
    %373 = vmatpush1.bf16.msra.mxu0 0
    %374 = vmatprep.mubr.bf16.mxu0 0
    %375 = vmatmul.mubr.bf16.gmra.mrb[0].mxu0 %v124
    %v376 = vpop.f32.mrb[0].mxu0
    %v377 = vadd.f32 %v165, %v376
    %v378 = vpop.f32.mrb[0].mxu0
    %v379 = vadd.f32 %v169, %v378
    %v380 = vpop.f32.mrb[0].mxu0
    %v381 = vadd.f32 %v165, %v380
    %v382 = vpop.f32.mrb[0].mxu0
    %v383 = vadd.f32 %v169, %v382
    %384 = vmatprep.mubr.bf16.mxu0 0
    %385 = vmatmul.mubr.bf16.gmra.mrb[0].mxu0 %v125
    %v386 = vpop.f32.mrb[0].mxu0
    %v387 = vadd.f32 %v165, %v386
    %v388 = vpop.f32.mrb[0].mxu0
    %v389 = vadd.f32 %v169, %v388
    %v390 = vpop.f32.mrb[0].mxu0
    %v391 = vadd.f32 %v165, %v390
    %v392 = vpop.f32.mrb[0].mxu0
    %v393 = vadd.f32 %v169, %v392
    %394 = vmatprep.mubr.bf16.mxu0 0
    %395 = vmatmul.mubr.bf16.gmra.mrb[0].mxu0 %v126
    %v396 = vpop.f32.mrb[0].mxu0
    %v397 = vadd.f32 %v165, %v396
    %v398 = vpop.f32.mrb[0].mxu0
    %v399 = vadd.f32 %v169, %v398
    %v400 = vpop.f32.mrb[0].mxu0
    %v401 = vadd.f32 %v165, %v400
    %v402 = vpop.f32.mrb[0].mxu0
    %v403 = vadd.f32 %v169, %v402
    %404 = vmatprep.mubr.bf16.mxu0 0
    %405 = vmatmul.mubr.bf16.gmra.mrb[0].mxu0 %v127
    %v406 = vpop.f32.mrb[0].mxu0
    %v407 = vadd.f32 %v165, %v406
    %v408 = vpop.f32.mrb[0].mxu0
    %v409 = vadd.f32 %v169, %v408
    %v410 = vpop.f32.mrb[0].mxu0
    %v411 = vadd.f32 %v165, %v410
    %v412 = vpop.f32.mrb[0].mxu0
    %v413 = vadd.f32 %v169, %v412
    %414 = vdwg.mxu0
    %415 = vmatprep.subr.bf16.mxu0 %v281
    %416 = vmatpush1.bf16.msra.mxu0 %v280
    %417 = vmatprep.subr.bf16.mxu0 %v285
    %418 = vmatpush1.bf16.msra.mxu0 %v284
    %419 = vmatprep.subr.bf16.mxu0 %v289
    %420 = vmatpush1.bf16.msra.mxu0 %v288
    %421 = vmatprep.subr.bf16.mxu0 %v293
    %422 = vmatpush1.bf16.msra.mxu0 %v292
    %423 = vmatprep.subr.bf16.mxu0 %v297
    %424 = vmatpush1.bf16.msra.mxu0 %v296
    %425 = vmatprep.subr.bf16.mxu0 %v301
    %426 = vmatpush1.bf16.msra.mxu0 %v300
    %427 = vmatprep.subr.bf16.mxu0 %v305
    %428 = vmatpush1.bf16.msra.mxu0 %v304
    %429 = vmatprep.subr.bf16.mxu0 %v309
    %430 = vmatpush1.bf16.msra.mxu0 %v308
    %431 = vmatprep.subr.bf16.mxu0 0
    %432 = vmatpush1.bf16.msra.mxu0 0
    %433 = vmatprep.subr.bf16.mxu0 0
    %434 = vmatpush1.bf16.msra.mxu0 0
    %435 = vmatprep.subr.bf16.mxu0 0
    %436 = vmatpush1.bf16.msra.mxu0 0
    %437 = vmatprep.subr.bf16.mxu0 0
    %438 = vmatpush1.bf16.msra.mxu0 0
    %439 = vmatprep.subr.bf16.mxu0 0
    %440 = vmatpush1.bf16.msra.mxu0 0
    %441 = vmatprep.subr.bf16.mxu0 0
    %442 = vmatpush1.bf16.msra.mxu0 0
    %443 = vmatprep.subr.bf16.mxu0 0
    %444 = vmatpush1.bf16.msra.mxu0 0
    %445 = vmatprep.subr.bf16.mxu0 0
    %446 = vmatpush1.bf16.msra.mxu0 0
    %447 = vmatprep.mubr.bf16.mxu0 0
    %448 = vmatmul.mubr.bf16.gmra.mrb[0].mxu0 %v124
    %v449 = vpop.f32.mrb[0].mxu0
    %v450 = vadd.f32 %v173, %v449
    %v451 = vpop.f32.mrb[0].mxu0
    %v452 = vadd.f32 %v177, %v451
    %v453 = vpop.f32.mrb[0].mxu0
    %v454 = vadd.f32 %v173, %v453
    %v455 = vpop.f32.mrb[0].mxu0
    %v456 = vadd.f32 %v177, %v455
    %457 = vmatprep.mubr.bf16.mxu0 0
    %458 = vmatmul.mubr.bf16.gmra.mrb[0].mxu0 %v125
    %v459 = vpop.f32.mrb[0].mxu0
    %v460 = vadd.f32 %v173, %v459
    %v461 = vpop.f32.mrb[0].mxu0
    %v462 = vadd.f32 %v177, %v461
    %v463 = vpop.f32.mrb[0].mxu0
    %v464 = vadd.f32 %v173, %v463
    %v465 = vpop.f32.mrb[0].mxu0
    %v466 = vadd.f32 %v177, %v465
    %467 = vmatprep.mubr.bf16.mxu0 0
    %468 = vmatmul.mubr.bf16.gmra.mrb[0].mxu0 %v126
    %v469 = vpop.f32.mrb[0].mxu0
    %v470 = vadd.f32 %v173, %v469
    %v471 = vpop.f32.mrb[0].mxu0
    %v472 = vadd.f32 %v177, %v471
    %v473 = vpop.f32.mrb[0].mxu0
    %v474 = vadd.f32 %v173, %v473
    %v475 = vpop.f32.mrb[0].mxu0
    %v476 = vadd.f32 %v177, %v475
    %477 = vmatprep.mubr.bf16.mxu0 0
    %478 = vmatmul.mubr.bf16.gmra.mrb[0].mxu0 %v127
    %v479 = vpop.f32.mrb[0].mxu0
    %v480 = vadd.f32 %v173, %v479
    %v481 = vpop.f32.mrb[0].mxu0
    %v482 = vadd.f32 %v177, %v481
    %v483 = vpop.f32.mrb[0].mxu0
    %v484 = vadd.f32 %v173, %v483
    %v485 = vpop.f32.mrb[0].mxu0
    %v486 = vadd.f32 %v177, %v485
    %487 = vdwg.mxu0
    %488 = vst [vmem:[#allocation2] sm:$0xff] %v377
    %489 = vst [vmem:[#allocation2 + $0x8] sm:$0xff] %v379
    %490 = vst [vmem:[#allocation2 + $0x10] sm:$0xff] %v450
    %491 = vst [vmem:[#allocation2 + $0x18] sm:$0xff] %v452
    %492 = vst [vmem:[#allocation2 + $0x20] sm:$0xff] %v381
    %493 = vst [vmem:[#allocation2 + $0x28] sm:$0xff] %v383
    %494 = vst [vmem:[#allocation2 + $0x30] sm:$0xff] %v454
    %495 = vst [vmem:[#allocation2 + $0x38] sm:$0xff] %v456
    %496 = vst [vmem:[#allocation2 + $0x40] sm:$0xff] %v387
    %497 = vst [vmem:[#allocation2 + $0x48] sm:$0xff] %v389
    %498 = vst [vmem:[#allocation2 + $0x50] sm:$0xff] %v460
    %499 = vst [vmem:[#allocation2 + $0x58] sm:$0xff] %v462
    %500 = vst [vmem:[#allocation2 + $0x60] sm:$0xff] %v391
    %501 = vst [vmem:[#allocation2 + $0x68] sm:$0xff] %v393
    %502 = vst [vmem:[#allocation2 + $0x70] sm:$0xff] %v464
    %503 = vst [vmem:[#allocation2 + $0x78] sm:$0xff] %v466
    %504 = vst [vmem:[#allocation2 + $0x80] sm:$0xff] %v397
    %505 = vst [vmem:[#allocation2 + $0x88] sm:$0xff] %v399
    %506 = vst [vmem:[#allocation2 + $0x90] sm:$0xff] %v470
    %507 = vst [vmem:[#allocation2 + $0x98] sm:$0xff] %v472
    %508 = vst [vmem:[#allocation2 + $0xa0] sm:$0xff] %v401
    %509 = vst [vmem:[#allocation2 + $0xa8] sm:$0xff] %v403
    %510 = vst [vmem:[#allocation2 + $0xb0] sm:$0xff] %v474
    %511 = vst [vmem:[#allocation2 + $0xb8] sm:$0xff] %v476
    %512 = vst [vmem:[#allocation2 + $0xc0] sm:$0xff] %v407
    %513 = vst [vmem:[#allocation2 + $0xc8] sm:$0xff] %v409
    %514 = vst [vmem:[#allocation2 + $0xd0] sm:$0xff] %v480
    %515 = vst [vmem:[#allocation2 + $0xd8] sm:$0xff] %v482
    %516 = vst [vmem:[#allocation2 + $0xe0] sm:$0xff] %v411
    %517 = vst [vmem:[#allocation2 + $0xe8] sm:$0xff] %v413
    %518 = vst [vmem:[#allocation2 + $0xf0] sm:$0xff] %v484
    %519 = vst [vmem:[#allocation2 + $0xf8] sm:$0xff] %v486
    %s520 = smul.u32 0, 4
    %s521 = smul.addr %s520, 8
    %s522 = scalar_lea.vmem [#allocation2], %s521
    %v523 = vld [vmem:[%s522] sm:$0xff]
    %v524 = vld [vmem:[%s522 + $0x8] sm:$0xff]
    %v525 = vld [vmem:[%s522 + $0x10] sm:$0xff]
    %v526 = vld [vmem:[%s522 + $0x18] sm:$0xff]
    %v527 = vld [vmem:[#allocation10] sm:$0xff]
    %v528 = vld [vmem:[#allocation10 + $0x8] sm:$0xff]
    %v529 = vld [vmem:[#allocation10 + $0x10] sm:$0xff]
    %v530 = vld [vmem:[#allocation10 + $0x18] sm:$0xff]
    %v531 = vld [vmem:[#allocation10 + $0x20] sm:$0xff]
    %v532 = vld [vmem:[#allocation10 + $0x28] sm:$0xff]
    %v533 = vld [vmem:[#allocation10 + $0x30] sm:$0xff]
    %v534 = vld [vmem:[#allocation10 + $0x38] sm:$0xff]
    %v535 = vld [vmem:[#allocation10 + $0x40] sm:$0xff]
    %v536 = vld [vmem:[#allocation10 + $0x48] sm:$0xff]
    %v537 = vld [vmem:[#allocation10 + $0x50] sm:$0xff]
    %v538 = vld [vmem:[#allocation10 + $0x58] sm:$0xff]
    %v539 = vld [vmem:[#allocation10 + $0x60] sm:$0xff]
    %v540 = vld [vmem:[#allocation10 + $0x68] sm:$0xff]
    %v541 = vld [vmem:[#allocation10 + $0x70] sm:$0xff]
    %v542 = vld [vmem:[#allocation10 + $0x78] sm:$0xff]
    %v543 = vld [vmem:[#allocation10 + $0x80] sm:$0xff]
    %v544 = vld [vmem:[#allocation10 + $0x88] sm:$0xff]
    %v545 = vld [vmem:[#allocation10 + $0x90] sm:$0xff]
    %v546 = vld [vmem:[#allocation10 + $0x98] sm:$0xff]
    %v547 = vld [vmem:[#allocation10 + $0xa0] sm:$0xff]
    %v548 = vld [vmem:[#allocation10 + $0xa8] sm:$0xff]
    %v549 = vld [vmem:[#allocation10 + $0xb0] sm:$0xff]
    %v550 = vld [vmem:[#allocation10 + $0xb8] sm:$0xff]
    %v551 = vld [vmem:[#allocation10 + $0xc0] sm:$0xff]
    %v552 = vld [vmem:[#allocation10 + $0xc8] sm:$0xff]
    %v553 = vld [vmem:[#allocation10 + $0xd0] sm:$0xff]
    %v554 = vld [vmem:[#allocation10 + $0xd8] sm:$0xff]
    %v555 = vld [vmem:[#allocation10 + $0xe0] sm:$0xff]
    %v556 = vld [vmem:[#allocation10 + $0xe8] sm:$0xff]
    %v557 = vld [vmem:[#allocation10 + $0xf0] sm:$0xff]
    %v558 = vld [vmem:[#allocation10 + $0xf8] sm:$0xff]
    %v591 = vunpack.c.l.b16 %v527
    %v592 = vunpack.c.h.b16 %v527
    %v593 = vunpack.c.l.b16 %v528
    %v594 = vunpack.c.h.b16 %v528
    %v595 = vunpack.c.l.b16 %v529
    %v596 = vunpack.c.h.b16 %v529
    %v597 = vunpack.c.l.b16 %v530
    %v598 = vunpack.c.h.b16 %v530
    %v599 = vunpack.c.l.b16 %v531
    %v600 = vunpack.c.h.b16 %v531
    %v601 = vunpack.c.l.b16 %v532
    %v602 = vunpack.c.h.b16 %v532
    %v603 = vunpack.c.l.b16 %v533
    %v604 = vunpack.c.h.b16 %v533
    %v605 = vunpack.c.l.b16 %v534
    %v606 = vunpack.c.h.b16 %v534
    %v607 = vunpack.c.l.b16 %v535
    %v608 = vunpack.c.h.b16 %v535
    %v609 = vunpack.c.l.b16 %v536
    %v610 = vunpack.c.h.b16 %v536
    %v611 = vunpack.c.l.b16 %v537
    %v612 = vunpack.c.h.b16 %v537
    %v613 = vunpack.c.l.b16 %v538
    %v614 = vunpack.c.h.b16 %v538
    %v615 = vunpack.c.l.b16 %v539
    %v616 = vunpack.c.h.b16 %v539
    %v617 = vunpack.c.l.b16 %v540
    %v618 = vunpack.c.h.b16 %v540
    %v619 = vunpack.c.l.b16 %v541
    %v620 = vunpack.c.h.b16 %v541
    %v621 = vunpack.c.l.b16 %v542
    %v622 = vunpack.c.h.b16 %v542
    %v623 = vunpack.c.l.b16 %v543
    %v624 = vunpack.c.h.b16 %v543
    %v625 = vunpack.c.l.b16 %v544
    %v626 = vunpack.c.h.b16 %v544
    %v627 = vunpack.c.l.b16 %v545
    %v628 = vunpack.c.h.b16 %v545
    %v629 = vunpack.c.l.b16 %v546
    %v630 = vunpack.c.h.b16 %v546
    %v631 = vunpack.c.l.b16 %v547
    %v632 = vunpack.c.h.b16 %v547
    %v633 = vunpack.c.l.b16 %v548
    %v634 = vunpack.c.h.b16 %v548
    %v635 = vunpack.c.l.b16 %v549
    %v636 = vunpack.c.h.b16 %v549
    %v637 = vunpack.c.l.b16 %v550
    %v638 = vunpack.c.h.b16 %v550
    %v639 = vunpack.c.l.b16 %v551
    %v640 = vunpack.c.h.b16 %v551
    %v641 = vunpack.c.l.b16 %v552
    %v642 = vunpack.c.h.b16 %v552
    %v643 = vunpack.c.l.b16 %v553
    %v644 = vunpack.c.h.b16 %v553
    %v645 = vunpack.c.l.b16 %v554
    %v646 = vunpack.c.h.b16 %v554
    %v647 = vunpack.c.l.b16 %v555
    %v648 = vunpack.c.h.b16 %v555
    %v649 = vunpack.c.l.b16 %v556
    %v650 = vunpack.c.h.b16 %v556
    %v651 = vunpack.c.l.b16 %v557
    %v652 = vunpack.c.h.b16 %v557
    %v653 = vunpack.c.l.b16 %v558
    %v654 = vunpack.c.h.b16 %v558
    %v655 = vpack.c.b16 %v595, %v591
    %v656 = vpack.c.b16 %v596, %v592
    %v657 = vpack.c.b16 %v597, %v593
    %v658 = vpack.c.b16 %v598, %v594
    %v659 = vpack.c.b16 %v603, %v599
    %v660 = vpack.c.b16 %v604, %v600
    %v661 = vpack.c.b16 %v605, %v601
    %v662 = vpack.c.b16 %v606, %v602
    %v663 = vpack.c.b16 %v611, %v607
    %v664 = vpack.c.b16 %v612, %v608
    %v665 = vpack.c.b16 %v613, %v609
    %v666 = vpack.c.b16 %v614, %v610
    %v667 = vpack.c.b16 %v619, %v615
    %v668 = vpack.c.b16 %v620, %v616
    %v669 = vpack.c.b16 %v621, %v617
    %v670 = vpack.c.b16 %v622, %v618
    %v671 = vpack.c.b16 %v627, %v623
    %v672 = vpack.c.b16 %v628, %v624
    %v673 = vpack.c.b16 %v629, %v625
    %v674 = vpack.c.b16 %v630, %v626
    %v675 = vpack.c.b16 %v635, %v631
    %v676 = vpack.c.b16 %v636, %v632
    %v677 = vpack.c.b16 %v637, %v633
    %v678 = vpack.c.b16 %v638, %v634
    %v679 = vpack.c.b16 %v643, %v639
    %v680 = vpack.c.b16 %v644, %v640
    %v681 = vpack.c.b16 %v645, %v641
    %v682 = vpack.c.b16 %v646, %v642
    %v683 = vpack.c.b16 %v651, %v647
    %v684 = vpack.c.b16 %v652, %v648
    %v685 = vpack.c.b16 %v653, %v649
    %v686 = vpack.c.b16 %v654, %v650
    %719 = vmatprep.subr.bf16.mxu0 %v656
    %720 = vmatpush1.bf16.msra.mxu0 %v655
    %721 = vmatprep.subr.bf16.mxu0 %v660
    %722 = vmatpush1.bf16.msra.mxu0 %v659
    %723 = vmatprep.subr.bf16.mxu0 %v664
    %724 = vmatpush1.bf16.msra.mxu0 %v663
    %725 = vmatprep.subr.bf16.mxu0 %v668
    %726 = vmatpush1.bf16.msra.mxu0 %v667
    %727 = vmatprep.subr.bf16.mxu0 %v672
    %728 = vmatpush1.bf16.msra.mxu0 %v671
    %729 = vmatprep.subr.bf16.mxu0 %v676
    %730 = vmatpush1.bf16.msra.mxu0 %v675
    %731 = vmatprep.subr.bf16.mxu0 %v680
    %732 = vmatpush1.bf16.msra.mxu0 %v679
    %733 = vmatprep.subr.bf16.mxu0 %v684
    %734 = vmatpush1.bf16.msra.mxu0 %v683
    %735 = vmatprep.subr.bf16.mxu0 0
    %736 = vmatpush1.bf16.msra.mxu0 0
    %737 = vmatprep.subr.bf16.mxu0 0
    %738 = vmatpush1.bf16.msra.mxu0 0
    %739 = vmatprep.subr.bf16.mxu0 0
    %740 = vmatpush1.bf16.msra.mxu0 0
    %741 = vmatprep.subr.bf16.mxu0 0
    %742 = vmatpush1.bf16.msra.mxu0 0
    %743 = vmatprep.subr.bf16.mxu0 0
    %744 = vmatpush1.bf16.msra.mxu0 0
    %745 = vmatprep.subr.bf16.mxu0 0
    %746 = vmatpush1.bf16.msra.mxu0 0
    %747 = vmatprep.subr.bf16.mxu0 0
    %748 = vmatpush1.bf16.msra.mxu0 0
    %749 = vmatprep.subr.bf16.mxu0 0
    %750 = vmatpush1.bf16.msra.mxu0 0
    %751 = vmatprep.mubr.bf16.mxu0 0
    %752 = vmatmul.mubr.bf16.gmra.mrb[0].mxu0 0
    %v753 = vpop.f32.mrb[0].mxu0
    %v754 = vadd.f32 0.0, %v753
    %v755 = vpop.f32.mrb[0].mxu0
    %v756 = vadd.f32 0.0, %v755
    %v757 = vpop.f32.mrb[0].mxu0
    %v758 = vpop.f32.mrb[0].mxu0
    %759 = vdwg.mxu0
    %760 = vmatprep.subr.bf16.mxu0 %v658
    %761 = vmatpush1.bf16.msra.mxu0 %v657
    %762 = vmatprep.subr.bf16.mxu0 %v662
    %763 = vmatpush1.bf16.msra.mxu0 %v661
    %764 = vmatprep.subr.bf16.mxu0 %v666
    %765 = vmatpush1.bf16.msra.mxu0 %v665
    %766 = vmatprep.subr.bf16.mxu0 %v670
    %767 = vmatpush1.bf16.msra.mxu0 %v669
    %768 = vmatprep.subr.bf16.mxu0 %v674
    %769 = vmatpush1.bf16.msra.mxu0 %v673
    %770 = vmatprep.subr.bf16.mxu0 %v678
    %771 = vmatpush1.bf16.msra.mxu0 %v677
    %772 = vmatprep.subr.bf16.mxu0 %v682
    %773 = vmatpush1.bf16.msra.mxu0 %v681
    %774 = vmatprep.subr.bf16.mxu0 %v686
    %775 = vmatpush1.bf16.msra.mxu0 %v685
    %776 = vmatprep.subr.bf16.mxu0 0
    %777 = vmatpush1.bf16.msra.mxu0 0
    %778 = vmatprep.subr.bf16.mxu0 0
    %779 = vmatpush1.bf16.msra.mxu0 0
    %780 = vmatprep.subr.bf16.mxu0 0
    %781 = vmatpush1.bf16.msra.mxu0 0
    %782 = vmatprep.subr.bf16.mxu0 0
    %783 = vmatpush1.bf16.msra.mxu0 0
    %784 = vmatprep.subr.bf16.mxu0 0
    %785 = vmatpush1.bf16.msra.mxu0 0
    %786 = vmatprep.subr.bf16.mxu0 0
    %787 = vmatpush1.bf16.msra.mxu0 0
    %788 = vmatprep.subr.bf16.mxu0 0
    %789 = vmatpush1.bf16.msra.mxu0 0
    %790 = vmatprep.subr.bf16.mxu0 0
    %791 = vmatpush1.bf16.msra.mxu0 0
    %792 = vmatprep.mubr.bf16.mxu0 0
    %793 = vmatmul.mubr.bf16.gmra.mrb[0].mxu0 0
    %v794 = vpop.f32.mrb[0].mxu0
    %v795 = vadd.f32 0.0, %v794
    %v796 = vpop.f32.mrb[0].mxu0
    %v797 = vadd.f32 0.0, %v796
    %v798 = vpop.f32.mrb[0].mxu0
    %v799 = vpop.f32.mrb[0].mxu0
    %800 = vdwg.mxu0
    %v801 = vadd.f32 %v523, %v754
    %v802 = vadd.f32 %v524, %v756
    %v803 = vadd.f32 %v525, %v795
    %v804 = vadd.f32 %v526, %v797
    %v805 = vxor.u32 %v801, 2147483648
    %v806 = vmul.f32 %v805, 1.442695
    %v807 = vpow.pop %v806
    %v808 = vadd.f32 %v807, 1.0
    %v809 = vrcp.pop %v808
    %v810 = vmul.f32 1.0, %v809
    %v811 = vxor.u32 %v802, 2147483648
    %v812 = vmul.f32 %v811, 1.442695
    %v813 = vpow.pop %v812
    %v814 = vadd.f32 %v813, 1.0
    %v815 = vrcp.pop %v814
    %v816 = vmul.f32 1.0, %v815
    %v817 = vtanh.pop %v803
    %v818 = vxor.u32 %v804, 2147483648
    %v819 = vmul.f32 %v818, 1.442695
    %v820 = vpow.pop %v819
    %v821 = vadd.f32 %v820, 1.0
    %v822 = vrcp.pop %v821
    %v823 = vmul.f32 1.0, %v822
    %v824 = vmul.f32 %v816, 0.0
    %v825 = vmul.f32 %v810, %v817
    %v826 = vadd.f32 %v824, %v825
    %v827 = vtanh.pop %v826
    %v828 = vmul.f32 %v823, %v827
    %829 = vst [vmem:[#allocation3] sm:$0xff] %v828
    %s830 = smul.u32 1, 4
    %s831 = smul.addr %s830, 8
    %s832 = scalar_lea.vmem [#allocation2], %s831
    %v833 = vld [vmem:[%s832] sm:$0xff]
    %v834 = vld [vmem:[%s832 + $0x8] sm:$0xff]
    %v835 = vld [vmem:[%s832 + $0x10] sm:$0xff]
    %v836 = vld [vmem:[%s832 + $0x18] sm:$0xff]
    %v837 = vpack.c.bf16 %v828, %v828
    %v838 = vld [vmem:[#allocation10] sm:$0xff]
    %v839 = vld [vmem:[#allocation10 + $0x8] sm:$0xff]
    %v840 = vld [vmem:[#allocation10 + $0x10] sm:$0xff]
    %v841 = vld [vmem:[#allocation10 + $0x18] sm:$0xff]
    %v842 = vld [vmem:[#allocation10 + $0x20] sm:$0xff]
    %v843 = vld [vmem:[#allocation10 + $0x28] sm:$0xff]
    %v844 = vld [vmem:[#allocation10 + $0x30] sm:$0xff]
    %v845 = vld [vmem:[#allocation10 + $0x38] sm:$0xff]
    %v846 = vld [vmem:[#allocation10 + $0x40] sm:$0xff]
    %v847 = vld [vmem:[#allocation10 + $0x48] sm:$0xff]
    %v848 = vld [vmem:[#allocation10 + $0x50] sm:$0xff]
    %v849 = vld [vmem:[#allocation10 + $0x58] sm:$0xff]
    %v850 = vld [vmem:[#allocation10 + $0x60] sm:$0xff]
    %v851 = vld [vmem:[#allocation10 + $0x68] sm:$0xff]
    %v852 = vld [vmem:[#allocation10 + $0x70] sm:$0xff]
    %v853 = vld [vmem:[#allocation10 + $0x78] sm:$0xff]
    %v854 = vld [vmem:[#allocation10 + $0x80] sm:$0xff]
    %v855 = vld [vmem:[#allocation10 + $0x88] sm:$0xff]
    %v856 = vld [vmem:[#allocation10 + $0x90] sm:$0xff]
    %v857 = vld [vmem:[#allocation10 + $0x98] sm:$0xff]
    %v858 = vld [vmem:[#allocation10 + $0xa0] sm:$0xff]
    %v859 = vld [vmem:[#allocation10 + $0xa8] sm:$0xff]
    %v860 = vld [vmem:[#allocation10 + $0xb0] sm:$0xff]
    %v861 = vld [vmem:[#allocation10 + $0xb8] sm:$0xff]
    %v862 = vld [vmem:[#allocation10 + $0xc0] sm:$0xff]
    %v863 = vld [vmem:[#allocation10 + $0xc8] sm:$0xff]
    %v864 = vld [vmem:[#allocation10 + $0xd0] sm:$0xff]
    %v865 = vld [vmem:[#allocation10 + $0xd8] sm:$0xff]
    %v866 = vld [vmem:[#allocation10 + $0xe0] sm:$0xff]
    %v867 = vld [vmem:[#allocation10 + $0xe8] sm:$0xff]
    %v868 = vld [vmem:[#allocation10 + $0xf0] sm:$0xff]
    %v869 = vld [vmem:[#allocation10 + $0xf8] sm:$0xff]
    %v902 = vunpack.c.l.b16 %v838
    %v903 = vunpack.c.h.b16 %v838
    %v904 = vunpack.c.l.b16 %v839
    %v905 = vunpack.c.h.b16 %v839
    %v906 = vunpack.c.l.b16 %v840
    %v907 = vunpack.c.h.b16 %v840
    %v908 = vunpack.c.l.b16 %v841
    %v909 = vunpack.c.h.b16 %v841
    %v910 = vunpack.c.l.b16 %v842
    %v911 = vunpack.c.h.b16 %v842
    %v912 = vunpack.c.l.b16 %v843
    %v913 = vunpack.c.h.b16 %v843
    %v914 = vunpack.c.l.b16 %v844
    %v915 = vunpack.c.h.b16 %v844
    %v916 = vunpack.c.l.b16 %v845
    %v917 = vunpack.c.h.b16 %v845
    %v918 = vunpack.c.l.b16 %v846
    %v919 = vunpack.c.h.b16 %v846
    %v920 = vunpack.c.l.b16 %v847
    %v921 = vunpack.c.h.b16 %v847
    %v922 = vunpack.c.l.b16 %v848
    %v923 = vunpack.c.h.b16 %v848
    %v924 = vunpack.c.l.b16 %v849
    %v925 = vunpack.c.h.b16 %v849
    %v926 = vunpack.c.l.b16 %v850
    %v927 = vunpack.c.h.b16 %v850
    %v928 = vunpack.c.l.b16 %v851
    %v929 = vunpack.c.h.b16 %v851
    %v930 = vunpack.c.l.b16 %v852
    %v931 = vunpack.c.h.b16 %v852
    %v932 = vunpack.c.l.b16 %v853
    %v933 = vunpack.c.h.b16 %v853
    %v934 = vunpack.c.l.b16 %v854
    %v935 = vunpack.c.h.b16 %v854
    %v936 = vunpack.c.l.b16 %v855
    %v937 = vunpack.c.h.b16 %v855
    %v938 = vunpack.c.l.b16 %v856
    %v939 = vunpack.c.h.b16 %v856
    %v940 = vunpack.c.l.b16 %v857
    %v941 = vunpack.c.h.b16 %v857
    %v942 = vunpack.c.l.b16 %v858
    %v943 = vunpack.c.h.b16 %v858
    %v944 = vunpack.c.l.b16 %v859
    %v945 = vunpack.c.h.b16 %v859
    %v946 = vunpack.c.l.b16 %v860
    %v947 = vunpack.c.h.b16 %v860
    %v948 = vunpack.c.l.b16 %v861
    %v949 = vunpack.c.h.b16 %v861
    %v950 = vunpack.c.l.b16 %v862
    %v951 = vunpack.c.h.b16 %v862
    %v952 = vunpack.c.l.b16 %v863
    %v953 = vunpack.c.h.b16 %v863
    %v954 = vunpack.c.l.b16 %v864
    %v955 = vunpack.c.h.b16 %v864
    %v956 = vunpack.c.l.b16 %v865
    %v957 = vunpack.c.h.b16 %v865
    %v958 = vunpack.c.l.b16 %v866
    %v959 = vunpack.c.h.b16 %v866
    %v960 = vunpack.c.l.b16 %v867
    %v961 = vunpack.c.h.b16 %v867
    %v962 = vunpack.c.l.b16 %v868
    %v963 = vunpack.c.h.b16 %v868
    %v964 = vunpack.c.l.b16 %v869
    %v965 = vunpack.c.h.b16 %v869
    %v966 = vpack.c.b16 %v906, %v902
    %v967 = vpack.c.b16 %v907, %v903
    %v968 = vpack.c.b16 %v908, %v904
    %v969 = vpack.c.b16 %v909, %v905
    %v970 = vpack.c.b16 %v914, %v910
    %v971 = vpack.c.b16 %v915, %v911
    %v972 = vpack.c.b16 %v916, %v912
    %v973 = vpack.c.b16 %v917, %v913
    %v974 = vpack.c.b16 %v922, %v918
    %v975 = vpack.c.b16 %v923, %v919
    %v976 = vpack.c.b16 %v924, %v920
    %v977 = vpack.c.b16 %v925, %v921
    %v978 = vpack.c.b16 %v930, %v926
    %v979 = vpack.c.b16 %v931, %v927
    %v980 = vpack.c.b16 %v932, %v928
    %v981 = vpack.c.b16 %v933, %v929
    %v982 = vpack.c.b16 %v938, %v934
    %v983 = vpack.c.b16 %v939, %v935
    %v984 = vpack.c.b16 %v940, %v936
    %v985 = vpack.c.b16 %v941, %v937
    %v986 = vpack.c.b16 %v946, %v942
    %v987 = vpack.c.b16 %v947, %v943
    %v988 = vpack.c.b16 %v948, %v944
    %v989 = vpack.c.b16 %v949, %v945
    %v990 = vpack.c.b16 %v954, %v950
    %v991 = vpack.c.b16 %v955, %v951
    %v992 = vpack.c.b16 %v956, %v952
    %v993 = vpack.c.b16 %v957, %v953
    %v994 = vpack.c.b16 %v962, %v958
    %v995 = vpack.c.b16 %v963, %v959
    %v996 = vpack.c.b16 %v964, %v960
    %v997 = vpack.c.b16 %v965, %v961
    %1030 = vmatprep.subr.bf16.mxu0 %v967
    %1031 = vmatpush1.bf16.msra.mxu0 %v966
    %1032 = vmatprep.subr.bf16.mxu0 %v971
    %1033 = vmatpush1.bf16.msra.mxu0 %v970
    %1034 = vmatprep.subr.bf16.mxu0 %v975
    %1035 = vmatpush1.bf16.msra.mxu0 %v974
    %1036 = vmatprep.subr.bf16.mxu0 %v979
    %1037 = vmatpush1.bf16.msra.mxu0 %v978
    %1038 = vmatprep.subr.bf16.mxu0 %v983
    %1039 = vmatpush1.bf16.msra.mxu0 %v982
    %1040 = vmatprep.subr.bf16.mxu0 %v987
    %1041 = vmatpush1.bf16.msra.mxu0 %v986
    %1042 = vmatprep.subr.bf16.mxu0 %v991
    %1043 = vmatpush1.bf16.msra.mxu0 %v990
    %1044 = vmatprep.subr.bf16.mxu0 %v995
    %1045 = vmatpush1.bf16.msra.mxu0 %v994
    %1046 = vmatprep.subr.bf16.mxu0 0
    %1047 = vmatpush1.bf16.msra.mxu0 0
    %1048 = vmatprep.subr.bf16.mxu0 0
    %1049 = vmatpush1.bf16.msra.mxu0 0
    %1050 = vmatprep.subr.bf16.mxu0 0
    %1051 = vmatpush1.bf16.msra.mxu0 0
    %1052 = vmatprep.subr.bf16.mxu0 0
    %1053 = vmatpush1.bf16.msra.mxu0 0
    %1054 = vmatprep.subr.bf16.mxu0 0
    %1055 = vmatpush1.bf16.msra.mxu0 0
    %1056 = vmatprep.subr.bf16.mxu0 0
    %1057 = vmatpush1.bf16.msra.mxu0 0
    %1058 = vmatprep.subr.bf16.mxu0 0
    %1059 = vmatpush1.bf16.msra.mxu0 0
    %1060 = vmatprep.subr.bf16.mxu0 0
    %1061 = vmatpush1.bf16.msra.mxu0 0
    %1062 = vmatprep.mubr.bf16.mxu0 0
    %1063 = vmatmul.mubr.bf16.gmra.mrb[0].mxu0 %v837
    %v1064 = vpop.f32.mrb[0].mxu0
    %v1065 = vadd.f32 0.0, %v1064
    %v1066 = vpop.f32.mrb[0].mxu0
    %v1067 = vadd.f32 0.0, %v1066
    %v1068 = vpop.f32.mrb[0].mxu0
    %v1069 = vpop.f32.mrb[0].mxu0
    %1070 = vdwg.mxu0
    %1071 = vmatprep.subr.bf16.mxu0 %v969
    %1072 = vmatpush1.bf16.msra.mxu0 %v968
    %1073 = vmatprep.subr.bf16.mxu0 %v973
    %1074 = vmatpush1.bf16.msra.mxu0 %v972
    %1075 = vmatprep.subr.bf16.mxu0 %v977
    %1076 = vmatpush1.bf16.msra.mxu0 %v976
    %1077 = vmatprep.subr.bf16.mxu0 %v981
    %1078 = vmatpush1.bf16.msra.mxu0 %v980
    %1079 = vmatprep.subr.bf16.mxu0 %v985
    %1080 = vmatpush1.bf16.msra.mxu0 %v984
    %1081 = vmatprep.subr.bf16.mxu0 %v989
    %1082 = vmatpush1.bf16.msra.mxu0 %v988
    %1083 = vmatprep.subr.bf16.mxu0 %v993
    %1084 = vmatpush1.bf16.msra.mxu0 %v992
    %1085 = vmatprep.subr.bf16.mxu0 %v997
    %1086 = vmatpush1.bf16.msra.mxu0 %v996
    %1087 = vmatprep.subr.bf16.mxu0 0
    %1088 = vmatpush1.bf16.msra.mxu0 0
    %1089 = vmatprep.subr.bf16.mxu0 0
    %1090 = vmatpush1.bf16.msra.mxu0 0
    %1091 = vmatprep.subr.bf16.mxu0 0
    %1092 = vmatpush1.bf16.msra.mxu0 0
    %1093 = vmatprep.subr.bf16.mxu0 0
    %1094 = vmatpush1.bf16.msra.mxu0 0
    %1095 = vmatprep.subr.bf16.mxu0 0
    %1096 = vmatpush1.bf16.msra.mxu0 0
    %1097 = vmatprep.subr.bf16.mxu0 0
    %1098 = vmatpush1.bf16.msra.mxu0 0
    %1099 = vmatprep.subr.bf16.mxu0 0
    %1100 = vmatpush1.bf16.msra.mxu0 0
    %1101 = vmatprep.subr.bf16.mxu0 0
    %1102 = vmatpush1.bf16.msra.mxu0 0
    %1103 = vmatprep.mubr.bf16.mxu0 0
    %1104 = vmatmul.mubr.bf16.gmra.mrb[0].mxu0 %v837
    %v1105 = vpop.f32.mrb[0].mxu0
    %v1106 = vadd.f32 0.0, %v1105
    %v1107 = vpop.f32.mrb[0].mxu0
    %v1108 = vadd.f32 0.0, %v1107
    %v1109 = vpop.f32.mrb[0].mxu0
    %v1110 = vpop.f32.mrb[0].mxu0
    %1111 = vdwg.mxu0
    %v1112 = vadd.f32 %v833, %v1065
    %v1113 = vadd.f32 %v834, %v1067
    %v1114 = vadd.f32 %v835, %v1106
    %v1115 = vadd.f32 %v836, %v1108
    %v1116 = vxor.u32 %v1112, 2147483648
    %v1117 = vmul.f32 %v1116, 1.442695
    %v1118 = vpow.pop %v1117
    %v1119 = vadd.f32 %v1118, 1.0
    %v1120 = vrcp.pop %v1119
    %v1121 = vmul.f32 1.0, %v1120
    %v1122 = vxor.u32 %v1113, 2147483648
    %v1123 = vmul.f32 %v1122, 1.442695
    %v1124 = vpow.pop %v1123
    %v1125 = vadd.f32 %v1124, 1.0
    %v1126 = vrcp.pop %v1125
    %v1127 = vmul.f32 1.0, %v1126
    %v1128 = vtanh.pop %v1114
    %v1129 = vxor.u32 %v1115, 2147483648
    %v1130 = vmul.f32 %v1129, 1.442695
    %v1131 = vpow.pop %v1130
    %v1132 = vadd.f32 %v1131, 1.0
    %v1133 = vrcp.pop %v1132
    %v1134 = vmul.f32 1.0, %v1133
    %v1135 = vmul.f32 %v1127, %v826
    %v1136 = vmul.f32 %v1121, %v1128
    %v1137 = vadd.f32 %v1135, %v1136
    %v1138 = vtanh.pop %v1137
    %v1139 = vmul.f32 %v1134, %v1138
    %s1140 = scalar_lea.vmem [#allocation3], 8
    %1141 = vst [vmem:[%s1140] sm:$0xff] %v1139
    %s1142 = smul.u32 2, 4
    %s1143 = smul.addr %s1142, 8
    %s1144 = scalar_lea.vmem [#allocation2], %s1143
    %v1145 = vld [vmem:[%s1144] sm:$0xff]
    %v1146 = vld [vmem:[%s1144 + $0x8] sm:$0xff]
    %v1147 = vld [vmem:[%s1144 + $0x10] sm:$0xff]
    %v1148 = vld [vmem:[%s1144 + $0x18] sm:$0xff]
    %v1149 = vpack.c.bf16 %v1139, %v1139
    %v1150 = vld [vmem:[#allocation10] sm:$0xff]
    %v1151 = vld [vmem:[#allocation10 + $0x8] sm:$0xff]
    %v1152 = vld [vmem:[#allocation10 + $0x10] sm:$0xff]
    %v1153 = vld [vmem:[#allocation10 + $0x18] sm:$0xff]
    %v1154 = vld [vmem:[#allocation10 + $0x20] sm:$0xff]
    %v1155 = vld [vmem:[#allocation10 + $0x28] sm:$0xff]
    %v1156 = vld [vmem:[#allocation10 + $0x30] sm:$0xff]
    %v1157 = vld [vmem:[#allocation10 + $0x38] sm:$0xff]
    %v1158 = vld [vmem:[#allocation10 + $0x40] sm:$0xff]
    %v1159 = vld [vmem:[#allocation10 + $0x48] sm:$0xff]
    %v1160 = vld [vmem:[#allocation10 + $0x50] sm:$0xff]
    %v1161 = vld [vmem:[#allocation10 + $0x58] sm:$0xff]
    %v1162 = vld [vmem:[#allocation10 + $0x60] sm:$0xff]
    %v1163 = vld [vmem:[#allocation10 + $0x68] sm:$0xff]
    %v1164 = vld [vmem:[#allocation10 + $0x70] sm:$0xff]
    %v1165 = vld [vmem:[#allocation10 + $0x78] sm:$0xff]
    %v1166 = vld [vmem:[#allocation10 + $0x80] sm:$0xff]
    %v1167 = vld [vmem:[#allocation10 + $0x88] sm:$0xff]
    %v1168 = vld [vmem:[#allocation10 + $0x90] sm:$0xff]
    %v1169 = vld [vmem:[#allocation10 + $0x98] sm:$0xff]
    %v1170 = vld [vmem:[#allocation10 + $0xa0] sm:$0xff]
    %v1171 = vld [vmem:[#allocation10 + $0xa8] sm:$0xff]
    %v1172 = vld [vmem:[#allocation10 + $0xb0] sm:$0xff]
    %v1173 = vld [vmem:[#allocation10 + $0xb8] sm:$0xff]
    %v1174 = vld [vmem:[#allocation10 + $0xc0] sm:$0xff]
    %v1175 = vld [vmem:[#allocation10 + $0xc8] sm:$0xff]
    %v1176 = vld [vmem:[#allocation10 + $0xd0] sm:$0xff]
    %v1177 = vld [vmem:[#allocation10 + $0xd8] sm:$0xff]
    %v1178 = vld [vmem:[#allocation10 + $0xe0] sm:$0xff]
    %v1179 = vld [vmem:[#allocation10 + $0xe8] sm:$0xff]
    %v1180 = vld [vmem:[#allocation10 + $0xf0] sm:$0xff]
    %v1181 = vld [vmem:[#allocation10 + $0xf8] sm:$0xff]
    %v1214 = vunpack.c.l.b16 %v1150
    %v1215 = vunpack.c.h.b16 %v1150
    %v1216 = vunpack.c.l.b16 %v1151
    %v1217 = vunpack.c.h.b16 %v1151
    %v1218 = vunpack.c.l.b16 %v1152
    %v1219 = vunpack.c.h.b16 %v1152
    %v1220 = vunpack.c.l.b16 %v1153
    %v1221 = vunpack.c.h.b16 %v1153
    %v1222 = vunpack.c.l.b16 %v1154
    %v1223 = vunpack.c.h.b16 %v1154
    %v1224 = vunpack.c.l.b16 %v1155
    %v1225 = vunpack.c.h.b16 %v1155
    %v1226 = vunpack.c.l.b16 %v1156
    %v1227 = vunpack.c.h.b16 %v1156
    %v1228 = vunpack.c.l.b16 %v1157
    %v1229 = vunpack.c.h.b16 %v1157
    %v1230 = vunpack.c.l.b16 %v1158
    %v1231 = vunpack.c.h.b16 %v1158
    %v1232 = vunpack.c.l.b16 %v1159
    %v1233 = vunpack.c.h.b16 %v1159
    %v1234 = vunpack.c.l.b16 %v1160
    %v1235 = vunpack.c.h.b16 %v1160
    %v1236 = vunpack.c.l.b16 %v1161
    %v1237 = vunpack.c.h.b16 %v1161
    %v1238 = vunpack.c.l.b16 %v1162
    %v1239 = vunpack.c.h.b16 %v1162
    %v1240 = vunpack.c.l.b16 %v1163
    %v1241 = vunpack.c.h.b16 %v1163
    %v1242 = vunpack.c.l.b16 %v1164
    %v1243 = vunpack.c.h.b16 %v1164
    %v1244 = vunpack.c.l.b16 %v1165
    %v1245 = vunpack.c.h.b16 %v1165
    %v1246 = vunpack.c.l.b16 %v1166
    %v1247 = vunpack.c.h.b16 %v1166
    %v1248 = vunpack.c.l.b16 %v1167
    %v1249 = vunpack.c.h.b16 %v1167
    %v1250 = vunpack.c.l.b16 %v1168
    %v1251 = vunpack.c.h.b16 %v1168
    %v1252 = vunpack.c.l.b16 %v1169
    %v1253 = vunpack.c.h.b16 %v1169
    %v1254 = vunpack.c.l.b16 %v1170
    %v1255 = vunpack.c.h.b16 %v1170
    %v1256 = vunpack.c.l.b16 %v1171
    %v1257 = vunpack.c.h.b16 %v1171
    %v1258 = vunpack.c.l.b16 %v1172
    %v1259 = vunpack.c.h.b16 %v1172
    %v1260 = vunpack.c.l.b16 %v1173
    %v1261 = vunpack.c.h.b16 %v1173
    %v1262 = vunpack.c.l.b16 %v1174
    %v1263 = vunpack.c.h.b16 %v1174
    %v1264 = vunpack.c.l.b16 %v1175
    %v1265 = vunpack.c.h.b16 %v1175
    %v1266 = vunpack.c.l.b16 %v1176
    %v1267 = vunpack.c.h.b16 %v1176
    %v1268 = vunpack.c.l.b16 %v1177
    %v1269 = vunpack.c.h.b16 %v1177
    %v1270 = vunpack.c.l.b16 %v1178
    %v1271 = vunpack.c.h.b16 %v1178
    %v1272 = vunpack.c.l.b16 %v1179
    %v1273 = vunpack.c.h.b16 %v1179
    %v1274 = vunpack.c.l.b16 %v1180
    %v1275 = vunpack.c.h.b16 %v1180
    %v1276 = vunpack.c.l.b16 %v1181
    %v1277 = vunpack.c.h.b16 %v1181
    %v1278 = vpack.c.b16 %v1218, %v1214
    %v1279 = vpack.c.b16 %v1219, %v1215
    %v1280 = vpack.c.b16 %v1220, %v1216
    %v1281 = vpack.c.b16 %v1221, %v1217
    %v1282 = vpack.c.b16 %v1226, %v1222
    %v1283 = vpack.c.b16 %v1227, %v1223
    %v1284 = vpack.c.b16 %v1228, %v1224
    %v1285 = vpack.c.b16 %v1229, %v1225
    %v1286 = vpack.c.b16 %v1234, %v1230
    %v1287 = vpack.c.b16 %v1235, %v1231
    %v1288 = vpack.c.b16 %v1236, %v1232
    %v1289 = vpack.c.b16 %v1237, %v1233
    %v1290 = vpack.c.b16 %v1242, %v1238
    %v1291 = vpack.c.b16 %v1243, %v1239
    %v1292 = vpack.c.b16 %v1244, %v1240
    %v1293 = vpack.c.b16 %v1245, %v1241
    %v1294 = vpack.c.b16 %v1250, %v1246
    %v1295 = vpack.c.b16 %v1251, %v1247
    %v1296 = vpack.c.b16 %v1252, %v1248
    %v1297 = vpack.c.b16 %v1253, %v1249
    %v1298 = vpack.c.b16 %v1258, %v1254
    %v1299 = vpack.c.b16 %v1259, %v1255
    %v1300 = vpack.c.b16 %v1260, %v1256
    %v1301 = vpack.c.b16 %v1261, %v1257
    %v1302 = vpack.c.b16 %v1266, %v1262
    %v1303 = vpack.c.b16 %v1267, %v1263
    %v1304 = vpack.c.b16 %v1268, %v1264
    %v1305 = vpack.c.b16 %v1269, %v1265
    %v1306 = vpack.c.b16 %v1274, %v1270
    %v1307 = vpack.c.b16 %v1275, %v1271
    %v1308 = vpack.c.b16 %v1276, %v1272
    %v1309 = vpack.c.b16 %v1277, %v1273
    %1342 = vmatprep.subr.bf16.mxu0 %v1279
    %1343 = vmatpush1.bf16.msra.mxu0 %v1278
    %1344 = vmatprep.subr.bf16.mxu0 %v1283
    %1345 = vmatpush1.bf16.msra.mxu0 %v1282
    %1346 = vmatprep.subr.bf16.mxu0 %v1287
    %1347 = vmatpush1.bf16.msra.mxu0 %v1286
    %1348 = vmatprep.subr.bf16.mxu0 %v1291
    %1349 = vmatpush1.bf16.msra.mxu0 %v1290
    %1350 = vmatprep.subr.bf16.mxu0 %v1295
    %1351 = vmatpush1.bf16.msra.mxu0 %v1294
    %1352 = vmatprep.subr.bf16.mxu0 %v1299
    %1353 = vmatpush1.bf16.msra.mxu0 %v1298
    %1354 = vmatprep.subr.bf16.mxu0 %v1303
    %1355 = vmatpush1.bf16.msra.mxu0 %v1302
    %1356 = vmatprep.subr.bf16.mxu0 %v1307
    %1357 = vmatpush1.bf16.msra.mxu0 %v1306
    %1358 = vmatprep.subr.bf16.mxu0 0
    %1359 = vmatpush1.bf16.msra.mxu0 0
    %1360 = vmatprep.subr.bf16.mxu0 0
    %1361 = vmatpush1.bf16.msra.mxu0 0
    %1362 = vmatprep.subr.bf16.mxu0 0
    %1363 = vmatpush1.bf16.msra.mxu0 0
    %1364 = vmatprep.subr.bf16.mxu0 0
    %1365 = vmatpush1.bf16.msra.mxu0 0
    %1366 = vmatprep.subr.bf16.mxu0 0
    %1367 = vmatpush1.bf16.msra.mxu0 0
    %1368 = vmatprep.subr.bf16.mxu0 0
    %1369 = vmatpush1.bf16.msra.mxu0 0
    %1370 = vmatprep.subr.bf16.mxu0 0
    %1371 = vmatpush1.bf16.msra.mxu0 0
    %1372 = vmatprep.subr.bf16.mxu0 0
    %1373 = vmatpush1.bf16.msra.mxu0 0
    %1374 = vmatprep.mubr.bf16.mxu0 0
    %1375 = vmatmul.mubr.bf16.gmra.mrb[0].mxu0 %v1149
    %v1376 = vpop.f32.mrb[0].mxu0
    %v1377 = vadd.f32 0.0, %v1376
    %v1378 = vpop.f32.mrb[0].mxu0
    %v1379 = vadd.f32 0.0, %v1378
    %v1380 = vpop.f32.mrb[0].mxu0
    %v1381 = vpop.f32.mrb[0].mxu0
    %1382 = vdwg.mxu0
    %1383 = vmatprep.subr.bf16.mxu0 %v1281
    %1384 = vmatpush1.bf16.msra.mxu0 %v1280
    %1385 = vmatprep.subr.bf16.mxu0 %v1285
    %1386 = vmatpush1.bf16.msra.mxu0 %v1284
    %1387 = vmatprep.subr.bf16.mxu0 %v1289
    %1388 = vmatpush1.bf16.msra.mxu0 %v1288
    %1389 = vmatprep.subr.bf16.mxu0 %v1293
    %1390 = vmatpush1.bf16.msra.mxu0 %v1292
    %1391 = vmatprep.subr.bf16.mxu0 %v1297
    %1392 = vmatpush1.bf16.msra.mxu0 %v1296
    %1393 = vmatprep.subr.bf16.mxu0 %v1301
    %1394 = vmatpush1.bf16.msra.mxu0 %v1300
    %1395 = vmatprep.subr.bf16.mxu0 %v1305
    %1396 = vmatpush1.bf16.msra.mxu0 %v1304
    %1397 = vmatprep.subr.bf16.mxu0 %v1309
    %1398 = vmatpush1.bf16.msra.mxu0 %v1308
    %1399 = vmatprep.subr.bf16.mxu0 0
    %1400 = vmatpush1.bf16.msra.mxu0 0
    %1401 = vmatprep.subr.bf16.mxu0 0
    %1402 = vmatpush1.bf16.msra.mxu0 0
    %1403 = vmatprep.subr.bf16.mxu0 0
    %1404 = vmatpush1.bf16.msra.mxu0 0
    %1405 = vmatprep.subr.bf16.mxu0 0
    %1406 = vmatpush1.bf16.msra.mxu0 0
    %1407 = vmatprep.subr.bf16.mxu0 0
    %1408 = vmatpush1.bf16.msra.mxu0 0
    %1409 = vmatprep.subr.bf16.mxu0 0
    %1410 = vmatpush1.bf16.msra.mxu0 0
    %1411 = vmatprep.subr.bf16.mxu0 0
    %1412 = vmatpush1.bf16.msra.mxu0 0
    %1413 = vmatprep.subr.bf16.mxu0 0
    %1414 = vmatpush1.bf16.msra.mxu0 0
    %1415 = vmatprep.mubr.bf16.mxu0 0
    %1416 = vmatmul.mubr.bf16.gmra.mrb[0].mxu0 %v1149
    %v1417 = vpop.f32.mrb[0].mxu0
    %v1418 = vadd.f32 0.0, %v1417
    %v1419 = vpop.f32.mrb[0].mxu0
    %v1420 = vadd.f32 0.0, %v1419
    %v1421 = vpop.f32.mrb[0].mxu0
    %v1422 = vpop.f32.mrb[0].mxu0
    %1423 = vdwg.mxu0
    %v1424 = vadd.f32 %v1145, %v1377
    %v1425 = vadd.f32 %v1146, %v1379
    %v1426 = vadd.f32 %v1147, %v1418
    %v1427 = vadd.f32 %v1148, %v1420
    %v1428 = vxor.u32 %v1424, 2147483648
    %v1429 = vmul.f32 %v1428, 1.442695
    %v1430 = vpow.pop %v1429
    %v1431 = vadd.f32 %v1430, 1.0
    %v1432 = vrcp.pop %v1431
    %v1433 = vmul.f32 1.0, %v1432
    %v1434 = vxor.u32 %v1425, 2147483648
    %v1435 = vmul.f32 %v1434, 1.442695
    %v1436 = vpow.pop %v1435
    %v1437 = vadd.f32 %v1436, 1.0
    %v1438 = vrcp.pop %v1437
    %v1439 = vmul.f32 1.0, %v1438
    %v1440 = vtanh.pop %v1426
    %v1441 = vxor.u32 %v1427, 2147483648
    %v1442 = vmul.f32 %v1441, 1.442695
    %v1443 = vpow.pop %v1442
    %v1444 = vadd.f32 %v1443, 1.0
    %v1445 = vrcp.pop %v1444
    %v1446 = vmul.f32 1.0, %v1445
    %v1447 = vmul.f32 %v1439, %v1137
    %v1448 = vmul.f32 %v1433, %v1440
    %v1449 = vadd.f32 %v1447, %v1448
    %v1450 = vtanh.pop %v1449
    %v1451 = vmul.f32 %v1446, %v1450
    %s1452 = scalar_lea.vmem [#allocation3], 16
    %1453 = vst [vmem:[%s1452] sm:$0xff] %v1451
    %s1454 = smul.u32 3, 4
    %s1455 = smul.addr %s1454, 8
    %s1456 = scalar_lea.vmem [#allocation2], %s1455
    %v1457 = vld [vmem:[%s1456] sm:$0xff]
    %v1458 = vld [vmem:[%s1456 + $0x8] sm:$0xff]
    %v1459 = vld [vmem:[%s1456 + $0x10] sm:$0xff]
    %v1460 = vld [vmem:[%s1456 + $0x18] sm:$0xff]
    %v1461 = vpack.c.bf16 %v1451, %v1451
    %v1462 = vld [vmem:[#allocation10] sm:$0xff]
    %v1463 = vld [vmem:[#allocation10 + $0x8] sm:$0xff]
    %v1464 = vld [vmem:[#allocation10 + $0x10] sm:$0xff]
    %v1465 = vld [vmem:[#allocation10 + $0x18] sm:$0xff]
    %v1466 = vld [vmem:[#allocation10 + $0x20] sm:$0xff]
    %v1467 = vld [vmem:[#allocation10 + $0x28] sm:$0xff]
    %v1468 = vld [vmem:[#allocation10 + $0x30] sm:$0xff]
    %v1469 = vld [vmem:[#allocation10 + $0x38] sm:$0xff]
    %v1470 = vld [vmem:[#allocation10 + $0x40] sm:$0xff]
    %v1471 = vld [vmem:[#allocation10 + $0x48] sm:$0xff]
    %v1472 = vld [vmem:[#allocation10 + $0x50] sm:$0xff]
    %v1473 = vld [vmem:[#allocation10 + $0x58] sm:$0xff]
    %v1474 = vld [vmem:[#allocation10 + $0x60] sm:$0xff]
    %v1475 = vld [vmem:[#allocation10 + $0x68] sm:$0xff]
    %v1476 = vld [vmem:[#allocation10 + $0x70] sm:$0xff]
    %v1477 = vld [vmem:[#allocation10 + $0x78] sm:$0xff]
    %v1478 = vld [vmem:[#allocation10 + $0x80] sm:$0xff]
    %v1479 = vld [vmem:[#allocation10 + $0x88] sm:$0xff]
    %v1480 = vld [vmem:[#allocation10 + $0x90] sm:$0xff]
    %v1481 = vld [vmem:[#allocation10 + $0x98] sm:$0xff]
    %v1482 = vld [vmem:[#allocation10 + $0xa0] sm:$0xff]
    %v1483 = vld [vmem:[#allocation10 + $0xa8] sm:$0xff]
    %v1484 = vld [vmem:[#allocation10 + $0xb0] sm:$0xff]
    %v1485 = vld [vmem:[#allocation10 + $0xb8] sm:$0xff]
    %v1486 = vld [vmem:[#allocation10 + $0xc0] sm:$0xff]
    %v1487 = vld [vmem:[#allocation10 + $0xc8] sm:$0xff]
    %v1488 = vld [vmem:[#allocation10 + $0xd0] sm:$0xff]
    %v1489 = vld [vmem:[#allocation10 + $0xd8] sm:$0xff]
    %v1490 = vld [vmem:[#allocation10 + $0xe0] sm:$0xff]
    %v1491 = vld [vmem:[#allocation10 + $0xe8] sm:$0xff]
    %v1492 = vld [vmem:[#allocation10 + $0xf0] sm:$0xff]
    %v1493 = vld [vmem:[#allocation10 + $0xf8] sm:$0xff]
    %v1526 = vunpack.c.l.b16 %v1462
    %v1527 = vunpack.c.h.b16 %v1462
    %v1528 = vunpack.c.l.b16 %v1463
    %v1529 = vunpack.c.h.b16 %v1463
    %v1530 = vunpack.c.l.b16 %v1464
    %v1531 = vunpack.c.h.b16 %v1464
    %v1532 = vunpack.c.l.b16 %v1465
    %v1533 = vunpack.c.h.b16 %v1465
    %v1534 = vunpack.c.l.b16 %v1466
    %v1535 = vunpack.c.h.b16 %v1466
    %v1536 = vunpack.c.l.b16 %v1467
    %v1537 = vunpack.c.h.b16 %v1467
    %v1538 = vunpack.c.l.b16 %v1468
    %v1539 = vunpack.c.h.b16 %v1468
    %v1540 = vunpack.c.l.b16 %v1469
    %v1541 = vunpack.c.h.b16 %v1469
    %v1542 = vunpack.c.l.b16 %v1470
    %v1543 = vunpack.c.h.b16 %v1470
    %v1544 = vunpack.c.l.b16 %v1471
    %v1545 = vunpack.c.h.b16 %v1471
    %v1546 = vunpack.c.l.b16 %v1472
    %v1547 = vunpack.c.h.b16 %v1472
    %v1548 = vunpack.c.l.b16 %v1473
    %v1549 = vunpack.c.h.b16 %v1473
    %v1550 = vunpack.c.l.b16 %v1474
    %v1551 = vunpack.c.h.b16 %v1474
    %v1552 = vunpack.c.l.b16 %v1475
    %v1553 = vunpack.c.h.b16 %v1475
    %v1554 = vunpack.c.l.b16 %v1476
    %v1555 = vunpack.c.h.b16 %v1476
    %v1556 = vunpack.c.l.b16 %v1477
    %v1557 = vunpack.c.h.b16 %v1477
    %v1558 = vunpack.c.l.b16 %v1478
    %v1559 = vunpack.c.h.b16 %v1478
    %v1560 = vunpack.c.l.b16 %v1479
    %v1561 = vunpack.c.h.b16 %v1479
    %v1562 = vunpack.c.l.b16 %v1480
    %v1563 = vunpack.c.h.b16 %v1480
    %v1564 = vunpack.c.l.b16 %v1481
    %v1565 = vunpack.c.h.b16 %v1481
    %v1566 = vunpack.c.l.b16 %v1482
    %v1567 = vunpack.c.h.b16 %v1482
    %v1568 = vunpack.c.l.b16 %v1483
    %v1569 = vunpack.c.h.b16 %v1483
    %v1570 = vunpack.c.l.b16 %v1484
    %v1571 = vunpack.c.h.b16 %v1484
    %v1572 = vunpack.c.l.b16 %v1485
    %v1573 = vunpack.c.h.b16 %v1485
    %v1574 = vunpack.c.l.b16 %v1486
    %v1575 = vunpack.c.h.b16 %v1486
    %v1576 = vunpack.c.l.b16 %v1487
    %v1577 = vunpack.c.h.b16 %v1487
    %v1578 = vunpack.c.l.b16 %v1488
    %v1579 = vunpack.c.h.b16 %v1488
    %v1580 = vunpack.c.l.b16 %v1489
    %v1581 = vunpack.c.h.b16 %v1489
    %v1582 = vunpack.c.l.b16 %v1490
    %v1583 = vunpack.c.h.b16 %v1490
    %v1584 = vunpack.c.l.b16 %v1491
    %v1585 = vunpack.c.h.b16 %v1491
    %v1586 = vunpack.c.l.b16 %v1492
    %v1587 = vunpack.c.h.b16 %v1492
    %v1588 = vunpack.c.l.b16 %v1493
    %v1589 = vunpack.c.h.b16 %v1493
    %v1590 = vpack.c.b16 %v1530, %v1526
    %v1591 = vpack.c.b16 %v1531, %v1527
    %v1592 = vpack.c.b16 %v1532, %v1528
    %v1593 = vpack.c.b16 %v1533, %v1529
    %v1594 = vpack.c.b16 %v1538, %v1534
    %v1595 = vpack.c.b16 %v1539, %v1535
    %v1596 = vpack.c.b16 %v1540, %v1536
    %v1597 = vpack.c.b16 %v1541, %v1537
    %v1598 = vpack.c.b16 %v1546, %v1542
    %v1599 = vpack.c.b16 %v1547, %v1543
    %v1600 = vpack.c.b16 %v1548, %v1544
    %v1601 = vpack.c.b16 %v1549, %v1545
    %v1602 = vpack.c.b16 %v1554, %v1550
    %v1603 = vpack.c.b16 %v1555, %v1551
    %v1604 = vpack.c.b16 %v1556, %v1552
    %v1605 = vpack.c.b16 %v1557, %v1553
    %v1606 = vpack.c.b16 %v1562, %v1558
    %v1607 = vpack.c.b16 %v1563, %v1559
    %v1608 = vpack.c.b16 %v1564, %v1560
    %v1609 = vpack.c.b16 %v1565, %v1561
    %v1610 = vpack.c.b16 %v1570, %v1566
    %v1611 = vpack.c.b16 %v1571, %v1567
    %v1612 = vpack.c.b16 %v1572, %v1568
    %v1613 = vpack.c.b16 %v1573, %v1569
    %v1614 = vpack.c.b16 %v1578, %v1574
    %v1615 = vpack.c.b16 %v1579, %v1575
    %v1616 = vpack.c.b16 %v1580, %v1576
    %v1617 = vpack.c.b16 %v1581, %v1577
    %v1618 = vpack.c.b16 %v1586, %v1582
    %v1619 = vpack.c.b16 %v1587, %v1583
    %v1620 = vpack.c.b16 %v1588, %v1584
    %v1621 = vpack.c.b16 %v1589, %v1585
    %1654 = vmatprep.subr.bf16.mxu0 %v1591
    %1655 = vmatpush1.bf16.msra.mxu0 %v1590
    %1656 = vmatprep.subr.bf16.mxu0 %v1595
    %1657 = vmatpush1.bf16.msra.mxu0 %v1594
    %1658 = vmatprep.subr.bf16.mxu0 %v1599
    %1659 = vmatpush1.bf16.msra.mxu0 %v1598
    %1660 = vmatprep.subr.bf16.mxu0 %v1603
    %1661 = vmatpush1.bf16.msra.mxu0 %v1602
    %1662 = vmatprep.subr.bf16.mxu0 %v1607
    %1663 = vmatpush1.bf16.msra.mxu0 %v1606
    %1664 = vmatprep.subr.bf16.mxu0 %v1611
    %1665 = vmatpush1.bf16.msra.mxu0 %v1610
    %1666 = vmatprep.subr.bf16.mxu0 %v1615
    %1667 = vmatpush1.bf16.msra.mxu0 %v1614
    %1668 = vmatprep.subr.bf16.mxu0 %v1619
    %1669 = vmatpush1.bf16.msra.mxu0 %v1618
    %1670 = vmatprep.subr.bf16.mxu0 0
    %1671 = vmatpush1.bf16.msra.mxu0 0
    %1672 = vmatprep.subr.bf16.mxu0 0
    %1673 = vmatpush1.bf16.msra.mxu0 0
    %1674 = vmatprep.subr.bf16.mxu0 0
    %1675 = vmatpush1.bf16.msra.mxu0 0
    %1676 = vmatprep.subr.bf16.mxu0 0
    %1677 = vmatpush1.bf16.msra.mxu0 0
    %1678 = vmatprep.subr.bf16.mxu0 0
    %1679 = vmatpush1.bf16.msra.mxu0 0
    %1680 = vmatprep.subr.bf16.mxu0 0
    %1681 = vmatpush1.bf16.msra.mxu0 0
    %1682 = vmatprep.subr.bf16.mxu0 0
    %1683 = vmatpush1.bf16.msra.mxu0 0
    %1684 = vmatprep.subr.bf16.mxu0 0
    %1685 = vmatpush1.bf16.msra.mxu0 0
    %1686 = vmatprep.mubr.bf16.mxu0 0
    %1687 = vmatmul.mubr.bf16.gmra.mrb[0].mxu0 %v1461
    %v1688 = vpop.f32.mrb[0].mxu0
    %v1689 = vadd.f32 0.0, %v1688
    %v1690 = vpop.f32.mrb[0].mxu0
    %v1691 = vadd.f32 0.0, %v1690
    %v1692 = vpop.f32.mrb[0].mxu0
    %v1693 = vpop.f32.mrb[0].mxu0
    %1694 = vdwg.mxu0
    %1695 = vmatprep.subr.bf16.mxu0 %v1593
    %1696 = vmatpush1.bf16.msra.mxu0 %v1592
    %1697 = vmatprep.subr.bf16.mxu0 %v1597
    %1698 = vmatpush1.bf16.msra.mxu0 %v1596
    %1699 = vmatprep.subr.bf16.mxu0 %v1601
    %1700 = vmatpush1.bf16.msra.mxu0 %v1600
    %1701 = vmatprep.subr.bf16.mxu0 %v1605
    %1702 = vmatpush1.bf16.msra.mxu0 %v1604
    %1703 = vmatprep.subr.bf16.mxu0 %v1609
    %1704 = vmatpush1.bf16.msra.mxu0 %v1608
    %1705 = vmatprep.subr.bf16.mxu0 %v1613
    %1706 = vmatpush1.bf16.msra.mxu0 %v1612
    %1707 = vmatprep.subr.bf16.mxu0 %v1617
    %1708 = vmatpush1.bf16.msra.mxu0 %v1616
    %1709 = vmatprep.subr.bf16.mxu0 %v1621
    %1710 = vmatpush1.bf16.msra.mxu0 %v1620
    %1711 = vmatprep.subr.bf16.mxu0 0
    %1712 = vmatpush1.bf16.msra.mxu0 0
    %1713 = vmatprep.subr.bf16.mxu0 0
    %1714 = vmatpush1.bf16.msra.mxu0 0
    %1715 = vmatprep.subr.bf16.mxu0 0
    %1716 = vmatpush1.bf16.msra.mxu0 0
    %1717 = vmatprep.subr.bf16.mxu0 0
    %1718 = vmatpush1.bf16.msra.mxu0 0
    %1719 = vmatprep.subr.bf16.mxu0 0
    %1720 = vmatpush1.bf16.msra.mxu0 0
    %1721 = vmatprep.subr.bf16.mxu0 0
    %1722 = vmatpush1.bf16.msra.mxu0 0
    %1723 = vmatprep.subr.bf16.mxu0 0
    %1724 = vmatpush1.bf16.msra.mxu0 0
    %1725 = vmatprep.subr.bf16.mxu0 0
    %1726 = vmatpush1.bf16.msra.mxu0 0
    %1727 = vmatprep.mubr.bf16.mxu0 0
    %1728 = vmatmul.mubr.bf16.gmra.mrb[0].mxu0 %v1461
    %v1729 = vpop.f32.mrb[0].mxu0
    %v1730 = vadd.f32 0.0, %v1729
    %v1731 = vpop.f32.mrb[0].mxu0
    %v1732 = vadd.f32 0.0, %v1731
    %v1733 = vpop.f32.mrb[0].mxu0
    %v1734 = vpop.f32.mrb[0].mxu0
    %1735 = vdwg.mxu0
    %v1736 = vadd.f32 %v1457, %v1689
    %v1737 = vadd.f32 %v1458, %v1691
    %v1738 = vadd.f32 %v1459, %v1730
    %v1739 = vadd.f32 %v1460, %v1732
    %v1740 = vxor.u32 %v1736, 2147483648
    %v1741 = vmul.f32 %v1740, 1.442695
    %v1742 = vpow.pop %v1741
    %v1743 = vadd.f32 %v1742, 1.0
    %v1744 = vrcp.pop %v1743
    %v1745 = vmul.f32 1.0, %v1744
    %v1746 = vxor.u32 %v1737, 2147483648
    %v1747 = vmul.f32 %v1746, 1.442695
    %v1748 = vpow.pop %v1747
    %v1749 = vadd.f32 %v1748, 1.0
    %v1750 = vrcp.pop %v1749
    %v1751 = vmul.f32 1.0, %v1750
    %v1752 = vtanh.pop %v1738
    %v1753 = vxor.u32 %v1739, 2147483648
    %v1754 = vmul.f32 %v1753, 1.442695
    %v1755 = vpow.pop %v1754
    %v1756 = vadd.f32 %v1755, 1.0
    %v1757 = vrcp.pop %v1756
    %v1758 = vmul.f32 1.0, %v1757
    %v1759 = vmul.f32 %v1751, %v1449
    %v1760 = vmul.f32 %v1745, %v1752
    %v1761 = vadd.f32 %v1759, %v1760
    %v1762 = vtanh.pop %v1761
    %v1763 = vmul.f32 %v1758, %v1762
    %s1764 = scalar_lea.vmem [#allocation3], 24
    %1765 = vst [vmem:[%s1764] sm:$0xff] %v1763
    %s1766 = smul.u32 4, 4
    %s1767 = smul.addr %s1766, 8
    %s1768 = scalar_lea.vmem [#allocation2], %s1767
    %v1769 = vld [vmem:[%s1768] sm:$0xff]
    %v1770 = vld [vmem:[%s1768 + $0x8] sm:$0xff]
    %v1771 = vld [vmem:[%s1768 + $0x10] sm:$0xff]
    %v1772 = vld [vmem:[%s1768 + $0x18] sm:$0xff]
    %v1773 = vpack.c.bf16 %v1763, %v1763
    %v1774 = vld [vmem:[#allocation10] sm:$0xff]
    %v1775 = vld [vmem:[#allocation10 + $0x8] sm:$0xff]
    %v1776 = vld [vmem:[#allocation10 + $0x10] sm:$0xff]
    %v1777 = vld [vmem:[#allocation10 + $0x18] sm:$0xff]
    %v1778 = vld [vmem:[#allocation10 + $0x20] sm:$0xff]
    %v1779 = vld [vmem:[#allocation10 + $0x28] sm:$0xff]
    %v1780 = vld [vmem:[#allocation10 + $0x30] sm:$0xff]
    %v1781 = vld [vmem:[#allocation10 + $0x38] sm:$0xff]
    %v1782 = vld [vmem:[#allocation10 + $0x40] sm:$0xff]
    %v1783 = vld [vmem:[#allocation10 + $0x48] sm:$0xff]
    %v1784 = vld [vmem:[#allocation10 + $0x50] sm:$0xff]
    %v1785 = vld [vmem:[#allocation10 + $0x58] sm:$0xff]
    %v1786 = vld [vmem:[#allocation10 + $0x60] sm:$0xff]
    %v1787 = vld [vmem:[#allocation10 + $0x68] sm:$0xff]
    %v1788 = vld [vmem:[#allocation10 + $0x70] sm:$0xff]
    %v1789 = vld [vmem:[#allocation10 + $0x78] sm:$0xff]
    %v1790 = vld [vmem:[#allocation10 + $0x80] sm:$0xff]
    %v1791 = vld [vmem:[#allocation10 + $0x88] sm:$0xff]
    %v1792 = vld [vmem:[#allocation10 + $0x90] sm:$0xff]
    %v1793 = vld [vmem:[#allocation10 + $0x98] sm:$0xff]
    %v1794 = vld [vmem:[#allocation10 + $0xa0] sm:$0xff]
    %v1795 = vld [vmem:[#allocation10 + $0xa8] sm:$0xff]
    %v1796 = vld [vmem:[#allocation10 + $0xb0] sm:$0xff]
    %v1797 = vld [vmem:[#allocation10 + $0xb8] sm:$0xff]
    %v1798 = vld [vmem:[#allocation10 + $0xc0] sm:$0xff]
    %v1799 = vld [vmem:[#allocation10 + $0xc8] sm:$0xff]
    %v1800 = vld [vmem:[#allocation10 + $0xd0] sm:$0xff]
    %v1801 = vld [vmem:[#allocation10 + $0xd8] sm:$0xff]
    %v1802 = vld [vmem:[#allocation10 + $0xe0] sm:$0xff]
    %v1803 = vld [vmem:[#allocation10 + $0xe8] sm:$0xff]
    %v1804 = vld [vmem:[#allocation10 + $0xf0] sm:$0xff]
    %v1805 = vld [vmem:[#allocation10 + $0xf8] sm:$0xff]
    %v1838 = vunpack.c.l.b16 %v1774
    %v1839 = vunpack.c.h.b16 %v1774
    %v1840 = vunpack.c.l.b16 %v1775
    %v1841 = vunpack.c.h.b16 %v1775
    %v1842 = vunpack.c.l.b16 %v1776
    %v1843 = vunpack.c.h.b16 %v1776
    %v1844 = vunpack.c.l.b16 %v1777
    %v1845 = vunpack.c.h.b16 %v1777
    %v1846 = vunpack.c.l.b16 %v1778
    %v1847 = vunpack.c.h.b16 %v1778
    %v1848 = vunpack.c.l.b16 %v1779
    %v1849 = vunpack.c.h.b16 %v1779
    %v1850 = vunpack.c.l.b16 %v1780
    %v1851 = vunpack.c.h.b16 %v1780
    %v1852 = vunpack.c.l.b16 %v1781
    %v1853 = vunpack.c.h.b16 %v1781
    %v1854 = vunpack.c.l.b16 %v1782
    %v1855 = vunpack.c.h.b16 %v1782
    %v1856 = vunpack.c.l.b16 %v1783
    %v1857 = vunpack.c.h.b16 %v1783
    %v1858 = vunpack.c.l.b16 %v1784
    %v1859 = vunpack.c.h.b16 %v1784
    %v1860 = vunpack.c.l.b16 %v1785
    %v1861 = vunpack.c.h.b16 %v1785
    %v1862 = vunpack.c.l.b16 %v1786
    %v1863 = vunpack.c.h.b16 %v1786
    %v1864 = vunpack.c.l.b16 %v1787
    %v1865 = vunpack.c.h.b16 %v1787
    %v1866 = vunpack.c.l.b16 %v1788
    %v1867 = vunpack.c.h.b16 %v1788
    %v1868 = vunpack.c.l.b16 %v1789
    %v1869 = vunpack.c.h.b16 %v1789
    %v1870 = vunpack.c.l.b16 %v1790
    %v1871 = vunpack.c.h.b16 %v1790
    %v1872 = vunpack.c.l.b16 %v1791
    %v1873 = vunpack.c.h.b16 %v1791
    %v1874 = vunpack.c.l.b16 %v1792
    %v1875 = vunpack.c.h.b16 %v1792
    %v1876 = vunpack.c.l.b16 %v1793
    %v1877 = vunpack.c.h.b16 %v1793
    %v1878 = vunpack.c.l.b16 %v1794
    %v1879 = vunpack.c.h.b16 %v1794
    %v1880 = vunpack.c.l.b16 %v1795
    %v1881 = vunpack.c.h.b16 %v1795
    %v1882 = vunpack.c.l.b16 %v1796
    %v1883 = vunpack.c.h.b16 %v1796
    %v1884 = vunpack.c.l.b16 %v1797
    %v1885 = vunpack.c.h.b16 %v1797
    %v1886 = vunpack.c.l.b16 %v1798
    %v1887 = vunpack.c.h.b16 %v1798
    %v1888 = vunpack.c.l.b16 %v1799
    %v1889 = vunpack.c.h.b16 %v1799
    %v1890 = vunpack.c.l.b16 %v1800
    %v1891 = vunpack.c.h.b16 %v1800
    %v1892 = vunpack.c.l.b16 %v1801
    %v1893 = vunpack.c.h.b16 %v1801
    %v1894 = vunpack.c.l.b16 %v1802
    %v1895 = vunpack.c.h.b16 %v1802
    %v1896 = vunpack.c.l.b16 %v1803
    %v1897 = vunpack.c.h.b16 %v1803
    %v1898 = vunpack.c.l.b16 %v1804
    %v1899 = vunpack.c.h.b16 %v1804
    %v1900 = vunpack.c.l.b16 %v1805
    %v1901 = vunpack.c.h.b16 %v1805
    %v1902 = vpack.c.b16 %v1842, %v1838
    %v1903 = vpack.c.b16 %v1843, %v1839
    %v1904 = vpack.c.b16 %v1844, %v1840
    %v1905 = vpack.c.b16 %v1845, %v1841
    %v1906 = vpack.c.b16 %v1850, %v1846
    %v1907 = vpack.c.b16 %v1851, %v1847
    %v1908 = vpack.c.b16 %v1852, %v1848
    %v1909 = vpack.c.b16 %v1853, %v1849
    %v1910 = vpack.c.b16 %v1858, %v1854
    %v1911 = vpack.c.b16 %v1859, %v1855
    %v1912 = vpack.c.b16 %v1860, %v1856
    %v1913 = vpack.c.b16 %v1861, %v1857
    %v1914 = vpack.c.b16 %v1866, %v1862
    %v1915 = vpack.c.b16 %v1867, %v1863
    %v1916 = vpack.c.b16 %v1868, %v1864
    %v1917 = vpack.c.b16 %v1869, %v1865
    %v1918 = vpack.c.b16 %v1874, %v1870
    %v1919 = vpack.c.b16 %v1875, %v1871
    %v1920 = vpack.c.b16 %v1876, %v1872
    %v1921 = vpack.c.b16 %v1877, %v1873
    %v1922 = vpack.c.b16 %v1882, %v1878
    %v1923 = vpack.c.b16 %v1883, %v1879
    %v1924 = vpack.c.b16 %v1884, %v1880
    %v1925 = vpack.c.b16 %v1885, %v1881
    %v1926 = vpack.c.b16 %v1890, %v1886
    %v1927 = vpack.c.b16 %v1891, %v1887
    %v1928 = vpack.c.b16 %v1892, %v1888
    %v1929 = vpack.c.b16 %v1893, %v1889
    %v1930 = vpack.c.b16 %v1898, %v1894
    %v1931 = vpack.c.b16 %v1899, %v1895
    %v1932 = vpack.c.b16 %v1900, %v1896
    %v1933 = vpack.c.b16 %v1901, %v1897
    %1966 = vmatprep.subr.bf16.mxu0 %v1903
    %1967 = vmatpush1.bf16.msra.mxu0 %v1902
    %1968 = vmatprep.subr.bf16.mxu0 %v1907
    %1969 = vmatpush1.bf16.msra.mxu0 %v1906
    %1970 = vmatprep.subr.bf16.mxu0 %v1911
    %1971 = vmatpush1.bf16.msra.mxu0 %v1910
    %1972 = vmatprep.subr.bf16.mxu0 %v1915
    %1973 = vmatpush1.bf16.msra.mxu0 %v1914
    %1974 = vmatprep.subr.bf16.mxu0 %v1919
    %1975 = vmatpush1.bf16.msra.mxu0 %v1918
    %1976 = vmatprep.subr.bf16.mxu0 %v1923
    %1977 = vmatpush1.bf16.msra.mxu0 %v1922
    %1978 = vmatprep.subr.bf16.mxu0 %v1927
    %1979 = vmatpush1.bf16.msra.mxu0 %v1926
    %1980 = vmatprep.subr.bf16.mxu0 %v1931
    %1981 = vmatpush1.bf16.msra.mxu0 %v1930
    %1982 = vmatprep.subr.bf16.mxu0 0
    %1983 = vmatpush1.bf16.msra.mxu0 0
    %1984 = vmatprep.subr.bf16.mxu0 0
    %1985 = vmatpush1.bf16.msra.mxu0 0
    %1986 = vmatprep.subr.bf16.mxu0 0
    %1987 = vmatpush1.bf16.msra.mxu0 0
    %1988 = vmatprep.subr.bf16.mxu0 0
    %1989 = vmatpush1.bf16.msra.mxu0 0
    %1990 = vmatprep.subr.bf16.mxu0 0
    %1991 = vmatpush1.bf16.msra.mxu0 0
    %1992 = vmatprep.subr.bf16.mxu0 0
    %1993 = vmatpush1.bf16.msra.mxu0 0
    %1994 = vmatprep.subr.bf16.mxu0 0
    %1995 = vmatpush1.bf16.msra.mxu0 0
    %1996 = vmatprep.subr.bf16.mxu0 0
    %1997 = vmatpush1.bf16.msra.mxu0 0
    %1998 = vmatprep.mubr.bf16.mxu0 0
    %1999 = vmatmul.mubr.bf16.gmra.mrb[0].mxu0 %v1773
    %v2000 = vpop.f32.mrb[0].mxu0
    %v2001 = vadd.f32 0.0, %v2000
    %v2002 = vpop.f32.mrb[0].mxu0
    %v2003 = vadd.f32 0.0, %v2002
    %v2004 = vpop.f32.mrb[0].mxu0
    %v2005 = vpop.f32.mrb[0].mxu0
    %2006 = vdwg.mxu0
    %2007 = vmatprep.subr.bf16.mxu0 %v1905
    %2008 = vmatpush1.bf16.msra.mxu0 %v1904
    %2009 = vmatprep.subr.bf16.mxu0 %v1909
    %2010 = vmatpush1.bf16.msra.mxu0 %v1908
    %2011 = vmatprep.subr.bf16.mxu0 %v1913
    %2012 = vmatpush1.bf16.msra.mxu0 %v1912
    %2013 = vmatprep.subr.bf16.mxu0 %v1917
    %2014 = vmatpush1.bf16.msra.mxu0 %v1916
    %2015 = vmatprep.subr.bf16.mxu0 %v1921
    %2016 = vmatpush1.bf16.msra.mxu0 %v1920
    %2017 = vmatprep.subr.bf16.mxu0 %v1925
    %2018 = vmatpush1.bf16.msra.mxu0 %v1924
    %2019 = vmatprep.subr.bf16.mxu0 %v1929
    %2020 = vmatpush1.bf16.msra.mxu0 %v1928
    %2021 = vmatprep.subr.bf16.mxu0 %v1933
    %2022 = vmatpush1.bf16.msra.mxu0 %v1932
    %2023 = vmatprep.subr.bf16.mxu0 0
    %2024 = vmatpush1.bf16.msra.mxu0 0
    %2025 = vmatprep.subr.bf16.mxu0 0
    %2026 = vmatpush1.bf16.msra.mxu0 0
    %2027 = vmatprep.subr.bf16.mxu0 0
    %2028 = vmatpush1.bf16.msra.mxu0 0
    %2029 = vmatprep.subr.bf16.mxu0 0
    %2030 = vmatpush1.bf16.msra.mxu0 0
    %2031 = vmatprep.subr.bf16.mxu0 0
    %2032 = vmatpush1.bf16.msra.mxu0 0
    %2033 = vmatprep.subr.bf16.mxu0 0
    %2034 = vmatpush1.bf16.msra.mxu0 0
    %2035 = vmatprep.subr.bf16.mxu0 0
    %2036 = vmatpush1.bf16.msra.mxu0 0
    %2037 = vmatprep.subr.bf16.mxu0 0
    %2038 = vmatpush1.bf16.msra.mxu0 0
    %2039 = vmatprep.mubr.bf16.mxu0 0
    %2040 = vmatmul.mubr.bf16.gmra.mrb[0].mxu0 %v1773
    %v2041 = vpop.f32.mrb[0].mxu0
    %v2042 = vadd.f32 0.0, %v2041
    %v2043 = vpop.f32.mrb[0].mxu0
    %v2044 = vadd.f32 0.0, %v2043
    %v2045 = vpop.f32.mrb[0].mxu0
    %v2046 = vpop.f32.mrb[0].mxu0
    %2047 = vdwg.mxu0
    %v2048 = vadd.f32 %v1769, %v2001
    %v2049 = vadd.f32 %v1770, %v2003
    %v2050 = vadd.f32 %v1771, %v2042
    %v2051 = vadd.f32 %v1772, %v2044
    %v2052 = vxor.u32 %v2048, 2147483648
    %v2053 = vmul.f32 %v2052, 1.442695
    %v2054 = vpow.pop %v2053
    %v2055 = vadd.f32 %v2054, 1.0
    %v2056 = vrcp.pop %v2055
    %v2057 = vmul.f32 1.0, %v2056
    %v2058 = vxor.u32 %v2049, 2147483648
    %v2059 = vmul.f32 %v2058, 1.442695
    %v2060 = vpow.pop %v2059
    %v2061 = vadd.f32 %v2060, 1.0
    %v2062 = vrcp.pop %v2061
    %v2063 = vmul.f32 1.0, %v2062
    %v2064 = vtanh.pop %v2050
    %v2065 = vxor.u32 %v2051, 2147483648
    %v2066 = vmul.f32 %v2065, 1.442695
    %v2067 = vpow.pop %v2066
    %v2068 = vadd.f32 %v2067, 1.0
    %v2069 = vrcp.pop %v2068
    %v2070 = vmul.f32 1.0, %v2069
    %v2071 = vmul.f32 %v2063, %v1761
    %v2072 = vmul.f32 %v2057, %v2064
    %v2073 = vadd.f32 %v2071, %v2072
    %v2074 = vtanh.pop %v2073
    %v2075 = vmul.f32 %v2070, %v2074
    %s2076 = scalar_lea.vmem [#allocation3], 32
    %2077 = vst [vmem:[%s2076] sm:$0xff] %v2075
    %s2078 = smul.u32 5, 4
    %s2079 = smul.addr %s2078, 8
    %s2080 = scalar_lea.vmem [#allocation2], %s2079
    %v2081 = vld [vmem:[%s2080] sm:$0xff]
    %v2082 = vld [vmem:[%s2080 + $0x8] sm:$0xff]
    %v2083 = vld [vmem:[%s2080 + $0x10] sm:$0xff]
    %v2084 = vld [vmem:[%s2080 + $0x18] sm:$0xff]
    %v2085 = vpack.c.bf16 %v2075, %v2075
    %v2086 = vld [vmem:[#allocation10] sm:$0xff]
    %v2087 = vld [vmem:[#allocation10 + $0x8] sm:$0xff]
    %v2088 = vld [vmem:[#allocation10 + $0x10] sm:$0xff]
    %v2089 = vld [vmem:[#allocation10 + $0x18] sm:$0xff]
    %v2090 = vld [vmem:[#allocation10 + $0x20] sm:$0xff]
    %v2091 = vld [vmem:[#allocation10 + $0x28] sm:$0xff]
    %v2092 = vld [vmem:[#allocation10 + $0x30] sm:$0xff]
    %v2093 = vld [vmem:[#allocation10 + $0x38] sm:$0xff]
    %v2094 = vld [vmem:[#allocation10 + $0x40] sm:$0xff]
    %v2095 = vld [vmem:[#allocation10 + $0x48] sm:$0xff]
    %v2096 = vld [vmem:[#allocation10 + $0x50] sm:$0xff]
    %v2097 = vld [vmem:[#allocation10 + $0x58] sm:$0xff]
    %v2098 = vld [vmem:[#allocation10 + $0x60] sm:$0xff]
    %v2099 = vld [vmem:[#allocation10 + $0x68] sm:$0xff]
    %v2100 = vld [vmem:[#allocation10 + $0x70] sm:$0xff]
    %v2101 = vld [vmem:[#allocation10 + $0x78] sm:$0xff]
    %v2102 = vld [vmem:[#allocation10 + $0x80] sm:$0xff]
    %v2103 = vld [vmem:[#allocation10 + $0x88] sm:$0xff]
    %v2104 = vld [vmem:[#allocation10 + $0x90] sm:$0xff]
    %v2105 = vld [vmem:[#allocation10 + $0x98] sm:$0xff]
    %v2106 = vld [vmem:[#allocation10 + $0xa0] sm:$0xff]
    %v2107 = vld [vmem:[#allocation10 + $0xa8] sm:$0xff]
    %v2108 = vld [vmem:[#allocation10 + $0xb0] sm:$0xff]
    %v2109 = vld [vmem:[#allocation10 + $0xb8] sm:$0xff]
    %v2110 = vld [vmem:[#allocation10 + $0xc0] sm:$0xff]
    %v2111 = vld [vmem:[#allocation10 + $0xc8] sm:$0xff]
    %v2112 = vld [vmem:[#allocation10 + $0xd0] sm:$0xff]
    %v2113 = vld [vmem:[#allocation10 + $0xd8] sm:$0xff]
    %v2114 = vld [vmem:[#allocation10 + $0xe0] sm:$0xff]
    %v2115 = vld [vmem:[#allocation10 + $0xe8] sm:$0xff]
    %v2116 = vld [vmem:[#allocation10 + $0xf0] sm:$0xff]
    %v2117 = vld [vmem:[#allocation10 + $0xf8] sm:$0xff]
    %v2150 = vunpack.c.l.b16 %v2086
    %v2151 = vunpack.c.h.b16 %v2086
    %v2152 = vunpack.c.l.b16 %v2087
    %v2153 = vunpack.c.h.b16 %v2087
    %v2154 = vunpack.c.l.b16 %v2088
    %v2155 = vunpack.c.h.b16 %v2088
    %v2156 = vunpack.c.l.b16 %v2089
    %v2157 = vunpack.c.h.b16 %v2089
    %v2158 = vunpack.c.l.b16 %v2090
    %v2159 = vunpack.c.h.b16 %v2090
    %v2160 = vunpack.c.l.b16 %v2091
    %v2161 = vunpack.c.h.b16 %v2091
    %v2162 = vunpack.c.l.b16 %v2092
    %v2163 = vunpack.c.h.b16 %v2092
    %v2164 = vunpack.c.l.b16 %v2093
    %v2165 = vunpack.c.h.b16 %v2093
    %v2166 = vunpack.c.l.b16 %v2094
    %v2167 = vunpack.c.h.b16 %v2094
    %v2168 = vunpack.c.l.b16 %v2095
    %v2169 = vunpack.c.h.b16 %v2095
    %v2170 = vunpack.c.l.b16 %v2096
    %v2171 = vunpack.c.h.b16 %v2096
    %v2172 = vunpack.c.l.b16 %v2097
    %v2173 = vunpack.c.h.b16 %v2097
    %v2174 = vunpack.c.l.b16 %v2098
    %v2175 = vunpack.c.h.b16 %v2098
    %v2176 = vunpack.c.l.b16 %v2099
    %v2177 = vunpack.c.h.b16 %v2099
    %v2178 = vunpack.c.l.b16 %v2100
    %v2179 = vunpack.c.h.b16 %v2100
    %v2180 = vunpack.c.l.b16 %v2101
    %v2181 = vunpack.c.h.b16 %v2101
    %v2182 = vunpack.c.l.b16 %v2102
    %v2183 = vunpack.c.h.b16 %v2102
    %v2184 = vunpack.c.l.b16 %v2103
    %v2185 = vunpack.c.h.b16 %v2103
    %v2186 = vunpack.c.l.b16 %v2104
    %v2187 = vunpack.c.h.b16 %v2104
    %v2188 = vunpack.c.l.b16 %v2105
    %v2189 = vunpack.c.h.b16 %v2105
    %v2190 = vunpack.c.l.b16 %v2106
    %v2191 = vunpack.c.h.b16 %v2106
    %v2192 = vunpack.c.l.b16 %v2107
    %v2193 = vunpack.c.h.b16 %v2107
    %v2194 = vunpack.c.l.b16 %v2108
    %v2195 = vunpack.c.h.b16 %v2108
    %v2196 = vunpack.c.l.b16 %v2109
    %v2197 = vunpack.c.h.b16 %v2109
    %v2198 = vunpack.c.l.b16 %v2110
    %v2199 = vunpack.c.h.b16 %v2110
    %v2200 = vunpack.c.l.b16 %v2111
    %v2201 = vunpack.c.h.b16 %v2111
    %v2202 = vunpack.c.l.b16 %v2112
    %v2203 = vunpack.c.h.b16 %v2112
    %v2204 = vunpack.c.l.b16 %v2113
    %v2205 = vunpack.c.h.b16 %v2113
    %v2206 = vunpack.c.l.b16 %v2114
    %v2207 = vunpack.c.h.b16 %v2114
    %v2208 = vunpack.c.l.b16 %v2115
    %v2209 = vunpack.c.h.b16 %v2115
    %v2210 = vunpack.c.l.b16 %v2116
    %v2211 = vunpack.c.h.b16 %v2116
    %v2212 = vunpack.c.l.b16 %v2117
    %v2213 = vunpack.c.h.b16 %v2117
    %v2214 = vpack.c.b16 %v2154, %v2150
    %v2215 = vpack.c.b16 %v2155, %v2151
    %v2216 = vpack.c.b16 %v2156, %v2152
    %v2217 = vpack.c.b16 %v2157, %v2153
    %v2218 = vpack.c.b16 %v2162, %v2158
    %v2219 = vpack.c.b16 %v2163, %v2159
    %v2220 = vpack.c.b16 %v2164, %v2160
    %v2221 = vpack.c.b16 %v2165, %v2161
    %v2222 = vpack.c.b16 %v2170, %v2166
    %v2223 = vpack.c.b16 %v2171, %v2167
    %v2224 = vpack.c.b16 %v2172, %v2168
    %v2225 = vpack.c.b16 %v2173, %v2169
    %v2226 = vpack.c.b16 %v2178, %v2174
    %v2227 = vpack.c.b16 %v2179, %v2175
    %v2228 = vpack.c.b16 %v2180, %v2176
    %v2229 = vpack.c.b16 %v2181, %v2177
    %v2230 = vpack.c.b16 %v2186, %v2182
    %v2231 = vpack.c.b16 %v2187, %v2183
    %v2232 = vpack.c.b16 %v2188, %v2184
    %v2233 = vpack.c.b16 %v2189, %v2185
    %v2234 = vpack.c.b16 %v2194, %v2190
    %v2235 = vpack.c.b16 %v2195, %v2191
    %v2236 = vpack.c.b16 %v2196, %v2192
    %v2237 = vpack.c.b16 %v2197, %v2193
    %v2238 = vpack.c.b16 %v2202, %v2198
    %v2239 = vpack.c.b16 %v2203, %v2199
    %v2240 = vpack.c.b16 %v2204, %v2200
    %v2241 = vpack.c.b16 %v2205, %v2201
    %v2242 = vpack.c.b16 %v2210, %v2206
    %v2243 = vpack.c.b16 %v2211, %v2207
    %v2244 = vpack.c.b16 %v2212, %v2208
    %v2245 = vpack.c.b16 %v2213, %v2209
    %2278 = vmatprep.subr.bf16.mxu0 %v2215
    %2279 = vmatpush1.bf16.msra.mxu0 %v2214
    %2280 = vmatprep.subr.bf16.mxu0 %v2219
    %2281 = vmatpush1.bf16.msra.mxu0 %v2218
    %2282 = vmatprep.subr.bf16.mxu0 %v2223
    %2283 = vmatpush1.bf16.msra.mxu0 %v2222
    %2284 = vmatprep.subr.bf16.mxu0 %v2227
    %2285 = vmatpush1.bf16.msra.mxu0 %v2226
    %2286 = vmatprep.subr.bf16.mxu0 %v2231
    %2287 = vmatpush1.bf16.msra.mxu0 %v2230
    %2288 = vmatprep.subr.bf16.mxu0 %v2235
    %2289 = vmatpush1.bf16.msra.mxu0 %v2234
    %2290 = vmatprep.subr.bf16.mxu0 %v2239
    %2291 = vmatpush1.bf16.msra.mxu0 %v2238
    %2292 = vmatprep.subr.bf16.mxu0 %v2243
    %2293 = vmatpush1.bf16.msra.mxu0 %v2242
    %2294 = vmatprep.subr.bf16.mxu0 0
    %2295 = vmatpush1.bf16.msra.mxu0 0
    %2296 = vmatprep.subr.bf16.mxu0 0
    %2297 = vmatpush1.bf16.msra.mxu0 0
    %2298 = vmatprep.subr.bf16.mxu0 0
    %2299 = vmatpush1.bf16.msra.mxu0 0
    %2300 = vmatprep.subr.bf16.mxu0 0
    %2301 = vmatpush1.bf16.msra.mxu0 0
    %2302 = vmatprep.subr.bf16.mxu0 0
    %2303 = vmatpush1.bf16.msra.mxu0 0
    %2304 = vmatprep.subr.bf16.mxu0 0
    %2305 = vmatpush1.bf16.msra.mxu0 0
    %2306 = vmatprep.subr.bf16.mxu0 0
    %2307 = vmatpush1.bf16.msra.mxu0 0
    %2308 = vmatprep.subr.bf16.mxu0 0
    %2309 = vmatpush1.bf16.msra.mxu0 0
    %2310 = vmatprep.mubr.bf16.mxu0 0
    %2311 = vmatmul.mubr.bf16.gmra.mrb[0].mxu0 %v2085
    %v2312 = vpop.f32.mrb[0].mxu0
    %v2313 = vadd.f32 0.0, %v2312
    %v2314 = vpop.f32.mrb[0].mxu0
    %v2315 = vadd.f32 0.0, %v2314
    %v2316 = vpop.f32.mrb[0].mxu0
    %v2317 = vpop.f32.mrb[0].mxu0
    %2318 = vdwg.mxu0
    %2319 = vmatprep.subr.bf16.mxu0 %v2217
    %2320 = vmatpush1.bf16.msra.mxu0 %v2216
    %2321 = vmatprep.subr.bf16.mxu0 %v2221
    %2322 = vmatpush1.bf16.msra.mxu0 %v2220
    %2323 = vmatprep.subr.bf16.mxu0 %v2225
    %2324 = vmatpush1.bf16.msra.mxu0 %v2224
    %2325 = vmatprep.subr.bf16.mxu0 %v2229
    %2326 = vmatpush1.bf16.msra.mxu0 %v2228
    %2327 = vmatprep.subr.bf16.mxu0 %v2233
    %2328 = vmatpush1.bf16.msra.mxu0 %v2232
    %2329 = vmatprep.subr.bf16.mxu0 %v2237
    %2330 = vmatpush1.bf16.msra.mxu0 %v2236
    %2331 = vmatprep.subr.bf16.mxu0 %v2241
    %2332 = vmatpush1.bf16.msra.mxu0 %v2240
    %2333 = vmatprep.subr.bf16.mxu0 %v2245
    %2334 = vmatpush1.bf16.msra.mxu0 %v2244
    %2335 = vmatprep.subr.bf16.mxu0 0
    %2336 = vmatpush1.bf16.msra.mxu0 0
    %2337 = vmatprep.subr.bf16.mxu0 0
    %2338 = vmatpush1.bf16.msra.mxu0 0
    %2339 = vmatprep.subr.bf16.mxu0 0
    %2340 = vmatpush1.bf16.msra.mxu0 0
    %2341 = vmatprep.subr.bf16.mxu0 0
    %2342 = vmatpush1.bf16.msra.mxu0 0
    %2343 = vmatprep.subr.bf16.mxu0 0
    %2344 = vmatpush1.bf16.msra.mxu0 0
    %2345 = vmatprep.subr.bf16.mxu0 0
    %2346 = vmatpush1.bf16.msra.mxu0 0
    %2347 = vmatprep.subr.bf16.mxu0 0
    %2348 = vmatpush1.bf16.msra.mxu0 0
    %2349 = vmatprep.subr.bf16.mxu0 0
    %2350 = vmatpush1.bf16.msra.mxu0 0
    %2351 = vmatprep.mubr.bf16.mxu0 0
    %2352 = vmatmul.mubr.bf16.gmra.mrb[0].mxu0 %v2085
    %v2353 = vpop.f32.mrb[0].mxu0
    %v2354 = vadd.f32 0.0, %v2353
    %v2355 = vpop.f32.mrb[0].mxu0
    %v2356 = vadd.f32 0.0, %v2355
    %v2357 = vpop.f32.mrb[0].mxu0
    %v2358 = vpop.f32.mrb[0].mxu0
    %2359 = vdwg.mxu0
    %v2360 = vadd.f32 %v2081, %v2313
    %v2361 = vadd.f32 %v2082, %v2315
    %v2362 = vadd.f32 %v2083, %v2354
    %v2363 = vadd.f32 %v2084, %v2356
    %v2364 = vxor.u32 %v2360, 2147483648
    %v2365 = vmul.f32 %v2364, 1.442695
    %v2366 = vpow.pop %v2365
    %v2367 = vadd.f32 %v2366, 1.0
    %v2368 = vrcp.pop %v2367
    %v2369 = vmul.f32 1.0, %v2368
    %v2370 = vxor.u32 %v2361, 2147483648
    %v2371 = vmul.f32 %v2370, 1.442695
    %v2372 = vpow.pop %v2371
    %v2373 = vadd.f32 %v2372, 1.0
    %v2374 = vrcp.pop %v2373
    %v2375 = vmul.f32 1.0, %v2374
    %v2376 = vtanh.pop %v2362
    %v2377 = vxor.u32 %v2363, 2147483648
    %v2378 = vmul.f32 %v2377, 1.442695
    %v2379 = vpow.pop %v2378
    %v2380 = vadd.f32 %v2379, 1.0
    %v2381 = vrcp.pop %v2380
    %v2382 = vmul.f32 1.0, %v2381
    %v2383 = vmul.f32 %v2375, %v2073
    %v2384 = vmul.f32 %v2369, %v2376
    %v2385 = vadd.f32 %v2383, %v2384
    %v2386 = vtanh.pop %v2385
    %v2387 = vmul.f32 %v2382, %v2386
    %s2388 = scalar_lea.vmem [#allocation3], 40
    %2389 = vst [vmem:[%s2388] sm:$0xff] %v2387
    %s2390 = smul.u32 6, 4
    %s2391 = smul.addr %s2390, 8
    %s2392 = scalar_lea.vmem [#allocation2], %s2391
    %v2393 = vld [vmem:[%s2392] sm:$0xff]
    %v2394 = vld [vmem:[%s2392 + $0x8] sm:$0xff]
    %v2395 = vld [vmem:[%s2392 + $0x10] sm:$0xff]
    %v2396 = vld [vmem:[%s2392 + $0x18] sm:$0xff]
    %v2397 = vpack.c.bf16 %v2387, %v2387
    %v2398 = vld [vmem:[#allocation10] sm:$0xff]
    %v2399 = vld [vmem:[#allocation10 + $0x8] sm:$0xff]
    %v2400 = vld [vmem:[#allocation10 + $0x10] sm:$0xff]
    %v2401 = vld [vmem:[#allocation10 + $0x18] sm:$0xff]
    %v2402 = vld [vmem:[#allocation10 + $0x20] sm:$0xff]
    %v2403 = vld [vmem:[#allocation10 + $0x28] sm:$0xff]
    %v2404 = vld [vmem:[#allocation10 + $0x30] sm:$0xff]
    %v2405 = vld [vmem:[#allocation10 + $0x38] sm:$0xff]
    %v2406 = vld [vmem:[#allocation10 + $0x40] sm:$0xff]
    %v2407 = vld [vmem:[#allocation10 + $0x48] sm:$0xff]
    %v2408 = vld [vmem:[#allocation10 + $0x50] sm:$0xff]
    %v2409 = vld [vmem:[#allocation10 + $0x58] sm:$0xff]
    %v2410 = vld [vmem:[#allocation10 + $0x60] sm:$0xff]
    %v2411 = vld [vmem:[#allocation10 + $0x68] sm:$0xff]
    %v2412 = vld [vmem:[#allocation10 + $0x70] sm:$0xff]
    %v2413 = vld [vmem:[#allocation10 + $0x78] sm:$0xff]
    %v2414 = vld [vmem:[#allocation10 + $0x80] sm:$0xff]
    %v2415 = vld [vmem:[#allocation10 + $0x88] sm:$0xff]
    %v2416 = vld [vmem:[#allocation10 + $0x90] sm:$0xff]
    %v2417 = vld [vmem:[#allocation10 + $0x98] sm:$0xff]
    %v2418 = vld [vmem:[#allocation10 + $0xa0] sm:$0xff]
    %v2419 = vld [vmem:[#allocation10 + $0xa8] sm:$0xff]
    %v2420 = vld [vmem:[#allocation10 + $0xb0] sm:$0xff]
    %v2421 = vld [vmem:[#allocation10 + $0xb8] sm:$0xff]
    %v2422 = vld [vmem:[#allocation10 + $0xc0] sm:$0xff]
    %v2423 = vld [vmem:[#allocation10 + $0xc8] sm:$0xff]
    %v2424 = vld [vmem:[#allocation10 + $0xd0] sm:$0xff]
    %v2425 = vld [vmem:[#allocation10 + $0xd8] sm:$0xff]
    %v2426 = vld [vmem:[#allocation10 + $0xe0] sm:$0xff]
    %v2427 = vld [vmem:[#allocation10 + $0xe8] sm:$0xff]
    %v2428 = vld [vmem:[#allocation10 + $0xf0] sm:$0xff]
    %v2429 = vld [vmem:[#allocation10 + $0xf8] sm:$0xff]
    %v2462 = vunpack.c.l.b16 %v2398
    %v2463 = vunpack.c.h.b16 %v2398
    %v2464 = vunpack.c.l.b16 %v2399
    %v2465 = vunpack.c.h.b16 %v2399
    %v2466 = vunpack.c.l.b16 %v2400
    %v2467 = vunpack.c.h.b16 %v2400
    %v2468 = vunpack.c.l.b16 %v2401
    %v2469 = vunpack.c.h.b16 %v2401
    %v2470 = vunpack.c.l.b16 %v2402
    %v2471 = vunpack.c.h.b16 %v2402
    %v2472 = vunpack.c.l.b16 %v2403
    %v2473 = vunpack.c.h.b16 %v2403
    %v2474 = vunpack.c.l.b16 %v2404
    %v2475 = vunpack.c.h.b16 %v2404
    %v2476 = vunpack.c.l.b16 %v2405
    %v2477 = vunpack.c.h.b16 %v2405
    %v2478 = vunpack.c.l.b16 %v2406
    %v2479 = vunpack.c.h.b16 %v2406
    %v2480 = vunpack.c.l.b16 %v2407
    %v2481 = vunpack.c.h.b16 %v2407
    %v2482 = vunpack.c.l.b16 %v2408
    %v2483 = vunpack.c.h.b16 %v2408
    %v2484 = vunpack.c.l.b16 %v2409
    %v2485 = vunpack.c.h.b16 %v2409
    %v2486 = vunpack.c.l.b16 %v2410
    %v2487 = vunpack.c.h.b16 %v2410
    %v2488 = vunpack.c.l.b16 %v2411
    %v2489 = vunpack.c.h.b16 %v2411
    %v2490 = vunpack.c.l.b16 %v2412
    %v2491 = vunpack.c.h.b16 %v2412
    %v2492 = vunpack.c.l.b16 %v2413
    %v2493 = vunpack.c.h.b16 %v2413
    %v2494 = vunpack.c.l.b16 %v2414
    %v2495 = vunpack.c.h.b16 %v2414
    %v2496 = vunpack.c.l.b16 %v2415
    %v2497 = vunpack.c.h.b16 %v2415
    %v2498 = vunpack.c.l.b16 %v2416
    %v2499 = vunpack.c.h.b16 %v2416
    %v2500 = vunpack.c.l.b16 %v2417
    %v2501 = vunpack.c.h.b16 %v2417
    %v2502 = vunpack.c.l.b16 %v2418
    %v2503 = vunpack.c.h.b16 %v2418
    %v2504 = vunpack.c.l.b16 %v2419
    %v2505 = vunpack.c.h.b16 %v2419
    %v2506 = vunpack.c.l.b16 %v2420
    %v2507 = vunpack.c.h.b16 %v2420
    %v2508 = vunpack.c.l.b16 %v2421
    %v2509 = vunpack.c.h.b16 %v2421
    %v2510 = vunpack.c.l.b16 %v2422
    %v2511 = vunpack.c.h.b16 %v2422
    %v2512 = vunpack.c.l.b16 %v2423
    %v2513 = vunpack.c.h.b16 %v2423
    %v2514 = vunpack.c.l.b16 %v2424
    %v2515 = vunpack.c.h.b16 %v2424
    %v2516 = vunpack.c.l.b16 %v2425
    %v2517 = vunpack.c.h.b16 %v2425
    %v2518 = vunpack.c.l.b16 %v2426
    %v2519 = vunpack.c.h.b16 %v2426
    %v2520 = vunpack.c.l.b16 %v2427
    %v2521 = vunpack.c.h.b16 %v2427
    %v2522 = vunpack.c.l.b16 %v2428
    %v2523 = vunpack.c.h.b16 %v2428
    %v2524 = vunpack.c.l.b16 %v2429
    %v2525 = vunpack.c.h.b16 %v2429
    %v2526 = vpack.c.b16 %v2466, %v2462
    %v2527 = vpack.c.b16 %v2467, %v2463
    %v2528 = vpack.c.b16 %v2468, %v2464
    %v2529 = vpack.c.b16 %v2469, %v2465
    %v2530 = vpack.c.b16 %v2474, %v2470
    %v2531 = vpack.c.b16 %v2475, %v2471
    %v2532 = vpack.c.b16 %v2476, %v2472
    %v2533 = vpack.c.b16 %v2477, %v2473
    %v2534 = vpack.c.b16 %v2482, %v2478
    %v2535 = vpack.c.b16 %v2483, %v2479
    %v2536 = vpack.c.b16 %v2484, %v2480
    %v2537 = vpack.c.b16 %v2485, %v2481
    %v2538 = vpack.c.b16 %v2490, %v2486
    %v2539 = vpack.c.b16 %v2491, %v2487
    %v2540 = vpack.c.b16 %v2492, %v2488
    %v2541 = vpack.c.b16 %v2493, %v2489
    %v2542 = vpack.c.b16 %v2498, %v2494
    %v2543 = vpack.c.b16 %v2499, %v2495
    %v2544 = vpack.c.b16 %v2500, %v2496
    %v2545 = vpack.c.b16 %v2501, %v2497
    %v2546 = vpack.c.b16 %v2506, %v2502
    %v2547 = vpack.c.b16 %v2507, %v2503
    %v2548 = vpack.c.b16 %v2508, %v2504
    %v2549 = vpack.c.b16 %v2509, %v2505
    %v2550 = vpack.c.b16 %v2514, %v2510
    %v2551 = vpack.c.b16 %v2515, %v2511
    %v2552 = vpack.c.b16 %v2516, %v2512
    %v2553 = vpack.c.b16 %v2517, %v2513
    %v2554 = vpack.c.b16 %v2522, %v2518
    %v2555 = vpack.c.b16 %v2523, %v2519
    %v2556 = vpack.c.b16 %v2524, %v2520
    %v2557 = vpack.c.b16 %v2525, %v2521
    %2590 = vmatprep.subr.bf16.mxu0 %v2527
    %2591 = vmatpush1.bf16.msra.mxu0 %v2526
    %2592 = vmatprep.subr.bf16.mxu0 %v2531
    %2593 = vmatpush1.bf16.msra.mxu0 %v2530
    %2594 = vmatprep.subr.bf16.mxu0 %v2535
    %2595 = vmatpush1.bf16.msra.mxu0 %v2534
    %2596 = vmatprep.subr.bf16.mxu0 %v2539
    %2597 = vmatpush1.bf16.msra.mxu0 %v2538
    %2598 = vmatprep.subr.bf16.mxu0 %v2543
    %2599 = vmatpush1.bf16.msra.mxu0 %v2542
    %2600 = vmatprep.subr.bf16.mxu0 %v2547
    %2601 = vmatpush1.bf16.msra.mxu0 %v2546
    %2602 = vmatprep.subr.bf16.mxu0 %v2551
    %2603 = vmatpush1.bf16.msra.mxu0 %v2550
    %2604 = vmatprep.subr.bf16.mxu0 %v2555
    %2605 = vmatpush1.bf16.msra.mxu0 %v2554
    %2606 = vmatprep.subr.bf16.mxu0 0
    %2607 = vmatpush1.bf16.msra.mxu0 0
    %2608 = vmatprep.subr.bf16.mxu0 0
    %2609 = vmatpush1.bf16.msra.mxu0 0
    %2610 = vmatprep.subr.bf16.mxu0 0
    %2611 = vmatpush1.bf16.msra.mxu0 0
    %2612 = vmatprep.subr.bf16.mxu0 0
    %2613 = vmatpush1.bf16.msra.mxu0 0
    %2614 = vmatprep.subr.bf16.mxu0 0
    %2615 = vmatpush1.bf16.msra.mxu0 0
    %2616 = vmatprep.subr.bf16.mxu0 0
    %2617 = vmatpush1.bf16.msra.mxu0 0
    %2618 = vmatprep.subr.bf16.mxu0 0
    %2619 = vmatpush1.bf16.msra.mxu0 0
    %2620 = vmatprep.subr.bf16.mxu0 0
    %2621 = vmatpush1.bf16.msra.mxu0 0
    %2622 = vmatprep.mubr.bf16.mxu0 0
    %2623 = vmatmul.mubr.bf16.gmra.mrb[0].mxu0 %v2397
    %v2624 = vpop.f32.mrb[0].mxu0
    %v2625 = vadd.f32 0.0, %v2624
    %v2626 = vpop.f32.mrb[0].mxu0
    %v2627 = vadd.f32 0.0, %v2626
    %v2628 = vpop.f32.mrb[0].mxu0
    %v2629 = vpop.f32.mrb[0].mxu0
    %2630 = vdwg.mxu0
    %2631 = vmatprep.subr.bf16.mxu0 %v2529
    %2632 = vmatpush1.bf16.msra.mxu0 %v2528
    %2633 = vmatprep.subr.bf16.mxu0 %v2533
    %2634 = vmatpush1.bf16.msra.mxu0 %v2532
    %2635 = vmatprep.subr.bf16.mxu0 %v2537
    %2636 = vmatpush1.bf16.msra.mxu0 %v2536
    %2637 = vmatprep.subr.bf16.mxu0 %v2541
    %2638 = vmatpush1.bf16.msra.mxu0 %v2540
    %2639 = vmatprep.subr.bf16.mxu0 %v2545
    %2640 = vmatpush1.bf16.msra.mxu0 %v2544
    %2641 = vmatprep.subr.bf16.mxu0 %v2549
    %2642 = vmatpush1.bf16.msra.mxu0 %v2548
    %2643 = vmatprep.subr.bf16.mxu0 %v2553
    %2644 = vmatpush1.bf16.msra.mxu0 %v2552
    %2645 = vmatprep.subr.bf16.mxu0 %v2557
    %2646 = vmatpush1.bf16.msra.mxu0 %v2556
    %2647 = vmatprep.subr.bf16.mxu0 0
    %2648 = vmatpush1.bf16.msra.mxu0 0
    %2649 = vmatprep.subr.bf16.mxu0 0
    %2650 = vmatpush1.bf16.msra.mxu0 0
    %2651 = vmatprep.subr.bf16.mxu0 0
    %2652 = vmatpush1.bf16.msra.mxu0 0
    %2653 = vmatprep.subr.bf16.mxu0 0
    %2654 = vmatpush1.bf16.msra.mxu0 0
    %2655 = vmatprep.subr.bf16.mxu0 0
    %2656 = vmatpush1.bf16.msra.mxu0 0
    %2657 = vmatprep.subr.bf16.mxu0 0
    %2658 = vmatpush1.bf16.msra.mxu0 0
    %2659 = vmatprep.subr.bf16.mxu0 0
    %2660 = vmatpush1.bf16.msra.mxu0 0
    %2661 = vmatprep.subr.bf16.mxu0 0
    %2662 = vmatpush1.bf16.msra.mxu0 0
    %2663 = vmatprep.mubr.bf16.mxu0 0
    %2664 = vmatmul.mubr.bf16.gmra.mrb[0].mxu0 %v2397
    %v2665 = vpop.f32.mrb[0].mxu0
    %v2666 = vadd.f32 0.0, %v2665
    %v2667 = vpop.f32.mrb[0].mxu0
    %v2668 = vadd.f32 0.0, %v2667
    %v2669 = vpop.f32.mrb[0].mxu0
    %v2670 = vpop.f32.mrb[0].mxu0
    %2671 = vdwg.mxu0
    %v2672 = vadd.f32 %v2393, %v2625
    %v2673 = vadd.f32 %v2394, %v2627
    %v2674 = vadd.f32 %v2395, %v2666
    %v2675 = vadd.f32 %v2396, %v2668
    %v2676 = vxor.u32 %v2672, 2147483648
    %v2677 = vmul.f32 %v2676, 1.442695
    %v2678 = vpow.pop %v2677
    %v2679 = vadd.f32 %v2678, 1.0
    %v2680 = vrcp.pop %v2679
    %v2681 = vmul.f32 1.0, %v2680
    %v2682 = vxor.u32 %v2673, 2147483648
    %v2683 = vmul.f32 %v2682, 1.442695
    %v2684 = vpow.pop %v2683
    %v2685 = vadd.f32 %v2684, 1.0
    %v2686 = vrcp.pop %v2685
    %v2687 = vmul.f32 1.0, %v2686
    %v2688 = vtanh.pop %v2674
    %v2689 = vxor.u32 %v2675, 2147483648
    %v2690 = vmul.f32 %v2689, 1.442695
    %v2691 = vpow.pop %v2690
    %v2692 = vadd.f32 %v2691, 1.0
    %v2693 = vrcp.pop %v2692
    %v2694 = vmul.f32 1.0, %v2693
    %v2695 = vmul.f32 %v2687, %v2385
    %v2696 = vmul.f32 %v2681, %v2688
    %v2697 = vadd.f32 %v2695, %v2696
    %v2698 = vtanh.pop %v2697
    %v2699 = vmul.f32 %v2694, %v2698
    %s2700 = scalar_lea.vmem [#allocation3], 48
    %2701 = vst [vmem:[%s2700] sm:$0xff] %v2699
    %s2702 = smul.u32 7, 4
    %s2703 = smul.addr %s2702, 8
    %s2704 = scalar_lea.vmem [#allocation2], %s2703
    %v2705 = vld [vmem:[%s2704] sm:$0xff]
    %v2706 = vld [vmem:[%s2704 + $0x8] sm:$0xff]
    %v2707 = vld [vmem:[%s2704 + $0x10] sm:$0xff]
    %v2708 = vld [vmem:[%s2704 + $0x18] sm:$0xff]
    %v2709 = vpack.c.bf16 %v2699, %v2699
    %v2710 = vld [vmem:[#allocation10] sm:$0xff]
    %v2711 = vld [vmem:[#allocation10 + $0x8] sm:$0xff]
    %v2712 = vld [vmem:[#allocation10 + $0x10] sm:$0xff]
    %v2713 = vld [vmem:[#allocation10 + $0x18] sm:$0xff]
    %v2714 = vld [vmem:[#allocation10 + $0x20] sm:$0xff]
    %v2715 = vld [vmem:[#allocation10 + $0x28] sm:$0xff]
    %v2716 = vld [vmem:[#allocation10 + $0x30] sm:$0xff]
    %v2717 = vld [vmem:[#allocation10 + $0x38] sm:$0xff]
    %v2718 = vld [vmem:[#allocation10 + $0x40] sm:$0xff]
    %v2719 = vld [vmem:[#allocation10 + $0x48] sm:$0xff]
    %v2720 = vld [vmem:[#allocation10 + $0x50] sm:$0xff]
    %v2721 = vld [vmem:[#allocation10 + $0x58] sm:$0xff]
    %v2722 = vld [vmem:[#allocation10 + $0x60] sm:$0xff]
    %v2723 = vld [vmem:[#allocation10 + $0x68] sm:$0xff]
    %v2724 = vld [vmem:[#allocation10 + $0x70] sm:$0xff]
    %v2725 = vld [vmem:[#allocation10 + $0x78] sm:$0xff]
    %v2726 = vld [vmem:[#allocation10 + $0x80] sm:$0xff]
    %v2727 = vld [vmem:[#allocation10 + $0x88] sm:$0xff]
    %v2728 = vld [vmem:[#allocation10 + $0x90] sm:$0xff]
    %v2729 = vld [vmem:[#allocation10 + $0x98] sm:$0xff]
    %v2730 = vld [vmem:[#allocation10 + $0xa0] sm:$0xff]
    %v2731 = vld [vmem:[#allocation10 + $0xa8] sm:$0xff]
    %v2732 = vld [vmem:[#allocation10 + $0xb0] sm:$0xff]
    %v2733 = vld [vmem:[#allocation10 + $0xb8] sm:$0xff]
    %v2734 = vld [vmem:[#allocation10 + $0xc0] sm:$0xff]
    %v2735 = vld [vmem:[#allocation10 + $0xc8] sm:$0xff]
    %v2736 = vld [vmem:[#allocation10 + $0xd0] sm:$0xff]
    %v2737 = vld [vmem:[#allocation10 + $0xd8] sm:$0xff]
    %v2738 = vld [vmem:[#allocation10 + $0xe0] sm:$0xff]
    %v2739 = vld [vmem:[#allocation10 + $0xe8] sm:$0xff]
    %v2740 = vld [vmem:[#allocation10 + $0xf0] sm:$0xff]
    %v2741 = vld [vmem:[#allocation10 + $0xf8] sm:$0xff]
    %v2774 = vunpack.c.l.b16 %v2710
    %v2775 = vunpack.c.h.b16 %v2710
    %v2776 = vunpack.c.l.b16 %v2711
    %v2777 = vunpack.c.h.b16 %v2711
    %v2778 = vunpack.c.l.b16 %v2712
    %v2779 = vunpack.c.h.b16 %v2712
    %v2780 = vunpack.c.l.b16 %v2713
    %v2781 = vunpack.c.h.b16 %v2713
    %v2782 = vunpack.c.l.b16 %v2714
    %v2783 = vunpack.c.h.b16 %v2714
    %v2784 = vunpack.c.l.b16 %v2715
    %v2785 = vunpack.c.h.b16 %v2715
    %v2786 = vunpack.c.l.b16 %v2716
    %v2787 = vunpack.c.h.b16 %v2716
    %v2788 = vunpack.c.l.b16 %v2717
    %v2789 = vunpack.c.h.b16 %v2717
    %v2790 = vunpack.c.l.b16 %v2718
    %v2791 = vunpack.c.h.b16 %v2718
    %v2792 = vunpack.c.l.b16 %v2719
    %v2793 = vunpack.c.h.b16 %v2719
    %v2794 = vunpack.c.l.b16 %v2720
    %v2795 = vunpack.c.h.b16 %v2720
    %v2796 = vunpack.c.l.b16 %v2721
    %v2797 = vunpack.c.h.b16 %v2721
    %v2798 = vunpack.c.l.b16 %v2722
    %v2799 = vunpack.c.h.b16 %v2722
    %v2800 = vunpack.c.l.b16 %v2723
    %v2801 = vunpack.c.h.b16 %v2723
    %v2802 = vunpack.c.l.b16 %v2724
    %v2803 = vunpack.c.h.b16 %v2724
    %v2804 = vunpack.c.l.b16 %v2725
    %v2805 = vunpack.c.h.b16 %v2725
    %v2806 = vunpack.c.l.b16 %v2726
    %v2807 = vunpack.c.h.b16 %v2726
    %v2808 = vunpack.c.l.b16 %v2727
    %v2809 = vunpack.c.h.b16 %v2727
    %v2810 = vunpack.c.l.b16 %v2728
    %v2811 = vunpack.c.h.b16 %v2728
    %v2812 = vunpack.c.l.b16 %v2729
    %v2813 = vunpack.c.h.b16 %v2729
    %v2814 = vunpack.c.l.b16 %v2730
    %v2815 = vunpack.c.h.b16 %v2730
    %v2816 = vunpack.c.l.b16 %v2731
    %v2817 = vunpack.c.h.b16 %v2731
    %v2818 = vunpack.c.l.b16 %v2732
    %v2819 = vunpack.c.h.b16 %v2732
    %v2820 = vunpack.c.l.b16 %v2733
    %v2821 = vunpack.c.h.b16 %v2733
    %v2822 = vunpack.c.l.b16 %v2734
    %v2823 = vunpack.c.h.b16 %v2734
    %v2824 = vunpack.c.l.b16 %v2735
    %v2825 = vunpack.c.h.b16 %v2735
    %v2826 = vunpack.c.l.b16 %v2736
    %v2827 = vunpack.c.h.b16 %v2736
    %v2828 = vunpack.c.l.b16 %v2737
    %v2829 = vunpack.c.h.b16 %v2737
    %v2830 = vunpack.c.l.b16 %v2738
    %v2831 = vunpack.c.h.b16 %v2738
    %v2832 = vunpack.c.l.b16 %v2739
    %v2833 = vunpack.c.h.b16 %v2739
    %v2834 = vunpack.c.l.b16 %v2740
    %v2835 = vunpack.c.h.b16 %v2740
    %v2836 = vunpack.c.l.b16 %v2741
    %v2837 = vunpack.c.h.b16 %v2741
    %v2838 = vpack.c.b16 %v2778, %v2774
    %v2839 = vpack.c.b16 %v2779, %v2775
    %v2840 = vpack.c.b16 %v2780, %v2776
    %v2841 = vpack.c.b16 %v2781, %v2777
    %v2842 = vpack.c.b16 %v2786, %v2782
    %v2843 = vpack.c.b16 %v2787, %v2783
    %v2844 = vpack.c.b16 %v2788, %v2784
    %v2845 = vpack.c.b16 %v2789, %v2785
    %v2846 = vpack.c.b16 %v2794, %v2790
    %v2847 = vpack.c.b16 %v2795, %v2791
    %v2848 = vpack.c.b16 %v2796, %v2792
    %v2849 = vpack.c.b16 %v2797, %v2793
    %v2850 = vpack.c.b16 %v2802, %v2798
    %v2851 = vpack.c.b16 %v2803, %v2799
    %v2852 = vpack.c.b16 %v2804, %v2800
    %v2853 = vpack.c.b16 %v2805, %v2801
    %v2854 = vpack.c.b16 %v2810, %v2806
    %v2855 = vpack.c.b16 %v2811, %v2807
    %v2856 = vpack.c.b16 %v2812, %v2808
    %v2857 = vpack.c.b16 %v2813, %v2809
    %v2858 = vpack.c.b16 %v2818, %v2814
    %v2859 = vpack.c.b16 %v2819, %v2815
    %v2860 = vpack.c.b16 %v2820, %v2816
    %v2861 = vpack.c.b16 %v2821, %v2817
    %v2862 = vpack.c.b16 %v2826, %v2822
    %v2863 = vpack.c.b16 %v2827, %v2823
    %v2864 = vpack.c.b16 %v2828, %v2824
    %v2865 = vpack.c.b16 %v2829, %v2825
    %v2866 = vpack.c.b16 %v2834, %v2830
    %v2867 = vpack.c.b16 %v2835, %v2831
    %v2868 = vpack.c.b16 %v2836, %v2832
    %v2869 = vpack.c.b16 %v2837, %v2833
    %2902 = vmatprep.subr.bf16.mxu0 %v2839
    %2903 = vmatpush1.bf16.msra.mxu0 %v2838
    %2904 = vmatprep.subr.bf16.mxu0 %v2843
    %2905 = vmatpush1.bf16.msra.mxu0 %v2842
    %2906 = vmatprep.subr.bf16.mxu0 %v2847
    %2907 = vmatpush1.bf16.msra.mxu0 %v2846
    %2908 = vmatprep.subr.bf16.mxu0 %v2851
    %2909 = vmatpush1.bf16.msra.mxu0 %v2850
    %2910 = vmatprep.subr.bf16.mxu0 %v2855
    %2911 = vmatpush1.bf16.msra.mxu0 %v2854
    %2912 = vmatprep.subr.bf16.mxu0 %v2859
    %2913 = vmatpush1.bf16.msra.mxu0 %v2858
    %2914 = vmatprep.subr.bf16.mxu0 %v2863
    %2915 = vmatpush1.bf16.msra.mxu0 %v2862
    %2916 = vmatprep.subr.bf16.mxu0 %v2867
    %2917 = vmatpush1.bf16.msra.mxu0 %v2866
    %2918 = vmatprep.subr.bf16.mxu0 0
    %2919 = vmatpush1.bf16.msra.mxu0 0
    %2920 = vmatprep.subr.bf16.mxu0 0
    %2921 = vmatpush1.bf16.msra.mxu0 0
    %2922 = vmatprep.subr.bf16.mxu0 0
    %2923 = vmatpush1.bf16.msra.mxu0 0
    %2924 = vmatprep.subr.bf16.mxu0 0
    %2925 = vmatpush1.bf16.msra.mxu0 0
    %2926 = vmatprep.subr.bf16.mxu0 0
    %2927 = vmatpush1.bf16.msra.mxu0 0
    %2928 = vmatprep.subr.bf16.mxu0 0
    %2929 = vmatpush1.bf16.msra.mxu0 0
    %2930 = vmatprep.subr.bf16.mxu0 0
    %2931 = vmatpush1.bf16.msra.mxu0 0
    %2932 = vmatprep.subr.bf16.mxu0 0
    %2933 = vmatpush1.bf16.msra.mxu0 0
    %2934 = vmatprep.mubr.bf16.mxu0 0
    %2935 = vmatmul.mubr.bf16.gmra.mrb[0].mxu0 %v2709
    %v2936 = vpop.f32.mrb[0].mxu0
    %v2937 = vadd.f32 0.0, %v2936
    %v2938 = vpop.f32.mrb[0].mxu0
    %v2939 = vadd.f32 0.0, %v2938
    %v2940 = vpop.f32.mrb[0].mxu0
    %v2941 = vpop.f32.mrb[0].mxu0
    %2942 = vdwg.mxu0
    %2943 = vmatprep.subr.bf16.mxu0 %v2841
    %2944 = vmatpush1.bf16.msra.mxu0 %v2840
    %2945 = vmatprep.subr.bf16.mxu0 %v2845
    %2946 = vmatpush1.bf16.msra.mxu0 %v2844
    %2947 = vmatprep.subr.bf16.mxu0 %v2849
    %2948 = vmatpush1.bf16.msra.mxu0 %v2848
    %2949 = vmatprep.subr.bf16.mxu0 %v2853
    %2950 = vmatpush1.bf16.msra.mxu0 %v2852
    %2951 = vmatprep.subr.bf16.mxu0 %v2857
    %2952 = vmatpush1.bf16.msra.mxu0 %v2856
    %2953 = vmatprep.subr.bf16.mxu0 %v2861
    %2954 = vmatpush1.bf16.msra.mxu0 %v2860
    %2955 = vmatprep.subr.bf16.mxu0 %v2865
    %2956 = vmatpush1.bf16.msra.mxu0 %v2864
    %2957 = vmatprep.subr.bf16.mxu0 %v2869
    %2958 = vmatpush1.bf16.msra.mxu0 %v2868
    %2959 = vmatprep.subr.bf16.mxu0 0
    %2960 = vmatpush1.bf16.msra.mxu0 0
    %2961 = vmatprep.subr.bf16.mxu0 0
    %2962 = vmatpush1.bf16.msra.mxu0 0
    %2963 = vmatprep.subr.bf16.mxu0 0
    %2964 = vmatpush1.bf16.msra.mxu0 0
    %2965 = vmatprep.subr.bf16.mxu0 0
    %2966 = vmatpush1.bf16.msra.mxu0 0
    %2967 = vmatprep.subr.bf16.mxu0 0
    %2968 = vmatpush1.bf16.msra.mxu0 0
    %2969 = vmatprep.subr.bf16.mxu0 0
    %2970 = vmatpush1.bf16.msra.mxu0 0
    %2971 = vmatprep.subr.bf16.mxu0 0
    %2972 = vmatpush1.bf16.msra.mxu0 0
    %2973 = vmatprep.subr.bf16.mxu0 0
    %2974 = vmatpush1.bf16.msra.mxu0 0
    %2975 = vmatprep.mubr.bf16.mxu0 0
    %2976 = vmatmul.mubr.bf16.gmra.mrb[0].mxu0 %v2709
    %v2977 = vpop.f32.mrb[0].mxu0
    %v2978 = vadd.f32 0.0, %v2977
    %v2979 = vpop.f32.mrb[0].mxu0
    %v2980 = vadd.f32 0.0, %v2979
    %v2981 = vpop.f32.mrb[0].mxu0
    %v2982 = vpop.f32.mrb[0].mxu0
    %2983 = vdwg.mxu0
    %v2984 = vadd.f32 %v2705, %v2937
    %v2985 = vadd.f32 %v2706, %v2939
    %v2986 = vadd.f32 %v2707, %v2978
    %v2987 = vadd.f32 %v2708, %v2980
    %v2988 = vxor.u32 %v2984, 2147483648
    %v2989 = vmul.f32 %v2988, 1.442695
    %v2990 = vpow.pop %v2989
    %v2991 = vadd.f32 %v2990, 1.0
    %v2992 = vrcp.pop %v2991
    %v2993 = vmul.f32 1.0, %v2992
    %v2994 = vxor.u32 %v2985, 2147483648
    %v2995 = vmul.f32 %v2994, 1.442695
    %v2996 = vpow.pop %v2995
    %v2997 = vadd.f32 %v2996, 1.0
    %v2998 = vrcp.pop %v2997
    %v2999 = vmul.f32 1.0, %v2998
    %v3000 = vtanh.pop %v2986
    %v3001 = vxor.u32 %v2987, 2147483648
    %v3002 = vmul.f32 %v3001, 1.442695
    %v3003 = vpow.pop %v3002
    %v3004 = vadd.f32 %v3003, 1.0
    %v3005 = vrcp.pop %v3004
    %v3006 = vmul.f32 1.0, %v3005
    %v3007 = vmul.f32 %v2999, %v2697
    %v3008 = vmul.f32 %v2993, %v3000
    %v3009 = vadd.f32 %v3007, %v3008
    %v3010 = vtanh.pop %v3009
    %v3011 = vmul.f32 %v3006, %v3010
    %s3012 = scalar_lea.vmem [#allocation3], 56
    %3013 = vst [vmem:[%s3012] sm:$0xff] %v3011
    %v3014 = vld [vmem:[#allocation3] sm:$0xff]
    %v3015 = vld [vmem:[#allocation3 + $0x8] sm:$0xff]
    %v3016 = vld [vmem:[#allocation3 + $0x10] sm:$0xff]
    %v3017 = vld [vmem:[#allocation3 + $0x18] sm:$0xff]
    %v3018 = vld [vmem:[#allocation3 + $0x20] sm:$0xff]
    %v3019 = vld [vmem:[#allocation3 + $0x28] sm:$0xff]
    %v3020 = vld [vmem:[#allocation3 + $0x30] sm:$0xff]
    %v3021 = vld [vmem:[#allocation3 + $0x38] sm:$0xff]
    %v3022 = vpack.c.bf16 %v3015, %v3014
    %v3023 = vpack.c.bf16 %v3017, %v3016
    %v3024 = vpack.c.bf16 %v3019, %v3018
    %v3025 = vpack.c.bf16 %v3021, %v3020
    %v3026 = vld [vmem:[#allocation11] sm:$0xff]
    %v3027 = vld [vmem:[#allocation11 + $0x8] sm:$0xff]
    %v3028 = vld [vmem:[#allocation11 + $0x10] sm:$0xff]
    %v3029 = vld [vmem:[#allocation11 + $0x18] sm:$0xff]
    %v3030 = vld [vmem:[#allocation11 + $0x20] sm:$0xff]
    %v3031 = vld [vmem:[#allocation11 + $0x28] sm:$0xff]
    %v3032 = vld [vmem:[#allocation11 + $0x30] sm:$0xff]
    %v3033 = vld [vmem:[#allocation11 + $0x38] sm:$0xff]
    %v3034 = vld [vmem:[#allocation11 + $0x40] sm:$0xff]
    %v3035 = vld [vmem:[#allocation11 + $0x48] sm:$0xff]
    %v3036 = vld [vmem:[#allocation11 + $0x50] sm:$0xff]
    %v3037 = vld [vmem:[#allocation11 + $0x58] sm:$0xff]
    %v3038 = vld [vmem:[#allocation11 + $0x60] sm:$0xff]
    %v3039 = vld [vmem:[#allocation11 + $0x68] sm:$0xff]
    %v3040 = vld [vmem:[#allocation11 + $0x70] sm:$0xff]
    %v3041 = vld [vmem:[#allocation11 + $0x78] sm:$0xff]
    %v3042 = vld [vmem:[#allocation11 + $0x80] sm:$0xff]
    %v3043 = vld [vmem:[#allocation11 + $0x88] sm:$0xff]
    %v3044 = vld [vmem:[#allocation11 + $0x90] sm:$0xff]
    %v3045 = vld [vmem:[#allocation11 + $0x98] sm:$0xff]
    %v3046 = vld [vmem:[#allocation11 + $0xa0] sm:$0xff]
    %v3047 = vld [vmem:[#allocation11 + $0xa8] sm:$0xff]
    %v3048 = vld [vmem:[#allocation11 + $0xb0] sm:$0xff]
    %v3049 = vld [vmem:[#allocation11 + $0xb8] sm:$0xff]
    %v3050 = vld [vmem:[#allocation11 + $0xc0] sm:$0xff]
    %v3051 = vld [vmem:[#allocation11 + $0xc8] sm:$0xff]
    %v3052 = vld [vmem:[#allocation11 + $0xd0] sm:$0xff]
    %v3053 = vld [vmem:[#allocation11 + $0xd8] sm:$0xff]
    %v3054 = vld [vmem:[#allocation11 + $0xe0] sm:$0xff]
    %v3055 = vld [vmem:[#allocation11 + $0xe8] sm:$0xff]
    %v3056 = vld [vmem:[#allocation11 + $0xf0] sm:$0xff]
    %v3057 = vld [vmem:[#allocation11 + $0xf8] sm:$0xff]
    %v3058 = vld [vmem:[%s6] sm:$0xf]
    %v3060 = vlaneseq
    %v3061 = vshrl.u32 %v3060, 7
    %v3062 = vsub.s32 0, %v3061
    %v3063 = vrot.slane %v3058, %v3062
    %v3064 = vlaneseq
    %v3065 = vshrl.u32 %v3064, 7
    %v3066 = vsub.s32 1, %v3065
    %v3067 = vrot.slane %v3058, %v3066
    %v3068 = vlaneseq
    %v3069 = vshrl.u32 %v3068, 7
    %v3070 = vsub.s32 2, %v3069
    %v3071 = vrot.slane %v3058, %v3070
    %v3072 = vlaneseq
    %v3073 = vshrl.u32 %v3072, 7
    %v3074 = vsub.s32 3, %v3073
    %v3075 = vrot.slane %v3058, %v3074
    %v3112 = vunpack.c.l.b16 %v3026
    %v3113 = vunpack.c.h.b16 %v3026
    %v3114 = vunpack.c.l.b16 %v3027
    %v3115 = vunpack.c.h.b16 %v3027
    %v3116 = vunpack.c.l.b16 %v3028
    %v3117 = vunpack.c.h.b16 %v3028
    %v3118 = vunpack.c.l.b16 %v3029
    %v3119 = vunpack.c.h.b16 %v3029
    %v3120 = vunpack.c.l.b16 %v3030
    %v3121 = vunpack.c.h.b16 %v3030
    %v3122 = vunpack.c.l.b16 %v3031
    %v3123 = vunpack.c.h.b16 %v3031
    %v3124 = vunpack.c.l.b16 %v3032
    %v3125 = vunpack.c.h.b16 %v3032
    %v3126 = vunpack.c.l.b16 %v3033
    %v3127 = vunpack.c.h.b16 %v3033
    %v3128 = vunpack.c.l.b16 %v3034
    %v3129 = vunpack.c.h.b16 %v3034
    %v3130 = vunpack.c.l.b16 %v3035
    %v3131 = vunpack.c.h.b16 %v3035
    %v3132 = vunpack.c.l.b16 %v3036
    %v3133 = vunpack.c.h.b16 %v3036
    %v3134 = vunpack.c.l.b16 %v3037
    %v3135 = vunpack.c.h.b16 %v3037
    %v3136 = vunpack.c.l.b16 %v3038
    %v3137 = vunpack.c.h.b16 %v3038
    %v3138 = vunpack.c.l.b16 %v3039
    %v3139 = vunpack.c.h.b16 %v3039
    %v3140 = vunpack.c.l.b16 %v3040
    %v3141 = vunpack.c.h.b16 %v3040
    %v3142 = vunpack.c.l.b16 %v3041
    %v3143 = vunpack.c.h.b16 %v3041
    %v3144 = vunpack.c.l.b16 %v3042
    %v3145 = vunpack.c.h.b16 %v3042
    %v3146 = vunpack.c.l.b16 %v3043
    %v3147 = vunpack.c.h.b16 %v3043
    %v3148 = vunpack.c.l.b16 %v3044
    %v3149 = vunpack.c.h.b16 %v3044
    %v3150 = vunpack.c.l.b16 %v3045
    %v3151 = vunpack.c.h.b16 %v3045
    %v3152 = vunpack.c.l.b16 %v3046
    %v3153 = vunpack.c.h.b16 %v3046
    %v3154 = vunpack.c.l.b16 %v3047
    %v3155 = vunpack.c.h.b16 %v3047
    %v3156 = vunpack.c.l.b16 %v3048
    %v3157 = vunpack.c.h.b16 %v3048
    %v3158 = vunpack.c.l.b16 %v3049
    %v3159 = vunpack.c.h.b16 %v3049
    %v3160 = vunpack.c.l.b16 %v3050
    %v3161 = vunpack.c.h.b16 %v3050
    %v3162 = vunpack.c.l.b16 %v3051
    %v3163 = vunpack.c.h.b16 %v3051
    %v3164 = vunpack.c.l.b16 %v3052
    %v3165 = vunpack.c.h.b16 %v3052
    %v3166 = vunpack.c.l.b16 %v3053
    %v3167 = vunpack.c.h.b16 %v3053
    %v3168 = vunpack.c.l.b16 %v3054
    %v3169 = vunpack.c.h.b16 %v3054
    %v3170 = vunpack.c.l.b16 %v3055
    %v3171 = vunpack.c.h.b16 %v3055
    %v3172 = vunpack.c.l.b16 %v3056
    %v3173 = vunpack.c.h.b16 %v3056
    %v3174 = vunpack.c.l.b16 %v3057
    %v3175 = vunpack.c.h.b16 %v3057
    %v3176 = vpack.c.b16 %v3116, %v3112
    %v3177 = vpack.c.b16 %v3117, %v3113
    %v3178 = vpack.c.b16 %v3118, %v3114
    %v3179 = vpack.c.b16 %v3119, %v3115
    %v3180 = vpack.c.b16 %v3124, %v3120
    %v3181 = vpack.c.b16 %v3125, %v3121
    %v3182 = vpack.c.b16 %v3126, %v3122
    %v3183 = vpack.c.b16 %v3127, %v3123
    %v3184 = vpack.c.b16 %v3132, %v3128
    %v3185 = vpack.c.b16 %v3133, %v3129
    %v3186 = vpack.c.b16 %v3134, %v3130
    %v3187 = vpack.c.b16 %v3135, %v3131
    %v3188 = vpack.c.b16 %v3140, %v3136
    %v3189 = vpack.c.b16 %v3141, %v3137
    %v3190 = vpack.c.b16 %v3142, %v3138
    %v3191 = vpack.c.b16 %v3143, %v3139
    %v3192 = vpack.c.b16 %v3148, %v3144
    %v3193 = vpack.c.b16 %v3149, %v3145
    %v3194 = vpack.c.b16 %v3150, %v3146
    %v3195 = vpack.c.b16 %v3151, %v3147
    %v3196 = vpack.c.b16 %v3156, %v3152
    %v3197 = vpack.c.b16 %v3157, %v3153
    %v3198 = vpack.c.b16 %v3158, %v3154
    %v3199 = vpack.c.b16 %v3159, %v3155
    %v3200 = vpack.c.b16 %v3164, %v3160
    %v3201 = vpack.c.b16 %v3165, %v3161
    %v3202 = vpack.c.b16 %v3166, %v3162
    %v3203 = vpack.c.b16 %v3167, %v3163
    %v3204 = vpack.c.b16 %v3172, %v3168
    %v3205 = vpack.c.b16 %v3173, %v3169
    %v3206 = vpack.c.b16 %v3174, %v3170
    %v3207 = vpack.c.b16 %v3175, %v3171
    %3240 = vmatprep.subr.bf16.mxu0 %v3177
    %3241 = vmatpush1.bf16.msra.mxu0 %v3176
    %3242 = vmatprep.subr.bf16.mxu0 %v3181
    %3243 = vmatpush1.bf16.msra.mxu0 %v3180
    %3244 = vmatprep.subr.bf16.mxu0 %v3185
    %3245 = vmatpush1.bf16.msra.mxu0 %v3184
    %3246 = vmatprep.subr.bf16.mxu0 %v3189
    %3247 = vmatpush1.bf16.msra.mxu0 %v3188
    %3248 = vmatprep.subr.bf16.mxu0 %v3193
    %3249 = vmatpush1.bf16.msra.mxu0 %v3192
    %3250 = vmatprep.subr.bf16.mxu0 %v3197
    %3251 = vmatpush1.bf16.msra.mxu0 %v3196
    %3252 = vmatprep.subr.bf16.mxu0 %v3201
    %3253 = vmatpush1.bf16.msra.mxu0 %v3200
    %3254 = vmatprep.subr.bf16.mxu0 %v3205
    %3255 = vmatpush1.bf16.msra.mxu0 %v3204
    %3256 = vmatprep.subr.bf16.mxu0 0
    %3257 = vmatpush1.bf16.msra.mxu0 0
    %3258 = vmatprep.subr.bf16.mxu0 0
    %3259 = vmatpush1.bf16.msra.mxu0 0
    %3260 = vmatprep.subr.bf16.mxu0 0
    %3261 = vmatpush1.bf16.msra.mxu0 0
    %3262 = vmatprep.subr.bf16.mxu0 0
    %3263 = vmatpush1.bf16.msra.mxu0 0
    %3264 = vmatprep.subr.bf16.mxu0 0
    %3265 = vmatpush1.bf16.msra.mxu0 0
    %3266 = vmatprep.subr.bf16.mxu0 0
    %3267 = vmatpush1.bf16.msra.mxu0 0
    %3268 = vmatprep.subr.bf16.mxu0 0
    %3269 = vmatpush1.bf16.msra.mxu0 0
    %3270 = vmatprep.subr.bf16.mxu0 0
    %3271 = vmatpush1.bf16.msra.mxu0 0
    %3272 = vmatprep.mubr.bf16.mxu0 0
    %3273 = vmatmul.mubr.bf16.gmra.mrb[0].mxu0 %v3022
    %v3274 = vpop.f32.mrb[0].mxu0
    %v3275 = vadd.f32 %v3063, %v3274
    %v3276 = vpop.f32.mrb[0].mxu0
    %v3277 = vadd.f32 %v3067, %v3276
    %v3278 = vpop.f32.mrb[0].mxu0
    %v3279 = vadd.f32 %v3063, %v3278
    %v3280 = vpop.f32.mrb[0].mxu0
    %v3281 = vadd.f32 %v3067, %v3280
    %3282 = vmatprep.mubr.bf16.mxu0 0
    %3283 = vmatmul.mubr.bf16.gmra.mrb[0].mxu0 %v3023
    %v3284 = vpop.f32.mrb[0].mxu0
    %v3285 = vadd.f32 %v3063, %v3284
    %v3286 = vpop.f32.mrb[0].mxu0
    %v3287 = vadd.f32 %v3067, %v3286
    %v3288 = vpop.f32.mrb[0].mxu0
    %v3289 = vadd.f32 %v3063, %v3288
    %v3290 = vpop.f32.mrb[0].mxu0
    %v3291 = vadd.f32 %v3067, %v3290
    %3292 = vmatprep.mubr.bf16.mxu0 0
    %3293 = vmatmul.mubr.bf16.gmra.mrb[0].mxu0 %v3024
    %v3294 = vpop.f32.mrb[0].mxu0
    %v3295 = vadd.f32 %v3063, %v3294
    %v3296 = vpop.f32.mrb[0].mxu0
    %v3297 = vadd.f32 %v3067, %v3296
    %v3298 = vpop.f32.mrb[0].mxu0
    %v3299 = vadd.f32 %v3063, %v3298
    %v3300 = vpop.f32.mrb[0].mxu0
    %v3301 = vadd.f32 %v3067, %v3300
    %3302 = vmatprep.mubr.bf16.mxu0 0
    %3303 = vmatmul.mubr.bf16.gmra.mrb[0].mxu0 %v3025
    %v3304 = vpop.f32.mrb[0].mxu0
    %v3305 = vadd.f32 %v3063, %v3304
    %v3306 = vpop.f32.mrb[0].mxu0
    %v3307 = vadd.f32 %v3067, %v3306
    %v3308 = vpop.f32.mrb[0].mxu0
    %v3309 = vadd.f32 %v3063, %v3308
    %v3310 = vpop.f32.mrb[0].mxu0
    %v3311 = vadd.f32 %v3067, %v3310
    %3312 = vdwg.mxu0
    %3313 = vmatprep.subr.bf16.mxu0 %v3179
    %3314 = vmatpush1.bf16.msra.mxu0 %v3178
    %3315 = vmatprep.subr.bf16.mxu0 %v3183
    %3316 = vmatpush1.bf16.msra.mxu0 %v3182
    %3317 = vmatprep.subr.bf16.mxu0 %v3187
    %3318 = vmatpush1.bf16.msra.mxu0 %v3186
    %3319 = vmatprep.subr.bf16.mxu0 %v3191
    %3320 = vmatpush1.bf16.msra.mxu0 %v3190
    %3321 = vmatprep.subr.bf16.mxu0 %v3195
    %3322 = vmatpush1.bf16.msra.mxu0 %v3194
    %3323 = vmatprep.subr.bf16.mxu0 %v3199
    %3324 = vmatpush1.bf16.msra.mxu0 %v3198
    %3325 = vmatprep.subr.bf16.mxu0 %v3203
    %3326 = vmatpush1.bf16.msra.mxu0 %v3202
    %3327 = vmatprep.subr.bf16.mxu0 %v3207
    %3328 = vmatpush1.bf16.msra.mxu0 %v3206
    %3329 = vmatprep.subr.bf16.mxu0 0
    %3330 = vmatpush1.bf16.msra.mxu0 0
    %3331 = vmatprep.subr.bf16.mxu0 0
    %3332 = vmatpush1.bf16.msra.mxu0 0
    %3333 = vmatprep.subr.bf16.mxu0 0
    %3334 = vmatpush1.bf16.msra.mxu0 0
    %3335 = vmatprep.subr.bf16.mxu0 0
    %3336 = vmatpush1.bf16.msra.mxu0 0
    %3337 = vmatprep.subr.bf16.mxu0 0
    %3338 = vmatpush1.bf16.msra.mxu0 0
    %3339 = vmatprep.subr.bf16.mxu0 0
    %3340 = vmatpush1.bf16.msra.mxu0 0
    %3341 = vmatprep.subr.bf16.mxu0 0
    %3342 = vmatpush1.bf16.msra.mxu0 0
    %3343 = vmatprep.subr.bf16.mxu0 0
    %3344 = vmatpush1.bf16.msra.mxu0 0
    %3345 = vmatprep.mubr.bf16.mxu0 0
    %3346 = vmatmul.mubr.bf16.gmra.mrb[0].mxu0 %v3022
    %v3347 = vpop.f32.mrb[0].mxu0
    %v3348 = vadd.f32 %v3071, %v3347
    %v3349 = vpop.f32.mrb[0].mxu0
    %v3350 = vadd.f32 %v3075, %v3349
    %v3351 = vpop.f32.mrb[0].mxu0
    %v3352 = vadd.f32 %v3071, %v3351
    %v3353 = vpop.f32.mrb[0].mxu0
    %v3354 = vadd.f32 %v3075, %v3353
    %3355 = vmatprep.mubr.bf16.mxu0 0
    %3356 = vmatmul.mubr.bf16.gmra.mrb[0].mxu0 %v3023
    %v3357 = vpop.f32.mrb[0].mxu0
    %v3358 = vadd.f32 %v3071, %v3357
    %v3359 = vpop.f32.mrb[0].mxu0
    %v3360 = vadd.f32 %v3075, %v3359
    %v3361 = vpop.f32.mrb[0].mxu0
    %v3362 = vadd.f32 %v3071, %v3361
    %v3363 = vpop.f32.mrb[0].mxu0
    %v3364 = vadd.f32 %v3075, %v3363
    %3365 = vmatprep.mubr.bf16.mxu0 0
    %3366 = vmatmul.mubr.bf16.gmra.mrb[0].mxu0 %v3024
    %v3367 = vpop.f32.mrb[0].mxu0
    %v3368 = vadd.f32 %v3071, %v3367
    %v3369 = vpop.f32.mrb[0].mxu0
    %v3370 = vadd.f32 %v3075, %v3369
    %v3371 = vpop.f32.mrb[0].mxu0
    %v3372 = vadd.f32 %v3071, %v3371
    %v3373 = vpop.f32.mrb[0].mxu0
    %v3374 = vadd.f32 %v3075, %v3373
    %3375 = vmatprep.mubr.bf16.mxu0 0
    %3376 = vmatmul.mubr.bf16.gmra.mrb[0].mxu0 %v3025
    %v3377 = vpop.f32.mrb[0].mxu0
    %v3378 = vadd.f32 %v3071, %v3377
    %v3379 = vpop.f32.mrb[0].mxu0
    %v3380 = vadd.f32 %v3075, %v3379
    %v3381 = vpop.f32.mrb[0].mxu0
    %v3382 = vadd.f32 %v3071, %v3381
    %v3383 = vpop.f32.mrb[0].mxu0
    %v3384 = vadd.f32 %v3075, %v3383
    %3385 = vdwg.mxu0
    %3386 = vst [vmem:[#allocation4] sm:$0xff] %v3275
    %3387 = vst [vmem:[#allocation4 + $0x8] sm:$0xff] %v3277
    %3388 = vst [vmem:[#allocation4 + $0x10] sm:$0xff] %v3348
    %3389 = vst [vmem:[#allocation4 + $0x18] sm:$0xff] %v3350
    %3390 = vst [vmem:[#allocation4 + $0x20] sm:$0xff] %v3279
    %3391 = vst [vmem:[#allocation4 + $0x28] sm:$0xff] %v3281
    %3392 = vst [vmem:[#allocation4 + $0x30] sm:$0xff] %v3352
    %3393 = vst [vmem:[#allocation4 + $0x38] sm:$0xff] %v3354
    %3394 = vst [vmem:[#allocation4 + $0x40] sm:$0xff] %v3285
    %3395 = vst [vmem:[#allocation4 + $0x48] sm:$0xff] %v3287
    %3396 = vst [vmem:[#allocation4 + $0x50] sm:$0xff] %v3358
    %3397 = vst [vmem:[#allocation4 + $0x58] sm:$0xff] %v3360
    %3398 = vst [vmem:[#allocation4 + $0x60] sm:$0xff] %v3289
    %3399 = vst [vmem:[#allocation4 + $0x68] sm:$0xff] %v3291
    %3400 = vst [vmem:[#allocation4 + $0x70] sm:$0xff] %v3362
    %3401 = vst [vmem:[#allocation4 + $0x78] sm:$0xff] %v3364
    %3402 = vst [vmem:[#allocation4 + $0x80] sm:$0xff] %v3295
    %3403 = vst [vmem:[#allocation4 + $0x88] sm:$0xff] %v3297
    %3404 = vst [vmem:[#allocation4 + $0x90] sm:$0xff] %v3368
    %3405 = vst [vmem:[#allocation4 + $0x98] sm:$0xff] %v3370
    %3406 = vst [vmem:[#allocation4 + $0xa0] sm:$0xff] %v3299
    %3407 = vst [vmem:[#allocation4 + $0xa8] sm:$0xff] %v3301
    %3408 = vst [vmem:[#allocation4 + $0xb0] sm:$0xff] %v3372
    %3409 = vst [vmem:[#allocation4 + $0xb8] sm:$0xff] %v3374
    %3410 = vst [vmem:[#allocation4 + $0xc0] sm:$0xff] %v3305
    %3411 = vst [vmem:[#allocation4 + $0xc8] sm:$0xff] %v3307
    %3412 = vst [vmem:[#allocation4 + $0xd0] sm:$0xff] %v3378
    %3413 = vst [vmem:[#allocation4 + $0xd8] sm:$0xff] %v3380
    %3414 = vst [vmem:[#allocation4 + $0xe0] sm:$0xff] %v3309
    %3415 = vst [vmem:[#allocation4 + $0xe8] sm:$0xff] %v3311
    %3416 = vst [vmem:[#allocation4 + $0xf0] sm:$0xff] %v3382
    %3417 = vst [vmem:[#allocation4 + $0xf8] sm:$0xff] %v3384
    %s3418 = smul.addr %s520, 8
    %s3419 = scalar_lea.vmem [#allocation4], %s3418
    %v3420 = vld [vmem:[%s3419] sm:$0xff]
    %v3421 = vld [vmem:[%s3419 + $0x8] sm:$0xff]
    %v3422 = vld [vmem:[%s3419 + $0x10] sm:$0xff]
    %v3423 = vld [vmem:[%s3419 + $0x18] sm:$0xff]
    %v3424 = vld [vmem:[#allocation13] sm:$0xff]
    %v3425 = vld [vmem:[#allocation13 + $0x8] sm:$0xff]
    %v3426 = vld [vmem:[#allocation13 + $0x10] sm:$0xff]
    %v3427 = vld [vmem:[#allocation13 + $0x18] sm:$0xff]
    %v3428 = vld [vmem:[#allocation13 + $0x20] sm:$0xff]
    %v3429 = vld [vmem:[#allocation13 + $0x28] sm:$0xff]
    %v3430 = vld [vmem:[#allocation13 + $0x30] sm:$0xff]
    %v3431 = vld [vmem:[#allocation13 + $0x38] sm:$0xff]
    %v3432 = vld [vmem:[#allocation13 + $0x40] sm:$0xff]
    %v3433 = vld [vmem:[#allocation13 + $0x48] sm:$0xff]
    %v3434 = vld [vmem:[#allocation13 + $0x50] sm:$0xff]
    %v3435 = vld [vmem:[#allocation13 + $0x58] sm:$0xff]
    %v3436 = vld [vmem:[#allocation13 + $0x60] sm:$0xff]
    %v3437 = vld [vmem:[#allocation13 + $0x68] sm:$0xff]
    %v3438 = vld [vmem:[#allocation13 + $0x70] sm:$0xff]
    %v3439 = vld [vmem:[#allocation13 + $0x78] sm:$0xff]
    %v3440 = vld [vmem:[#allocation13 + $0x80] sm:$0xff]
    %v3441 = vld [vmem:[#allocation13 + $0x88] sm:$0xff]
    %v3442 = vld [vmem:[#allocation13 + $0x90] sm:$0xff]
    %v3443 = vld [vmem:[#allocation13 + $0x98] sm:$0xff]
    %v3444 = vld [vmem:[#allocation13 + $0xa0] sm:$0xff]
    %v3445 = vld [vmem:[#allocation13 + $0xa8] sm:$0xff]
    %v3446 = vld [vmem:[#allocation13 + $0xb0] sm:$0xff]
    %v3447 = vld [vmem:[#allocation13 + $0xb8] sm:$0xff]
    %v3448 = vld [vmem:[#allocation13 + $0xc0] sm:$0xff]
    %v3449 = vld [vmem:[#allocation13 + $0xc8] sm:$0xff]
    %v3450 = vld [vmem:[#allocation13 + $0xd0] sm:$0xff]
    %v3451 = vld [vmem:[#allocation13 + $0xd8] sm:$0xff]
    %v3452 = vld [vmem:[#allocation13 + $0xe0] sm:$0xff]
    %v3453 = vld [vmem:[#allocation13 + $0xe8] sm:$0xff]
    %v3454 = vld [vmem:[#allocation13 + $0xf0] sm:$0xff]
    %v3455 = vld [vmem:[#allocation13 + $0xf8] sm:$0xff]
    %v3488 = vunpack.c.l.b16 %v3424
    %v3489 = vunpack.c.h.b16 %v3424
    %v3490 = vunpack.c.l.b16 %v3425
    %v3491 = vunpack.c.h.b16 %v3425
    %v3492 = vunpack.c.l.b16 %v3426
    %v3493 = vunpack.c.h.b16 %v3426
    %v3494 = vunpack.c.l.b16 %v3427
    %v3495 = vunpack.c.h.b16 %v3427
    %v3496 = vunpack.c.l.b16 %v3428
    %v3497 = vunpack.c.h.b16 %v3428
    %v3498 = vunpack.c.l.b16 %v3429
    %v3499 = vunpack.c.h.b16 %v3429
    %v3500 = vunpack.c.l.b16 %v3430
    %v3501 = vunpack.c.h.b16 %v3430
    %v3502 = vunpack.c.l.b16 %v3431
    %v3503 = vunpack.c.h.b16 %v3431
    %v3504 = vunpack.c.l.b16 %v3432
    %v3505 = vunpack.c.h.b16 %v3432
    %v3506 = vunpack.c.l.b16 %v3433
    %v3507 = vunpack.c.h.b16 %v3433
    %v3508 = vunpack.c.l.b16 %v3434
    %v3509 = vunpack.c.h.b16 %v3434
    %v3510 = vunpack.c.l.b16 %v3435
    %v3511 = vunpack.c.h.b16 %v3435
    %v3512 = vunpack.c.l.b16 %v3436
    %v3513 = vunpack.c.h.b16 %v3436
    %v3514 = vunpack.c.l.b16 %v3437
    %v3515 = vunpack.c.h.b16 %v3437
    %v3516 = vunpack.c.l.b16 %v3438
    %v3517 = vunpack.c.h.b16 %v3438
    %v3518 = vunpack.c.l.b16 %v3439
    %v3519 = vunpack.c.h.b16 %v3439
    %v3520 = vunpack.c.l.b16 %v3440
    %v3521 = vunpack.c.h.b16 %v3440
    %v3522 = vunpack.c.l.b16 %v3441
    %v3523 = vunpack.c.h.b16 %v3441
    %v3524 = vunpack.c.l.b16 %v3442
    %v3525 = vunpack.c.h.b16 %v3442
    %v3526 = vunpack.c.l.b16 %v3443
    %v3527 = vunpack.c.h.b16 %v3443
    %v3528 = vunpack.c.l.b16 %v3444
    %v3529 = vunpack.c.h.b16 %v3444
    %v3530 = vunpack.c.l.b16 %v3445
    %v3531 = vunpack.c.h.b16 %v3445
    %v3532 = vunpack.c.l.b16 %v3446
    %v3533 = vunpack.c.h.b16 %v3446
    %v3534 = vunpack.c.l.b16 %v3447
    %v3535 = vunpack.c.h.b16 %v3447
    %v3536 = vunpack.c.l.b16 %v3448
    %v3537 = vunpack.c.h.b16 %v3448
    %v3538 = vunpack.c.l.b16 %v3449
    %v3539 = vunpack.c.h.b16 %v3449
    %v3540 = vunpack.c.l.b16 %v3450
    %v3541 = vunpack.c.h.b16 %v3450
    %v3542 = vunpack.c.l.b16 %v3451
    %v3543 = vunpack.c.h.b16 %v3451
    %v3544 = vunpack.c.l.b16 %v3452
    %v3545 = vunpack.c.h.b16 %v3452
    %v3546 = vunpack.c.l.b16 %v3453
    %v3547 = vunpack.c.h.b16 %v3453
    %v3548 = vunpack.c.l.b16 %v3454
    %v3549 = vunpack.c.h.b16 %v3454
    %v3550 = vunpack.c.l.b16 %v3455
    %v3551 = vunpack.c.h.b16 %v3455
    %v3552 = vpack.c.b16 %v3492, %v3488
    %v3553 = vpack.c.b16 %v3493, %v3489
    %v3554 = vpack.c.b16 %v3494, %v3490
    %v3555 = vpack.c.b16 %v3495, %v3491
    %v3556 = vpack.c.b16 %v3500, %v3496
    %v3557 = vpack.c.b16 %v3501, %v3497
    %v3558 = vpack.c.b16 %v3502, %v3498
    %v3559 = vpack.c.b16 %v3503, %v3499
    %v3560 = vpack.c.b16 %v3508, %v3504
    %v3561 = vpack.c.b16 %v3509, %v3505
    %v3562 = vpack.c.b16 %v3510, %v3506
    %v3563 = vpack.c.b16 %v3511, %v3507
    %v3564 = vpack.c.b16 %v3516, %v3512
    %v3565 = vpack.c.b16 %v3517, %v3513
    %v3566 = vpack.c.b16 %v3518, %v3514
    %v3567 = vpack.c.b16 %v3519, %v3515
    %v3568 = vpack.c.b16 %v3524, %v3520
    %v3569 = vpack.c.b16 %v3525, %v3521
    %v3570 = vpack.c.b16 %v3526, %v3522
    %v3571 = vpack.c.b16 %v3527, %v3523
    %v3572 = vpack.c.b16 %v3532, %v3528
    %v3573 = vpack.c.b16 %v3533, %v3529
    %v3574 = vpack.c.b16 %v3534, %v3530
    %v3575 = vpack.c.b16 %v3535, %v3531
    %v3576 = vpack.c.b16 %v3540, %v3536
    %v3577 = vpack.c.b16 %v3541, %v3537
    %v3578 = vpack.c.b16 %v3542, %v3538
    %v3579 = vpack.c.b16 %v3543, %v3539
    %v3580 = vpack.c.b16 %v3548, %v3544
    %v3581 = vpack.c.b16 %v3549, %v3545
    %v3582 = vpack.c.b16 %v3550, %v3546
    %v3583 = vpack.c.b16 %v3551, %v3547
    %3616 = vmatprep.subr.bf16.mxu0 %v3553
    %3617 = vmatpush1.bf16.msra.mxu0 %v3552
    %3618 = vmatprep.subr.bf16.mxu0 %v3557
    %3619 = vmatpush1.bf16.msra.mxu0 %v3556
    %3620 = vmatprep.subr.bf16.mxu0 %v3561
    %3621 = vmatpush1.bf16.msra.mxu0 %v3560
    %3622 = vmatprep.subr.bf16.mxu0 %v3565
    %3623 = vmatpush1.bf16.msra.mxu0 %v3564
    %3624 = vmatprep.subr.bf16.mxu0 %v3569
    %3625 = vmatpush1.bf16.msra.mxu0 %v3568
    %3626 = vmatprep.subr.bf16.mxu0 %v3573
    %3627 = vmatpush1.bf16.msra.mxu0 %v3572
    %3628 = vmatprep.subr.bf16.mxu0 %v3577
    %3629 = vmatpush1.bf16.msra.mxu0 %v3576
    %3630 = vmatprep.subr.bf16.mxu0 %v3581
    %3631 = vmatpush1.bf16.msra.mxu0 %v3580
    %3632 = vmatprep.subr.bf16.mxu0 0
    %3633 = vmatpush1.bf16.msra.mxu0 0
    %3634 = vmatprep.subr.bf16.mxu0 0
    %3635 = vmatpush1.bf16.msra.mxu0 0
    %3636 = vmatprep.subr.bf16.mxu0 0
    %3637 = vmatpush1.bf16.msra.mxu0 0
    %3638 = vmatprep.subr.bf16.mxu0 0
    %3639 = vmatpush1.bf16.msra.mxu0 0
    %3640 = vmatprep.subr.bf16.mxu0 0
    %3641 = vmatpush1.bf16.msra.mxu0 0
    %3642 = vmatprep.subr.bf16.mxu0 0
    %3643 = vmatpush1.bf16.msra.mxu0 0
    %3644 = vmatprep.subr.bf16.mxu0 0
    %3645 = vmatpush1.bf16.msra.mxu0 0
    %3646 = vmatprep.subr.bf16.mxu0 0
    %3647 = vmatpush1.bf16.msra.mxu0 0
    %3648 = vmatprep.mubr.bf16.mxu0 0
    %3649 = vmatmul.mubr.bf16.gmra.mrb[0].mxu0 0
    %v3650 = vpop.f32.mrb[0].mxu0
    %v3651 = vadd.f32 0.0, %v3650
    %v3652 = vpop.f32.mrb[0].mxu0
    %v3653 = vadd.f32 0.0, %v3652
    %v3654 = vpop.f32.mrb[0].mxu0
    %v3655 = vpop.f32.mrb[0].mxu0
    %3656 = vdwg.mxu0
    %3657 = vmatprep.subr.bf16.mxu0 %v3555
    %3658 = vmatpush1.bf16.msra.mxu0 %v3554
    %3659 = vmatprep.subr.bf16.mxu0 %v3559
    %3660 = vmatpush1.bf16.msra.mxu0 %v3558
    %3661 = vmatprep.subr.bf16.mxu0 %v3563
    %3662 = vmatpush1.bf16.msra.mxu0 %v3562
    %3663 = vmatprep.subr.bf16.mxu0 %v3567
    %3664 = vmatpush1.bf16.msra.mxu0 %v3566
    %3665 = vmatprep.subr.bf16.mxu0 %v3571
    %3666 = vmatpush1.bf16.msra.mxu0 %v3570
    %3667 = vmatprep.subr.bf16.mxu0 %v3575
    %3668 = vmatpush1.bf16.msra.mxu0 %v3574
    %3669 = vmatprep.subr.bf16.mxu0 %v3579
    %3670 = vmatpush1.bf16.msra.mxu0 %v3578
    %3671 = vmatprep.subr.bf16.mxu0 %v3583
    %3672 = vmatpush1.bf16.msra.mxu0 %v3582
    %3673 = vmatprep.subr.bf16.mxu0 0
    %3674 = vmatpush1.bf16.msra.mxu0 0
    %3675 = vmatprep.subr.bf16.mxu0 0
    %3676 = vmatpush1.bf16.msra.mxu0 0
    %3677 = vmatprep.subr.bf16.mxu0 0
    %3678 = vmatpush1.bf16.msra.mxu0 0
    %3679 = vmatprep.subr.bf16.mxu0 0
    %3680 = vmatpush1.bf16.msra.mxu0 0
    %3681 = vmatprep.subr.bf16.mxu0 0
    %3682 = vmatpush1.bf16.msra.mxu0 0
    %3683 = vmatprep.subr.bf16.mxu0 0
    %3684 = vmatpush1.bf16.msra.mxu0 0
    %3685 = vmatprep.subr.bf16.mxu0 0
    %3686 = vmatpush1.bf16.msra.mxu0 0
    %3687 = vmatprep.subr.bf16.mxu0 0
    %3688 = vmatpush1.bf16.msra.mxu0 0
    %3689 = vmatprep.mubr.bf16.mxu0 0
    %3690 = vmatmul.mubr.bf16.gmra.mrb[0].mxu0 0
    %v3691 = vpop.f32.mrb[0].mxu0
    %v3692 = vadd.f32 0.0, %v3691
    %v3693 = vpop.f32.mrb[0].mxu0
    %v3694 = vadd.f32 0.0, %v3693
    %v3695 = vpop.f32.mrb[0].mxu0
    %v3696 = vpop.f32.mrb[0].mxu0
    %3697 = vdwg.mxu0
    %v3698 = vadd.f32 %v3420, %v3651
    %v3699 = vadd.f32 %v3421, %v3653
    %v3700 = vadd.f32 %v3422, %v3692
    %v3701 = vadd.f32 %v3423, %v3694
    %v3702 = vxor.u32 %v3698, 2147483648
    %v3703 = vmul.f32 %v3702, 1.442695
    %v3704 = vpow.pop %v3703
    %v3705 = vadd.f32 %v3704, 1.0
    %v3706 = vrcp.pop %v3705
    %v3707 = vmul.f32 1.0, %v3706
    %v3708 = vxor.u32 %v3699, 2147483648
    %v3709 = vmul.f32 %v3708, 1.442695
    %v3710 = vpow.pop %v3709
    %v3711 = vadd.f32 %v3710, 1.0
    %v3712 = vrcp.pop %v3711
    %v3713 = vmul.f32 1.0, %v3712
    %v3714 = vtanh.pop %v3700
    %v3715 = vxor.u32 %v3701, 2147483648
    %v3716 = vmul.f32 %v3715, 1.442695
    %v3717 = vpow.pop %v3716
    %v3718 = vadd.f32 %v3717, 1.0
    %v3719 = vrcp.pop %v3718
    %v3720 = vmul.f32 1.0, %v3719
    %v3721 = vmul.f32 %v3713, 0.0
    %v3722 = vmul.f32 %v3707, %v3714
    %v3723 = vadd.f32 %v3721, %v3722
    %v3724 = vtanh.pop %v3723
    %v3725 = vmul.f32 %v3720, %v3724
    %s3726 = smul.addr %s830, 8
    %s3727 = scalar_lea.vmem [#allocation4], %s3726
    %v3728 = vld [vmem:[%s3727] sm:$0xff]
    %v3729 = vld [vmem:[%s3727 + $0x8] sm:$0xff]
    %v3730 = vld [vmem:[%s3727 + $0x10] sm:$0xff]
    %v3731 = vld [vmem:[%s3727 + $0x18] sm:$0xff]
    %v3732 = vpack.c.bf16 %v3725, %v3725
    %3733 = vmatprep.subr.bf16.mxu0 %v3553
    %3734 = vmatpush1.bf16.msra.mxu0 %v3552
    %3735 = vmatprep.subr.bf16.mxu0 %v3557
    %3736 = vmatpush1.bf16.msra.mxu0 %v3556
    %3737 = vmatprep.subr.bf16.mxu0 %v3561
    %3738 = vmatpush1.bf16.msra.mxu0 %v3560
    %3739 = vmatprep.subr.bf16.mxu0 %v3565
    %3740 = vmatpush1.bf16.msra.mxu0 %v3564
    %3741 = vmatprep.subr.bf16.mxu0 %v3569
    %3742 = vmatpush1.bf16.msra.mxu0 %v3568
    %3743 = vmatprep.subr.bf16.mxu0 %v3573
    %3744 = vmatpush1.bf16.msra.mxu0 %v3572
    %3745 = vmatprep.subr.bf16.mxu0 %v3577
    %3746 = vmatpush1.bf16.msra.mxu0 %v3576
    %3747 = vmatprep.subr.bf16.mxu0 %v3581
    %3748 = vmatpush1.bf16.msra.mxu0 %v3580
    %3749 = vmatprep.subr.bf16.mxu0 0
    %3750 = vmatpush1.bf16.msra.mxu0 0
    %3751 = vmatprep.subr.bf16.mxu0 0
    %3752 = vmatpush1.bf16.msra.mxu0 0
    %3753 = vmatprep.subr.bf16.mxu0 0
    %3754 = vmatpush1.bf16.msra.mxu0 0
    %3755 = vmatprep.subr.bf16.mxu0 0
    %3756 = vmatpush1.bf16.msra.mxu0 0
    %3757 = vmatprep.subr.bf16.mxu0 0
    %3758 = vmatpush1.bf16.msra.mxu0 0
    %3759 = vmatprep.subr.bf16.mxu0 0
    %3760 = vmatpush1.bf16.msra.mxu0 0
    %3761 = vmatprep.subr.bf16.mxu0 0
    %3762 = vmatpush1.bf16.msra.mxu0 0
    %3763 = vmatprep.subr.bf16.mxu0 0
    %3764 = vmatpush1.bf16.msra.mxu0 0
    %3765 = vmatprep.mubr.bf16.mxu0 0
    %3766 = vmatmul.mubr.bf16.gmra.mrb[0].mxu0 %v3732
    %v3767 = vpop.f32.mrb[0].mxu0
    %v3768 = vadd.f32 0.0, %v3767
    %v3769 = vpop.f32.mrb[0].mxu0
    %v3770 = vadd.f32 0.0, %v3769
    %v3771 = vpop.f32.mrb[0].mxu0
    %v3772 = vpop.f32.mrb[0].mxu0
    %3773 = vdwg.mxu0
    %3774 = vmatprep.subr.bf16.mxu0 %v3555
    %3775 = vmatpush1.bf16.msra.mxu0 %v3554
    %3776 = vmatprep.subr.bf16.mxu0 %v3559
    %3777 = vmatpush1.bf16.msra.mxu0 %v3558
    %3778 = vmatprep.subr.bf16.mxu0 %v3563
    %3779 = vmatpush1.bf16.msra.mxu0 %v3562
    %3780 = vmatprep.subr.bf16.mxu0 %v3567
    %3781 = vmatpush1.bf16.msra.mxu0 %v3566
    %3782 = vmatprep.subr.bf16.mxu0 %v3571
    %3783 = vmatpush1.bf16.msra.mxu0 %v3570
    %3784 = vmatprep.subr.bf16.mxu0 %v3575
    %3785 = vmatpush1.bf16.msra.mxu0 %v3574
    %3786 = vmatprep.subr.bf16.mxu0 %v3579
    %3787 = vmatpush1.bf16.msra.mxu0 %v3578
    %3788 = vmatprep.subr.bf16.mxu0 %v3583
    %3789 = vmatpush1.bf16.msra.mxu0 %v3582
    %3790 = vmatprep.subr.bf16.mxu0 0
    %3791 = vmatpush1.bf16.msra.mxu0 0
    %3792 = vmatprep.subr.bf16.mxu0 0
    %3793 = vmatpush1.bf16.msra.mxu0 0
    %3794 = vmatprep.subr.bf16.mxu0 0
    %3795 = vmatpush1.bf16.msra.mxu0 0
    %3796 = vmatprep.subr.bf16.mxu0 0
    %3797 = vmatpush1.bf16.msra.mxu0 0
    %3798 = vmatprep.subr.bf16.mxu0 0
    %3799 = vmatpush1.bf16.msra.mxu0 0
    %3800 = vmatprep.subr.bf16.mxu0 0
    %3801 = vmatpush1.bf16.msra.mxu0 0
    %3802 = vmatprep.subr.bf16.mxu0 0
    %3803 = vmatpush1.bf16.msra.mxu0 0
    %3804 = vmatprep.subr.bf16.mxu0 0
    %3805 = vmatpush1.bf16.msra.mxu0 0
    %3806 = vmatprep.mubr.bf16.mxu0 0
    %3807 = vmatmul.mubr.bf16.gmra.mrb[0].mxu0 %v3732
    %v3808 = vpop.f32.mrb[0].mxu0
    %v3809 = vadd.f32 0.0, %v3808
    %v3810 = vpop.f32.mrb[0].mxu0
    %v3811 = vadd.f32 0.0, %v3810
    %v3812 = vpop.f32.mrb[0].mxu0
    %v3813 = vpop.f32.mrb[0].mxu0
    %3814 = vdwg.mxu0
    %v3815 = vadd.f32 %v3728, %v3768
    %v3816 = vadd.f32 %v3729, %v3770
    %v3817 = vadd.f32 %v3730, %v3809
    %v3818 = vadd.f32 %v3731, %v3811
    %v3819 = vxor.u32 %v3815, 2147483648
    %v3820 = vmul.f32 %v3819, 1.442695
    %v3821 = vpow.pop %v3820
    %v3822 = vadd.f32 %v3821, 1.0
    %v3823 = vrcp.pop %v3822
    %v3824 = vmul.f32 1.0, %v3823
    %v3825 = vxor.u32 %v3816, 2147483648
    %v3826 = vmul.f32 %v3825, 1.442695
    %v3827 = vpow.pop %v3826
    %v3828 = vadd.f32 %v3827, 1.0
    %v3829 = vrcp.pop %v3828
    %v3830 = vmul.f32 1.0, %v3829
    %v3831 = vtanh.pop %v3817
    %v3832 = vxor.u32 %v3818, 2147483648
    %v3833 = vmul.f32 %v3832, 1.442695
    %v3834 = vpow.pop %v3833
    %v3835 = vadd.f32 %v3834, 1.0
    %v3836 = vrcp.pop %v3835
    %v3837 = vmul.f32 1.0, %v3836
    %v3838 = vmul.f32 %v3830, %v3723
    %v3839 = vmul.f32 %v3824, %v3831
    %v3840 = vadd.f32 %v3838, %v3839
    %v3841 = vtanh.pop %v3840
    %v3842 = vmul.f32 %v3837, %v3841
    %s3843 = smul.addr %s1142, 8
    %s3844 = scalar_lea.vmem [#allocation4], %s3843
    %v3845 = vld [vmem:[%s3844] sm:$0xff]
    %v3846 = vld [vmem:[%s3844 + $0x8] sm:$0xff]
    %v3847 = vld [vmem:[%s3844 + $0x10] sm:$0xff]
    %v3848 = vld [vmem:[%s3844 + $0x18] sm:$0xff]
    %v3849 = vpack.c.bf16 %v3842, %v3842
    %3850 = vmatprep.subr.bf16.mxu0 %v3553
    %3851 = vmatpush1.bf16.msra.mxu0 %v3552
    %3852 = vmatprep.subr.bf16.mxu0 %v3557
    %3853 = vmatpush1.bf16.msra.mxu0 %v3556
    %3854 = vmatprep.subr.bf16.mxu0 %v3561
    %3855 = vmatpush1.bf16.msra.mxu0 %v3560
    %3856 = vmatprep.subr.bf16.mxu0 %v3565
    %3857 = vmatpush1.bf16.msra.mxu0 %v3564
    %3858 = vmatprep.subr.bf16.mxu0 %v3569
    %3859 = vmatpush1.bf16.msra.mxu0 %v3568
    %3860 = vmatprep.subr.bf16.mxu0 %v3573
    %3861 = vmatpush1.bf16.msra.mxu0 %v3572
    %3862 = vmatprep.subr.bf16.mxu0 %v3577
    %3863 = vmatpush1.bf16.msra.mxu0 %v3576
    %3864 = vmatprep.subr.bf16.mxu0 %v3581
    %3865 = vmatpush1.bf16.msra.mxu0 %v3580
    %3866 = vmatprep.subr.bf16.mxu0 0
    %3867 = vmatpush1.bf16.msra.mxu0 0
    %3868 = vmatprep.subr.bf16.mxu0 0
    %3869 = vmatpush1.bf16.msra.mxu0 0
    %3870 = vmatprep.subr.bf16.mxu0 0
    %3871 = vmatpush1.bf16.msra.mxu0 0
    %3872 = vmatprep.subr.bf16.mxu0 0
    %3873 = vmatpush1.bf16.msra.mxu0 0
    %3874 = vmatprep.subr.bf16.mxu0 0
    %3875 = vmatpush1.bf16.msra.mxu0 0
    %3876 = vmatprep.subr.bf16.mxu0 0
    %3877 = vmatpush1.bf16.msra.mxu0 0
    %3878 = vmatprep.subr.bf16.mxu0 0
    %3879 = vmatpush1.bf16.msra.mxu0 0
    %3880 = vmatprep.subr.bf16.mxu0 0
    %3881 = vmatpush1.bf16.msra.mxu0 0
    %3882 = vmatprep.mubr.bf16.mxu0 0
    %3883 = vmatmul.mubr.bf16.gmra.mrb[0].mxu0 %v3849
    %v3884 = vpop.f32.mrb[0].mxu0
    %v3885 = vadd.f32 0.0, %v3884
    %v3886 = vpop.f32.mrb[0].mxu0
    %v3887 = vadd.f32 0.0, %v3886
    %v3888 = vpop.f32.mrb[0].mxu0
    %v3889 = vpop.f32.mrb[0].mxu0
    %3890 = vdwg.mxu0
    %3891 = vmatprep.subr.bf16.mxu0 %v3555
    %3892 = vmatpush1.bf16.msra.mxu0 %v3554
    %3893 = vmatprep.subr.bf16.mxu0 %v3559
    %3894 = vmatpush1.bf16.msra.mxu0 %v3558
    %3895 = vmatprep.subr.bf16.mxu0 %v3563
    %3896 = vmatpush1.bf16.msra.mxu0 %v3562
    %3897 = vmatprep.subr.bf16.mxu0 %v3567
    %3898 = vmatpush1.bf16.msra.mxu0 %v3566
    %3899 = vmatprep.subr.bf16.mxu0 %v3571
    %3900 = vmatpush1.bf16.msra.mxu0 %v3570
    %3901 = vmatprep.subr.bf16.mxu0 %v3575
    %3902 = vmatpush1.bf16.msra.mxu0 %v3574
    %3903 = vmatprep.subr.bf16.mxu0 %v3579
    %3904 = vmatpush1.bf16.msra.mxu0 %v3578
    %3905 = vmatprep.subr.bf16.mxu0 %v3583
    %3906 = vmatpush1.bf16.msra.mxu0 %v3582
    %3907 = vmatprep.subr.bf16.mxu0 0
    %3908 = vmatpush1.bf16.msra.mxu0 0
    %3909 = vmatprep.subr.bf16.mxu0 0
    %3910 = vmatpush1.bf16.msra.mxu0 0
    %3911 = vmatprep.subr.bf16.mxu0 0
    %3912 = vmatpush1.bf16.msra.mxu0 0
    %3913 = vmatprep.subr.bf16.mxu0 0
    %3914 = vmatpush1.bf16.msra.mxu0 0
    %3915 = vmatprep.subr.bf16.mxu0 0
    %3916 = vmatpush1.bf16.msra.mxu0 0
    %3917 = vmatprep.subr.bf16.mxu0 0
    %3918 = vmatpush1.bf16.msra.mxu0 0
    %3919 = vmatprep.subr.bf16.mxu0 0
    %3920 = vmatpush1.bf16.msra.mxu0 0
    %3921 = vmatprep.subr.bf16.mxu0 0
    %3922 = vmatpush1.bf16.msra.mxu0 0
    %3923 = vmatprep.mubr.bf16.mxu0 0
    %3924 = vmatmul.mubr.bf16.gmra.mrb[0].mxu0 %v3849
    %v3925 = vpop.f32.mrb[0].mxu0
    %v3926 = vadd.f32 0.0, %v3925
    %v3927 = vpop.f32.mrb[0].mxu0
    %v3928 = vadd.f32 0.0, %v3927
    %v3929 = vpop.f32.mrb[0].mxu0
    %v3930 = vpop.f32.mrb[0].mxu0
    %3931 = vdwg.mxu0
    %v3932 = vadd.f32 %v3845, %v3885
    %v3933 = vadd.f32 %v3846, %v3887
    %v3934 = vadd.f32 %v3847, %v3926
    %v3935 = vadd.f32 %v3848, %v3928
    %v3936 = vxor.u32 %v3932, 2147483648
    %v3937 = vmul.f32 %v3936, 1.442695
    %v3938 = vpow.pop %v3937
    %v3939 = vadd.f32 %v3938, 1.0
    %v3940 = vrcp.pop %v3939
    %v3941 = vmul.f32 1.0, %v3940
    %v3942 = vxor.u32 %v3933, 2147483648
    %v3943 = vmul.f32 %v3942, 1.442695
    %v3944 = vpow.pop %v3943
    %v3945 = vadd.f32 %v3944, 1.0
    %v3946 = vrcp.pop %v3945
    %v3947 = vmul.f32 1.0, %v3946
    %v3948 = vtanh.pop %v3934
    %v3949 = vxor.u32 %v3935, 2147483648
    %v3950 = vmul.f32 %v3949, 1.442695
    %v3951 = vpow.pop %v3950
    %v3952 = vadd.f32 %v3951, 1.0
    %v3953 = vrcp.pop %v3952
    %v3954 = vmul.f32 1.0, %v3953
    %v3955 = vmul.f32 %v3947, %v3840
    %v3956 = vmul.f32 %v3941, %v3948
    %v3957 = vadd.f32 %v3955, %v3956
    %v3958 = vtanh.pop %v3957
    %v3959 = vmul.f32 %v3954, %v3958
    %s3960 = smul.addr %s1454, 8
    %s3961 = scalar_lea.vmem [#allocation4], %s3960
    %v3962 = vld [vmem:[%s3961] sm:$0xff]
    %v3963 = vld [vmem:[%s3961 + $0x8] sm:$0xff]
    %v3964 = vld [vmem:[%s3961 + $0x10] sm:$0xff]
    %v3965 = vld [vmem:[%s3961 + $0x18] sm:$0xff]
    %v3966 = vpack.c.bf16 %v3959, %v3959
    %3967 = vmatprep.subr.bf16.mxu0 %v3553
    %3968 = vmatpush1.bf16.msra.mxu0 %v3552
    %3969 = vmatprep.subr.bf16.mxu0 %v3557
    %3970 = vmatpush1.bf16.msra.mxu0 %v3556
    %3971 = vmatprep.subr.bf16.mxu0 %v3561
    %3972 = vmatpush1.bf16.msra.mxu0 %v3560
    %3973 = vmatprep.subr.bf16.mxu0 %v3565
    %3974 = vmatpush1.bf16.msra.mxu0 %v3564
    %3975 = vmatprep.subr.bf16.mxu0 %v3569
    %3976 = vmatpush1.bf16.msra.mxu0 %v3568
    %3977 = vmatprep.subr.bf16.mxu0 %v3573
    %3978 = vmatpush1.bf16.msra.mxu0 %v3572
    %3979 = vmatprep.subr.bf16.mxu0 %v3577
    %3980 = vmatpush1.bf16.msra.mxu0 %v3576
    %3981 = vmatprep.subr.bf16.mxu0 %v3581
    %3982 = vmatpush1.bf16.msra.mxu0 %v3580
    %3983 = vmatprep.subr.bf16.mxu0 0
    %3984 = vmatpush1.bf16.msra.mxu0 0
    %3985 = vmatprep.subr.bf16.mxu0 0
    %3986 = vmatpush1.bf16.msra.mxu0 0
    %3987 = vmatprep.subr.bf16.mxu0 0
    %3988 = vmatpush1.bf16.msra.mxu0 0
    %3989 = vmatprep.subr.bf16.mxu0 0
    %3990 = vmatpush1.bf16.msra.mxu0 0
    %3991 = vmatprep.subr.bf16.mxu0 0
    %3992 = vmatpush1.bf16.msra.mxu0 0
    %3993 = vmatprep.subr.bf16.mxu0 0
    %3994 = vmatpush1.bf16.msra.mxu0 0
    %3995 = vmatprep.subr.bf16.mxu0 0
    %3996 = vmatpush1.bf16.msra.mxu0 0
    %3997 = vmatprep.subr.bf16.mxu0 0
    %3998 = vmatpush1.bf16.msra.mxu0 0
    %3999 = vmatprep.mubr.bf16.mxu0 0
    %4000 = vmatmul.mubr.bf16.gmra.mrb[0].mxu0 %v3966
    %v4001 = vpop.f32.mrb[0].mxu0
    %v4002 = vadd.f32 0.0, %v4001
    %v4003 = vpop.f32.mrb[0].mxu0
    %v4004 = vadd.f32 0.0, %v4003
    %v4005 = vpop.f32.mrb[0].mxu0
    %v4006 = vpop.f32.mrb[0].mxu0
    %4007 = vdwg.mxu0
    %4008 = vmatprep.subr.bf16.mxu0 %v3555
    %4009 = vmatpush1.bf16.msra.mxu0 %v3554
    %4010 = vmatprep.subr.bf16.mxu0 %v3559
    %4011 = vmatpush1.bf16.msra.mxu0 %v3558
    %4012 = vmatprep.subr.bf16.mxu0 %v3563
    %4013 = vmatpush1.bf16.msra.mxu0 %v3562
    %4014 = vmatprep.subr.bf16.mxu0 %v3567
    %4015 = vmatpush1.bf16.msra.mxu0 %v3566
    %4016 = vmatprep.subr.bf16.mxu0 %v3571
    %4017 = vmatpush1.bf16.msra.mxu0 %v3570
    %4018 = vmatprep.subr.bf16.mxu0 %v3575
    %4019 = vmatpush1.bf16.msra.mxu0 %v3574
    %4020 = vmatprep.subr.bf16.mxu0 %v3579
    %4021 = vmatpush1.bf16.msra.mxu0 %v3578
    %4022 = vmatprep.subr.bf16.mxu0 %v3583
    %4023 = vmatpush1.bf16.msra.mxu0 %v3582
    %4024 = vmatprep.subr.bf16.mxu0 0
    %4025 = vmatpush1.bf16.msra.mxu0 0
    %4026 = vmatprep.subr.bf16.mxu0 0
    %4027 = vmatpush1.bf16.msra.mxu0 0
    %4028 = vmatprep.subr.bf16.mxu0 0
    %4029 = vmatpush1.bf16.msra.mxu0 0
    %4030 = vmatprep.subr.bf16.mxu0 0
    %4031 = vmatpush1.bf16.msra.mxu0 0
    %4032 = vmatprep.subr.bf16.mxu0 0
    %4033 = vmatpush1.bf16.msra.mxu0 0
    %4034 = vmatprep.subr.bf16.mxu0 0
    %4035 = vmatpush1.bf16.msra.mxu0 0
    %4036 = vmatprep.subr.bf16.mxu0 0
    %4037 = vmatpush1.bf16.msra.mxu0 0
    %4038 = vmatprep.subr.bf16.mxu0 0
    %4039 = vmatpush1.bf16.msra.mxu0 0
    %4040 = vmatprep.mubr.bf16.mxu0 0
    %4041 = vmatmul.mubr.bf16.gmra.mrb[0].mxu0 %v3966
    %v4042 = vpop.f32.mrb[0].mxu0
    %v4043 = vadd.f32 0.0, %v4042
    %v4044 = vpop.f32.mrb[0].mxu0
    %v4045 = vadd.f32 0.0, %v4044
    %v4046 = vpop.f32.mrb[0].mxu0
    %v4047 = vpop.f32.mrb[0].mxu0
    %4048 = vdwg.mxu0
    %v4049 = vadd.f32 %v3962, %v4002
    %v4050 = vadd.f32 %v3963, %v4004
    %v4051 = vadd.f32 %v3964, %v4043
    %v4052 = vadd.f32 %v3965, %v4045
    %v4053 = vxor.u32 %v4049, 2147483648
    %v4054 = vmul.f32 %v4053, 1.442695
    %v4055 = vpow.pop %v4054
    %v4056 = vadd.f32 %v4055, 1.0
    %v4057 = vrcp.pop %v4056
    %v4058 = vmul.f32 1.0, %v4057
    %v4059 = vxor.u32 %v4050, 2147483648
    %v4060 = vmul.f32 %v4059, 1.442695
    %v4061 = vpow.pop %v4060
    %v4062 = vadd.f32 %v4061, 1.0
    %v4063 = vrcp.pop %v4062
    %v4064 = vmul.f32 1.0, %v4063
    %v4065 = vtanh.pop %v4051
    %v4066 = vxor.u32 %v4052, 2147483648
    %v4067 = vmul.f32 %v4066, 1.442695
    %v4068 = vpow.pop %v4067
    %v4069 = vadd.f32 %v4068, 1.0
    %v4070 = vrcp.pop %v4069
    %v4071 = vmul.f32 1.0, %v4070
    %v4072 = vmul.f32 %v4064, %v3957
    %v4073 = vmul.f32 %v4058, %v4065
    %v4074 = vadd.f32 %v4072, %v4073
    %v4075 = vtanh.pop %v4074
    %v4076 = vmul.f32 %v4071, %v4075
    %s4077 = smul.addr %s1766, 8
    %s4078 = scalar_lea.vmem [#allocation4], %s4077
    %v4079 = vld [vmem:[%s4078] sm:$0xff]
    %v4080 = vld [vmem:[%s4078 + $0x8] sm:$0xff]
    %v4081 = vld [vmem:[%s4078 + $0x10] sm:$0xff]
    %v4082 = vld [vmem:[%s4078 + $0x18] sm:$0xff]
    %v4083 = vpack.c.bf16 %v4076, %v4076
    %4084 = vmatprep.subr.bf16.mxu0 %v3553
    %4085 = vmatpush1.bf16.msra.mxu0 %v3552
    %4086 = vmatprep.subr.bf16.mxu0 %v3557
    %4087 = vmatpush1.bf16.msra.mxu0 %v3556
    %4088 = vmatprep.subr.bf16.mxu0 %v3561
    %4089 = vmatpush1.bf16.msra.mxu0 %v3560
    %4090 = vmatprep.subr.bf16.mxu0 %v3565
    %4091 = vmatpush1.bf16.msra.mxu0 %v3564
    %4092 = vmatprep.subr.bf16.mxu0 %v3569
    %4093 = vmatpush1.bf16.msra.mxu0 %v3568
    %4094 = vmatprep.subr.bf16.mxu0 %v3573
    %4095 = vmatpush1.bf16.msra.mxu0 %v3572
    %4096 = vmatprep.subr.bf16.mxu0 %v3577
    %4097 = vmatpush1.bf16.msra.mxu0 %v3576
    %4098 = vmatprep.subr.bf16.mxu0 %v3581
    %4099 = vmatpush1.bf16.msra.mxu0 %v3580
    %4100 = vmatprep.subr.bf16.mxu0 0
    %4101 = vmatpush1.bf16.msra.mxu0 0
    %4102 = vmatprep.subr.bf16.mxu0 0
    %4103 = vmatpush1.bf16.msra.mxu0 0
    %4104 = vmatprep.subr.bf16.mxu0 0
    %4105 = vmatpush1.bf16.msra.mxu0 0
    %4106 = vmatprep.subr.bf16.mxu0 0
    %4107 = vmatpush1.bf16.msra.mxu0 0
    %4108 = vmatprep.subr.bf16.mxu0 0
    %4109 = vmatpush1.bf16.msra.mxu0 0
    %4110 = vmatprep.subr.bf16.mxu0 0
    %4111 = vmatpush1.bf16.msra.mxu0 0
    %4112 = vmatprep.subr.bf16.mxu0 0
    %4113 = vmatpush1.bf16.msra.mxu0 0
    %4114 = vmatprep.subr.bf16.mxu0 0
    %4115 = vmatpush1.bf16.msra.mxu0 0
    %4116 = vmatprep.mubr.bf16.mxu0 0
    %4117 = vmatmul.mubr.bf16.gmra.mrb[0].mxu0 %v4083
    %v4118 = vpop.f32.mrb[0].mxu0
    %v4119 = vadd.f32 0.0, %v4118
    %v4120 = vpop.f32.mrb[0].mxu0
    %v4121 = vadd.f32 0.0, %v4120
    %v4122 = vpop.f32.mrb[0].mxu0
    %v4123 = vpop.f32.mrb[0].mxu0
    %4124 = vdwg.mxu0
    %4125 = vmatprep.subr.bf16.mxu0 %v3555
    %4126 = vmatpush1.bf16.msra.mxu0 %v3554
    %4127 = vmatprep.subr.bf16.mxu0 %v3559
    %4128 = vmatpush1.bf16.msra.mxu0 %v3558
    %4129 = vmatprep.subr.bf16.mxu0 %v3563
    %4130 = vmatpush1.bf16.msra.mxu0 %v3562
    %4131 = vmatprep.subr.bf16.mxu0 %v3567
    %4132 = vmatpush1.bf16.msra.mxu0 %v3566
    %4133 = vmatprep.subr.bf16.mxu0 %v3571
    %4134 = vmatpush1.bf16.msra.mxu0 %v3570
    %4135 = vmatprep.subr.bf16.mxu0 %v3575
    %4136 = vmatpush1.bf16.msra.mxu0 %v3574
    %4137 = vmatprep.subr.bf16.mxu0 %v3579
    %4138 = vmatpush1.bf16.msra.mxu0 %v3578
    %4139 = vmatprep.subr.bf16.mxu0 %v3583
    %4140 = vmatpush1.bf16.msra.mxu0 %v3582
    %4141 = vmatprep.subr.bf16.mxu0 0
    %4142 = vmatpush1.bf16.msra.mxu0 0
    %4143 = vmatprep.subr.bf16.mxu0 0
    %4144 = vmatpush1.bf16.msra.mxu0 0
    %4145 = vmatprep.subr.bf16.mxu0 0
    %4146 = vmatpush1.bf16.msra.mxu0 0
    %4147 = vmatprep.subr.bf16.mxu0 0
    %4148 = vmatpush1.bf16.msra.mxu0 0
    %4149 = vmatprep.subr.bf16.mxu0 0
    %4150 = vmatpush1.bf16.msra.mxu0 0
    %4151 = vmatprep.subr.bf16.mxu0 0
    %4152 = vmatpush1.bf16.msra.mxu0 0
    %4153 = vmatprep.subr.bf16.mxu0 0
    %4154 = vmatpush1.bf16.msra.mxu0 0
    %4155 = vmatprep.subr.bf16.mxu0 0
    %4156 = vmatpush1.bf16.msra.mxu0 0
    %4157 = vmatprep.mubr.bf16.mxu0 0
    %4158 = vmatmul.mubr.bf16.gmra.mrb[0].mxu0 %v4083
    %v4159 = vpop.f32.mrb[0].mxu0
    %v4160 = vadd.f32 0.0, %v4159
    %v4161 = vpop.f32.mrb[0].mxu0
    %v4162 = vadd.f32 0.0, %v4161
    %v4163 = vpop.f32.mrb[0].mxu0
    %v4164 = vpop.f32.mrb[0].mxu0
    %4165 = vdwg.mxu0
    %v4166 = vadd.f32 %v4079, %v4119
    %v4167 = vadd.f32 %v4080, %v4121
    %v4168 = vadd.f32 %v4081, %v4160
    %v4169 = vadd.f32 %v4082, %v4162
    %v4170 = vxor.u32 %v4166, 2147483648
    %v4171 = vmul.f32 %v4170, 1.442695
    %v4172 = vpow.pop %v4171
    %v4173 = vadd.f32 %v4172, 1.0
    %v4174 = vrcp.pop %v4173
    %v4175 = vmul.f32 1.0, %v4174
    %v4176 = vxor.u32 %v4167, 2147483648
    %v4177 = vmul.f32 %v4176, 1.442695
    %v4178 = vpow.pop %v4177
    %v4179 = vadd.f32 %v4178, 1.0
    %v4180 = vrcp.pop %v4179
    %v4181 = vmul.f32 1.0, %v4180
    %v4182 = vtanh.pop %v4168
    %v4183 = vxor.u32 %v4169, 2147483648
    %v4184 = vmul.f32 %v4183, 1.442695
    %v4185 = vpow.pop %v4184
    %v4186 = vadd.f32 %v4185, 1.0
    %v4187 = vrcp.pop %v4186
    %v4188 = vmul.f32 1.0, %v4187
    %v4189 = vmul.f32 %v4181, %v4074
    %v4190 = vmul.f32 %v4175, %v4182
    %v4191 = vadd.f32 %v4189, %v4190
    %v4192 = vtanh.pop %v4191
    %v4193 = vmul.f32 %v4188, %v4192
    %s4194 = smul.addr %s2078, 8
    %s4195 = scalar_lea.vmem [#allocation4], %s4194
    %v4196 = vld [vmem:[%s4195] sm:$0xff]
    %v4197 = vld [vmem:[%s4195 + $0x8] sm:$0xff]
    %v4198 = vld [vmem:[%s4195 + $0x10] sm:$0xff]
    %v4199 = vld [vmem:[%s4195 + $0x18] sm:$0xff]
    %v4200 = vpack.c.bf16 %v4193, %v4193
    %4201 = vmatprep.subr.bf16.mxu0 %v3553
    %4202 = vmatpush1.bf16.msra.mxu0 %v3552
    %4203 = vmatprep.subr.bf16.mxu0 %v3557
    %4204 = vmatpush1.bf16.msra.mxu0 %v3556
    %4205 = vmatprep.subr.bf16.mxu0 %v3561
    %4206 = vmatpush1.bf16.msra.mxu0 %v3560
    %4207 = vmatprep.subr.bf16.mxu0 %v3565
    %4208 = vmatpush1.bf16.msra.mxu0 %v3564
    %4209 = vmatprep.subr.bf16.mxu0 %v3569
    %4210 = vmatpush1.bf16.msra.mxu0 %v3568
    %4211 = vmatprep.subr.bf16.mxu0 %v3573
    %4212 = vmatpush1.bf16.msra.mxu0 %v3572
    %4213 = vmatprep.subr.bf16.mxu0 %v3577
    %4214 = vmatpush1.bf16.msra.mxu0 %v3576
    %4215 = vmatprep.subr.bf16.mxu0 %v3581
    %4216 = vmatpush1.bf16.msra.mxu0 %v3580
    %4217 = vmatprep.subr.bf16.mxu0 0
    %4218 = vmatpush1.bf16.msra.mxu0 0
    %4219 = vmatprep.subr.bf16.mxu0 0
    %4220 = vmatpush1.bf16.msra.mxu0 0
    %4221 = vmatprep.subr.bf16.mxu0 0
    %4222 = vmatpush1.bf16.msra.mxu0 0
    %4223 = vmatprep.subr.bf16.mxu0 0
    %4224 = vmatpush1.bf16.msra.mxu0 0
    %4225 = vmatprep.subr.bf16.mxu0 0
    %4226 = vmatpush1.bf16.msra.mxu0 0
    %4227 = vmatprep.subr.bf16.mxu0 0
    %4228 = vmatpush1.bf16.msra.mxu0 0
    %4229 = vmatprep.subr.bf16.mxu0 0
    %4230 = vmatpush1.bf16.msra.mxu0 0
    %4231 = vmatprep.subr.bf16.mxu0 0
    %4232 = vmatpush1.bf16.msra.mxu0 0
    %4233 = vmatprep.mubr.bf16.mxu0 0
    %4234 = vmatmul.mubr.bf16.gmra.mrb[0].mxu0 %v4200
    %v4235 = vpop.f32.mrb[0].mxu0
    %v4236 = vadd.f32 0.0, %v4235
    %v4237 = vpop.f32.mrb[0].mxu0
    %v4238 = vadd.f32 0.0, %v4237
    %v4239 = vpop.f32.mrb[0].mxu0
    %v4240 = vpop.f32.mrb[0].mxu0
    %4241 = vdwg.mxu0
    %4242 = vmatprep.subr.bf16.mxu0 %v3555
    %4243 = vmatpush1.bf16.msra.mxu0 %v3554
    %4244 = vmatprep.subr.bf16.mxu0 %v3559
    %4245 = vmatpush1.bf16.msra.mxu0 %v3558
    %4246 = vmatprep.subr.bf16.mxu0 %v3563
    %4247 = vmatpush1.bf16.msra.mxu0 %v3562
    %4248 = vmatprep.subr.bf16.mxu0 %v3567
    %4249 = vmatpush1.bf16.msra.mxu0 %v3566
    %4250 = vmatprep.subr.bf16.mxu0 %v3571
    %4251 = vmatpush1.bf16.msra.mxu0 %v3570
    %4252 = vmatprep.subr.bf16.mxu0 %v3575
    %4253 = vmatpush1.bf16.msra.mxu0 %v3574
    %4254 = vmatprep.subr.bf16.mxu0 %v3579
    %4255 = vmatpush1.bf16.msra.mxu0 %v3578
    %4256 = vmatprep.subr.bf16.mxu0 %v3583
    %4257 = vmatpush1.bf16.msra.mxu0 %v3582
    %4258 = vmatprep.subr.bf16.mxu0 0
    %4259 = vmatpush1.bf16.msra.mxu0 0
    %4260 = vmatprep.subr.bf16.mxu0 0
    %4261 = vmatpush1.bf16.msra.mxu0 0
    %4262 = vmatprep.subr.bf16.mxu0 0
    %4263 = vmatpush1.bf16.msra.mxu0 0
    %4264 = vmatprep.subr.bf16.mxu0 0
    %4265 = vmatpush1.bf16.msra.mxu0 0
    %4266 = vmatprep.subr.bf16.mxu0 0
    %4267 = vmatpush1.bf16.msra.mxu0 0
    %4268 = vmatprep.subr.bf16.mxu0 0
    %4269 = vmatpush1.bf16.msra.mxu0 0
    %4270 = vmatprep.subr.bf16.mxu0 0
    %4271 = vmatpush1.bf16.msra.mxu0 0
    %4272 = vmatprep.subr.bf16.mxu0 0
    %4273 = vmatpush1.bf16.msra.mxu0 0
    %4274 = vmatprep.mubr.bf16.mxu0 0
    %4275 = vmatmul.mubr.bf16.gmra.mrb[0].mxu0 %v4200
    %v4276 = vpop.f32.mrb[0].mxu0
    %v4277 = vadd.f32 0.0, %v4276
    %v4278 = vpop.f32.mrb[0].mxu0
    %v4279 = vadd.f32 0.0, %v4278
    %v4280 = vpop.f32.mrb[0].mxu0
    %v4281 = vpop.f32.mrb[0].mxu0
    %4282 = vdwg.mxu0
    %v4283 = vadd.f32 %v4196, %v4236
    %v4284 = vadd.f32 %v4197, %v4238
    %v4285 = vadd.f32 %v4198, %v4277
    %v4286 = vadd.f32 %v4199, %v4279
    %v4287 = vxor.u32 %v4283, 2147483648
    %v4288 = vmul.f32 %v4287, 1.442695
    %v4289 = vpow.pop %v4288
    %v4290 = vadd.f32 %v4289, 1.0
    %v4291 = vrcp.pop %v4290
    %v4292 = vmul.f32 1.0, %v4291
    %v4293 = vxor.u32 %v4284, 2147483648
    %v4294 = vmul.f32 %v4293, 1.442695
    %v4295 = vpow.pop %v4294
    %v4296 = vadd.f32 %v4295, 1.0
    %v4297 = vrcp.pop %v4296
    %v4298 = vmul.f32 1.0, %v4297
    %v4299 = vtanh.pop %v4285
    %v4300 = vxor.u32 %v4286, 2147483648
    %v4301 = vmul.f32 %v4300, 1.442695
    %v4302 = vpow.pop %v4301
    %v4303 = vadd.f32 %v4302, 1.0
    %v4304 = vrcp.pop %v4303
    %v4305 = vmul.f32 1.0, %v4304
    %v4306 = vmul.f32 %v4298, %v4191
    %v4307 = vmul.f32 %v4292, %v4299
    %v4308 = vadd.f32 %v4306, %v4307
    %v4309 = vtanh.pop %v4308
    %v4310 = vmul.f32 %v4305, %v4309
    %s4311 = smul.addr %s2390, 8
    %s4312 = scalar_lea.vmem [#allocation4], %s4311
    %v4313 = vld [vmem:[%s4312] sm:$0xff]
    %v4314 = vld [vmem:[%s4312 + $0x8] sm:$0xff]
    %v4315 = vld [vmem:[%s4312 + $0x10] sm:$0xff]
    %v4316 = vld [vmem:[%s4312 + $0x18] sm:$0xff]
    %v4317 = vpack.c.bf16 %v4310, %v4310
    %4318 = vmatprep.subr.bf16.mxu0 %v3553
    %4319 = vmatpush1.bf16.msra.mxu0 %v3552
    %4320 = vmatprep.subr.bf16.mxu0 %v3557
    %4321 = vmatpush1.bf16.msra.mxu0 %v3556
    %4322 = vmatprep.subr.bf16.mxu0 %v3561
    %4323 = vmatpush1.bf16.msra.mxu0 %v3560
    %4324 = vmatprep.subr.bf16.mxu0 %v3565
    %4325 = vmatpush1.bf16.msra.mxu0 %v3564
    %4326 = vmatprep.subr.bf16.mxu0 %v3569
    %4327 = vmatpush1.bf16.msra.mxu0 %v3568
    %4328 = vmatprep.subr.bf16.mxu0 %v3573
    %4329 = vmatpush1.bf16.msra.mxu0 %v3572
    %4330 = vmatprep.subr.bf16.mxu0 %v3577
    %4331 = vmatpush1.bf16.msra.mxu0 %v3576
    %4332 = vmatprep.subr.bf16.mxu0 %v3581
    %4333 = vmatpush1.bf16.msra.mxu0 %v3580
    %4334 = vmatprep.subr.bf16.mxu0 0
    %4335 = vmatpush1.bf16.msra.mxu0 0
    %4336 = vmatprep.subr.bf16.mxu0 0
    %4337 = vmatpush1.bf16.msra.mxu0 0
    %4338 = vmatprep.subr.bf16.mxu0 0
    %4339 = vmatpush1.bf16.msra.mxu0 0
    %4340 = vmatprep.subr.bf16.mxu0 0
    %4341 = vmatpush1.bf16.msra.mxu0 0
    %4342 = vmatprep.subr.bf16.mxu0 0
    %4343 = vmatpush1.bf16.msra.mxu0 0
    %4344 = vmatprep.subr.bf16.mxu0 0
    %4345 = vmatpush1.bf16.msra.mxu0 0
    %4346 = vmatprep.subr.bf16.mxu0 0
    %4347 = vmatpush1.bf16.msra.mxu0 0
    %4348 = vmatprep.subr.bf16.mxu0 0
    %4349 = vmatpush1.bf16.msra.mxu0 0
    %4350 = vmatprep.mubr.bf16.mxu0 0
    %4351 = vmatmul.mubr.bf16.gmra.mrb[0].mxu0 %v4317
    %v4352 = vpop.f32.mrb[0].mxu0
    %v4353 = vadd.f32 0.0, %v4352
    %v4354 = vpop.f32.mrb[0].mxu0
    %v4355 = vadd.f32 0.0, %v4354
    %v4356 = vpop.f32.mrb[0].mxu0
    %v4357 = vpop.f32.mrb[0].mxu0
    %4358 = vdwg.mxu0
    %4359 = vmatprep.subr.bf16.mxu0 %v3555
    %4360 = vmatpush1.bf16.msra.mxu0 %v3554
    %4361 = vmatprep.subr.bf16.mxu0 %v3559
    %4362 = vmatpush1.bf16.msra.mxu0 %v3558
    %4363 = vmatprep.subr.bf16.mxu0 %v3563
    %4364 = vmatpush1.bf16.msra.mxu0 %v3562
    %4365 = vmatprep.subr.bf16.mxu0 %v3567
    %4366 = vmatpush1.bf16.msra.mxu0 %v3566
    %4367 = vmatprep.subr.bf16.mxu0 %v3571
    %4368 = vmatpush1.bf16.msra.mxu0 %v3570
    %4369 = vmatprep.subr.bf16.mxu0 %v3575
    %4370 = vmatpush1.bf16.msra.mxu0 %v3574
    %4371 = vmatprep.subr.bf16.mxu0 %v3579
    %4372 = vmatpush1.bf16.msra.mxu0 %v3578
    %4373 = vmatprep.subr.bf16.mxu0 %v3583
    %4374 = vmatpush1.bf16.msra.mxu0 %v3582
    %4375 = vmatprep.subr.bf16.mxu0 0
    %4376 = vmatpush1.bf16.msra.mxu0 0
    %4377 = vmatprep.subr.bf16.mxu0 0
    %4378 = vmatpush1.bf16.msra.mxu0 0
    %4379 = vmatprep.subr.bf16.mxu0 0
    %4380 = vmatpush1.bf16.msra.mxu0 0
    %4381 = vmatprep.subr.bf16.mxu0 0
    %4382 = vmatpush1.bf16.msra.mxu0 0
    %4383 = vmatprep.subr.bf16.mxu0 0
    %4384 = vmatpush1.bf16.msra.mxu0 0
    %4385 = vmatprep.subr.bf16.mxu0 0
    %4386 = vmatpush1.bf16.msra.mxu0 0
    %4387 = vmatprep.subr.bf16.mxu0 0
    %4388 = vmatpush1.bf16.msra.mxu0 0
    %4389 = vmatprep.subr.bf16.mxu0 0
    %4390 = vmatpush1.bf16.msra.mxu0 0
    %4391 = vmatprep.mubr.bf16.mxu0 0
    %4392 = vmatmul.mubr.bf16.gmra.mrb[0].mxu0 %v4317
    %v4393 = vpop.f32.mrb[0].mxu0
    %v4394 = vadd.f32 0.0, %v4393
    %v4395 = vpop.f32.mrb[0].mxu0
    %v4396 = vadd.f32 0.0, %v4395
    %v4397 = vpop.f32.mrb[0].mxu0
    %v4398 = vpop.f32.mrb[0].mxu0
    %4399 = vdwg.mxu0
    %v4400 = vadd.f32 %v4313, %v4353
    %v4401 = vadd.f32 %v4314, %v4355
    %v4402 = vadd.f32 %v4315, %v4394
    %v4403 = vadd.f32 %v4316, %v4396
    %v4404 = vxor.u32 %v4400, 2147483648
    %v4405 = vmul.f32 %v4404, 1.442695
    %v4406 = vpow.pop %v4405
    %v4407 = vadd.f32 %v4406, 1.0
    %v4408 = vrcp.pop %v4407
    %v4409 = vmul.f32 1.0, %v4408
    %v4410 = vxor.u32 %v4401, 2147483648
    %v4411 = vmul.f32 %v4410, 1.442695
    %v4412 = vpow.pop %v4411
    %v4413 = vadd.f32 %v4412, 1.0
    %v4414 = vrcp.pop %v4413
    %v4415 = vmul.f32 1.0, %v4414
    %v4416 = vtanh.pop %v4402
    %v4417 = vxor.u32 %v4403, 2147483648
    %v4418 = vmul.f32 %v4417, 1.442695
    %v4419 = vpow.pop %v4418
    %v4420 = vadd.f32 %v4419, 1.0
    %v4421 = vrcp.pop %v4420
    %v4422 = vmul.f32 1.0, %v4421
    %v4423 = vmul.f32 %v4415, %v4308
    %v4424 = vmul.f32 %v4409, %v4416
    %v4425 = vadd.f32 %v4423, %v4424
    %v4426 = vtanh.pop %v4425
    %v4427 = vmul.f32 %v4422, %v4426
    %s4428 = smul.addr %s2702, 8
    %s4429 = scalar_lea.vmem [#allocation4], %s4428
    %v4430 = vld [vmem:[%s4429] sm:$0xff]
    %v4431 = vld [vmem:[%s4429 + $0x8] sm:$0xff]
    %v4432 = vld [vmem:[%s4429 + $0x10] sm:$0xff]
    %v4433 = vld [vmem:[%s4429 + $0x18] sm:$0xff]
    %v4434 = vpack.c.bf16 %v4427, %v4427
    %4435 = vmatprep.subr.bf16.mxu0 %v3553
    %4436 = vmatpush1.bf16.msra.mxu0 %v3552
    %4437 = vmatprep.subr.bf16.mxu0 %v3557
    %4438 = vmatpush1.bf16.msra.mxu0 %v3556
    %4439 = vmatprep.subr.bf16.mxu0 %v3561
    %4440 = vmatpush1.bf16.msra.mxu0 %v3560
    %4441 = vmatprep.subr.bf16.mxu0 %v3565
    %4442 = vmatpush1.bf16.msra.mxu0 %v3564
    %4443 = vmatprep.subr.bf16.mxu0 %v3569
    %4444 = vmatpush1.bf16.msra.mxu0 %v3568
    %4445 = vmatprep.subr.bf16.mxu0 %v3573
    %4446 = vmatpush1.bf16.msra.mxu0 %v3572
    %4447 = vmatprep.subr.bf16.mxu0 %v3577
    %4448 = vmatpush1.bf16.msra.mxu0 %v3576
    %4449 = vmatprep.subr.bf16.mxu0 %v3581
    %4450 = vmatpush1.bf16.msra.mxu0 %v3580
    %4451 = vmatprep.subr.bf16.mxu0 0
    %4452 = vmatpush1.bf16.msra.mxu0 0
    %4453 = vmatprep.subr.bf16.mxu0 0
    %4454 = vmatpush1.bf16.msra.mxu0 0
    %4455 = vmatprep.subr.bf16.mxu0 0
    %4456 = vmatpush1.bf16.msra.mxu0 0
    %4457 = vmatprep.subr.bf16.mxu0 0
    %4458 = vmatpush1.bf16.msra.mxu0 0
    %4459 = vmatprep.subr.bf16.mxu0 0
    %4460 = vmatpush1.bf16.msra.mxu0 0
    %4461 = vmatprep.subr.bf16.mxu0 0
    %4462 = vmatpush1.bf16.msra.mxu0 0
    %4463 = vmatprep.subr.bf16.mxu0 0
    %4464 = vmatpush1.bf16.msra.mxu0 0
    %4465 = vmatprep.subr.bf16.mxu0 0
    %4466 = vmatpush1.bf16.msra.mxu0 0
    %4467 = vmatprep.mubr.bf16.mxu0 0
    %4468 = vmatmul.mubr.bf16.gmra.mrb[0].mxu0 %v4434
    %v4469 = vpop.f32.mrb[0].mxu0
    %v4470 = vadd.f32 0.0, %v4469
    %v4471 = vpop.f32.mrb[0].mxu0
    %v4472 = vadd.f32 0.0, %v4471
    %v4473 = vpop.f32.mrb[0].mxu0
    %v4474 = vpop.f32.mrb[0].mxu0
    %4475 = vdwg.mxu0
    %4476 = vmatprep.subr.bf16.mxu0 %v3555
    %4477 = vmatpush1.bf16.msra.mxu0 %v3554
    %4478 = vmatprep.subr.bf16.mxu0 %v3559
    %4479 = vmatpush1.bf16.msra.mxu0 %v3558
    %4480 = vmatprep.subr.bf16.mxu0 %v3563
    %4481 = vmatpush1.bf16.msra.mxu0 %v3562
    %4482 = vmatprep.subr.bf16.mxu0 %v3567
    %4483 = vmatpush1.bf16.msra.mxu0 %v3566
    %4484 = vmatprep.subr.bf16.mxu0 %v3571
    %4485 = vmatpush1.bf16.msra.mxu0 %v3570
    %4486 = vmatprep.subr.bf16.mxu0 %v3575
    %4487 = vmatpush1.bf16.msra.mxu0 %v3574
    %4488 = vmatprep.subr.bf16.mxu0 %v3579
    %4489 = vmatpush1.bf16.msra.mxu0 %v3578
    %4490 = vmatprep.subr.bf16.mxu0 %v3583
    %4491 = vmatpush1.bf16.msra.mxu0 %v3582
    %4492 = vmatprep.subr.bf16.mxu0 0
    %4493 = vmatpush1.bf16.msra.mxu0 0
    %4494 = vmatprep.subr.bf16.mxu0 0
    %4495 = vmatpush1.bf16.msra.mxu0 0
    %4496 = vmatprep.subr.bf16.mxu0 0
    %4497 = vmatpush1.bf16.msra.mxu0 0
    %4498 = vmatprep.subr.bf16.mxu0 0
    %4499 = vmatpush1.bf16.msra.mxu0 0
    %4500 = vmatprep.subr.bf16.mxu0 0
    %4501 = vmatpush1.bf16.msra.mxu0 0
    %4502 = vmatprep.subr.bf16.mxu0 0
    %4503 = vmatpush1.bf16.msra.mxu0 0
    %4504 = vmatprep.subr.bf16.mxu0 0
    %4505 = vmatpush1.bf16.msra.mxu0 0
    %4506 = vmatprep.subr.bf16.mxu0 0
    %4507 = vmatpush1.bf16.msra.mxu0 0
    %4508 = vmatprep.mubr.bf16.mxu0 0
    %4509 = vmatmul.mubr.bf16.gmra.mrb[0].mxu0 %v4434
    %v4510 = vpop.f32.mrb[0].mxu0
    %v4511 = vadd.f32 0.0, %v4510
    %v4512 = vpop.f32.mrb[0].mxu0
    %v4513 = vadd.f32 0.0, %v4512
    %v4514 = vpop.f32.mrb[0].mxu0
    %v4515 = vpop.f32.mrb[0].mxu0
    %4516 = vdwg.mxu0
    %v4517 = vadd.f32 %v4430, %v4470
    %v4518 = vadd.f32 %v4431, %v4472
    %v4519 = vadd.f32 %v4432, %v4511
    %v4520 = vadd.f32 %v4433, %v4513
    %v4521 = vxor.u32 %v4517, 2147483648
    %v4522 = vmul.f32 %v4521, 1.442695
    %v4523 = vpow.pop %v4522
    %v4524 = vadd.f32 %v4523, 1.0
    %v4525 = vrcp.pop %v4524
    %v4526 = vmul.f32 1.0, %v4525
    %v4527 = vxor.u32 %v4518, 2147483648
    %v4528 = vmul.f32 %v4527, 1.442695
    %v4529 = vpow.pop %v4528
    %v4530 = vadd.f32 %v4529, 1.0
    %v4531 = vrcp.pop %v4530
    %v4532 = vmul.f32 1.0, %v4531
    %v4533 = vtanh.pop %v4519
    %v4534 = vxor.u32 %v4520, 2147483648
    %v4535 = vmul.f32 %v4534, 1.442695
    %v4536 = vpow.pop %v4535
    %v4537 = vadd.f32 %v4536, 1.0
    %v4538 = vrcp.pop %v4537
    %v4539 = vmul.f32 1.0, %v4538
    %v4540 = vmul.f32 %v4532, %v4425
    %v4541 = vmul.f32 %v4526, %v4533
    %v4542 = vadd.f32 %v4540, %v4541
    %v4543 = vtanh.pop %v4542
    %v4544 = vmul.f32 %v4539, %v4543
    %v4545 = vpack.c.bf16 %v4544, %v4544
    %v4546 = vld [vmem:[#allocation14] sm:$0xf]
    %v4547 = vld [vmem:[#allocation14 + $0x4] sm:$0xf]
    %v4548 = vld [vmem:[#allocation14 + $0x8] sm:$0xf]
    %v4549 = vld [vmem:[#allocation14 + $0xc] sm:$0xf]
    %v4550 = vld [vmem:[#allocation14 + $0x10] sm:$0xf]
    %v4551 = vld [vmem:[#allocation14 + $0x14] sm:$0xf]
    %v4552 = vld [vmem:[#allocation14 + $0x18] sm:$0xf]
    %v4553 = vld [vmem:[#allocation14 + $0x1c] sm:$0xf]
    %v4554 = vld [vmem:[#allocation14 + $0x20] sm:$0xf]
    %v4555 = vld [vmem:[#allocation14 + $0x24] sm:$0xf]
    %v4556 = vld [vmem:[#allocation14 + $0x28] sm:$0xf]
    %v4557 = vld [vmem:[#allocation14 + $0x2c] sm:$0xf]
    %v4558 = vld [vmem:[#allocation14 + $0x30] sm:$0xf]
    %v4559 = vld [vmem:[#allocation14 + $0x34] sm:$0xf]
    %v4560 = vld [vmem:[#allocation14 + $0x38] sm:$0xf]
    %v4561 = vld [vmem:[#allocation14 + $0x3c] sm:$0xf]
    %v4562 = vld [vmem:[%s8] sm:$0x1]
    %v4564 = vlaneseq
    %v4565 = vshrl.u32 %v4564, 7
    %v4566 = vsub.s32 0, %v4565
    %v4567 = vrot.slane %v4562, %v4566
    %v4585 = vunpack.c.l.b16 %v4546
    %v4586 = vunpack.c.l.b16 %v4547
    %v4587 = vunpack.c.l.b16 %v4548
    %v4588 = vunpack.c.l.b16 %v4549
    %v4589 = vunpack.c.l.b16 %v4550
    %v4590 = vunpack.c.l.b16 %v4551
    %v4591 = vunpack.c.l.b16 %v4552
    %v4592 = vunpack.c.l.b16 %v4553
    %v4593 = vunpack.c.l.b16 %v4554
    %v4594 = vunpack.c.l.b16 %v4555
    %v4595 = vunpack.c.l.b16 %v4556
    %v4596 = vunpack.c.l.b16 %v4557
    %v4597 = vunpack.c.l.b16 %v4558
    %v4598 = vunpack.c.l.b16 %v4559
    %v4599 = vunpack.c.l.b16 %v4560
    %v4600 = vunpack.c.l.b16 %v4561
    %v4601 = vpack.c.b16 %v4586, %v4585
    %v4602 = vpack.c.b16 %v4588, %v4587
    %v4603 = vpack.c.b16 %v4590, %v4589
    %v4604 = vpack.c.b16 %v4592, %v4591
    %v4605 = vpack.c.b16 %v4594, %v4593
    %v4606 = vpack.c.b16 %v4596, %v4595
    %v4607 = vpack.c.b16 %v4598, %v4597
    %v4608 = vpack.c.b16 %v4600, %v4599
    %4617 = vmatprep.subr.bf16.mxu0 0
    %4618 = vmatpush1.bf16.msra.mxu0 %v4601
    %4619 = vmatprep.subr.bf16.mxu0 0
    %4620 = vmatpush1.bf16.msra.mxu0 %v4602
    %4621 = vmatprep.subr.bf16.mxu0 0
    %4622 = vmatpush1.bf16.msra.mxu0 %v4603
    %4623 = vmatprep.subr.bf16.mxu0 0
    %4624 = vmatpush1.bf16.msra.mxu0 %v4604
    %4625 = vmatprep.subr.bf16.mxu0 0
    %4626 = vmatpush1.bf16.msra.mxu0 %v4605
    %4627 = vmatprep.subr.bf16.mxu0 0
    %4628 = vmatpush1.bf16.msra.mxu0 %v4606
    %4629 = vmatprep.subr.bf16.mxu0 0
    %4630 = vmatpush1.bf16.msra.mxu0 %v4607
    %4631 = vmatprep.subr.bf16.mxu0 0
    %4632 = vmatpush1.bf16.msra.mxu0 %v4608
    %4633 = vmatprep.subr.bf16.mxu0 0
    %4634 = vmatpush1.bf16.msra.mxu0 0
    %4635 = vmatprep.subr.bf16.mxu0 0
    %4636 = vmatpush1.bf16.msra.mxu0 0
    %4637 = vmatprep.subr.bf16.mxu0 0
    %4638 = vmatpush1.bf16.msra.mxu0 0
    %4639 = vmatprep.subr.bf16.mxu0 0
    %4640 = vmatpush1.bf16.msra.mxu0 0
    %4641 = vmatprep.subr.bf16.mxu0 0
    %4642 = vmatpush1.bf16.msra.mxu0 0
    %4643 = vmatprep.subr.bf16.mxu0 0
    %4644 = vmatpush1.bf16.msra.mxu0 0
    %4645 = vmatprep.subr.bf16.mxu0 0
    %4646 = vmatpush1.bf16.msra.mxu0 0
    %4647 = vmatprep.subr.bf16.mxu0 0
    %4648 = vmatpush1.bf16.msra.mxu0 0
    %4649 = vmatprep.mubr.bf16.mxu0 0
    %4650 = vmatmul.mubr.bf16.gmra.mrb[0].mxu0 %v4545
    %v4651 = vpop.f32.mrb[0].mxu0
    %v4652 = vadd.f32 %v4567, %v4651
    %v4653 = vpop.f32.mrb[0].mxu0
    %v4654 = vpop.f32.mrb[0].mxu0
    %v4655 = vpop.f32.mrb[0].mxu0
    %4656 = vdwg.mxu0
    %4657 = vst [vmem:[#allocation16] sm:$0xff] %v4652
    // Predicated region
    $region62: #{tpu_custom_call.1} parent=1 // pred_check
      _
    $region63: #{tpu_custom_call.1} parent=1 // pred_check_branch
      %4659 = sbr.rel (0) target = $region65
    $region64: #{tpu_custom_call.1} parent=1 // pred_region
      %s4661 = ssub.s32 128, 128
      %4662 = vsyncadd [#allocation7], %s4661
      %s4664 = sshll.u32 [#allocation16], 4
      %s4665 = int_to_ptr.vmem [resolvable:$true] %s4664
      %4667 = dma.vmem_to_hbm [thread:$0]  %s4665, 128, %s9, [#allocation7]
    $region65: #{tpu_custom_call.1} parent=1 // pred_fallthru
      _
    // Predicated region
    $region66: #{tpu_custom_call.1} parent=1 // pred_check
      _
    $region67: #{tpu_custom_call.1} parent=1 // pred_check_branch
      %4669 = sbr.rel (0) target = $region69
    $region68: #{tpu_custom_call.1} parent=1 // pred_region
      %4670 = dma.done [#allocation7], 128
    $region69: #{tpu_custom_call.1} parent=1 // pred_fallthru
      _
    %4671 = vsyncpa [#allocation6], 1
    %4672 = vsyncpa [#allocation9], 1
    %4673 = vsyncpa [#allocation12], 1
    %4674 = vsyncpa [#allocation15], 1
    %4675 = vsyncpa [#allocation7], 1

</llo_original>
